<compile_context>
chip_gen: v6e
topology: v6e:2x2x1
jax: 0.10.0
libtpu: 0.0.40
codegen_flags: <defaults>
</compile_context>

<pallas_src>
import math

import jax
import jax.numpy as jnp
from jax.experimental import pallas as pl
from jax.experimental.pallas import tpu as pltpu

# ----------------------- small, lane-friendly config -----------------------
B = 2              # batch
S = 16             # sequence length (power of two -> mask uses shifts)
HIDDEN = 128       # hidden_size
NH = 4             # num_attention_heads
Q_LORA = 64        # q_lora_rank
KV_LORA = 64       # kv_lora_rank
ROPE = 32          # qk_rope_head_dim
NOPE = 96          # qk_nope_head_dim
QHD = NOPE + ROPE  # q_head_dim = 128 (per-head slabs are one lane tile)
VHD = 64           # v_head_dim
FF = 256           # SwiGLU intermediate size
KV_SLAB = 2 * QHD  # 256: per-head kv_b layout [k_nope(96)|0(32)|v(64)|0(64)]
RMS_EPS = 1e-6     # config.rms_norm_eps (input / post-attn layernorms)
LORA_EPS = 1e-5    # RMSNorm default eps in the reference module (q_a / kv_a norms)

ROPE_BASE = 10000.0
SCALING_FACTOR = 2.0
ORIG_MAX_POS = 32
BETA_FAST = 32
BETA_SLOW = 1
MSCALE = 1
MSCALE_ALL_DIM = 0

SOFTMAX_SCALE = QHD ** (-0.5)   # mscale_all_dim == 0 -> no extra yarn scaling
NEG_INF = -1e30

assert S & (S - 1) == 0, "S must be a power of two for the shift-based mask"
S_SHIFT = S.bit_length() - 1
M = B * S                        # folded row count


# ------------------------------ fused kernel -------------------------------
def _decoder_layer_kernel(
    x_ref, norms_ref, tab_ref,
    q_a_w_ref, q_b_w_ref, kv_a_w_ref, kv_b_w_ref,
    o_w_ref, w13_ref, w2_ref,
    out_ref,
):
    f32 = jnp.float32
    bf16 = jnp.bfloat16

    def rms(x, w, eps):                       # f32 math
        ms = jnp.mean(x * x, axis=-1, keepdims=True)
        return x * jax.lax.rsqrt(ms + eps) * w

    def rope_blend(x, cos, sin_e, sin_o):
        # interleaved pairs:  out[2i]   = x[2i]*c_i - x[2i+1]*s_i
        #                     out[2i+1] = x[2i]*s_i + x[2i+1]*c_i
        # realized as x*cos + x_{j+1}*sin_even + x_{j-1}*sin_odd, where the
        # neighbour values come from two XLU lane rotations (no swap matmul).
        left = pltpu.roll(x, shift=QHD - 1, axis=1)    # x[j+1]
        right = pltpu.roll(x, shift=1, axis=1)         # x[j-1]
        return x * cos + left * sin_e + right * sin_o

    # packed rope tables, shared by q-head slabs and the kv slab (rope lanes 96:128)
    cos_q = tab_ref[0]     # ones on 0:96, cos on 96:128
    cos_k = tab_ref[1]     # zeros on 0:96, cos on 96:128
    sin_e = tab_ref[2]     # -sin on even rope lanes, 0 elsewhere
    sin_o = tab_ref[3]     # +sin on odd rope lanes, 0 elsewhere

    ln1 = norms_ref[0:1, :]
    ln2 = norms_ref[1:2, :]
    q_a_ln = norms_ref[2:3, :Q_LORA]
    kv_a_ln = norms_ref[3:4, :KV_LORA]

    # ---- input RMSNorm (residual kept in f32) ----
    x = x_ref[...].astype(f32)                                       # (M, H)
    h = rms(x, ln1, RMS_EPS).astype(bf16)

    # ---- q path: q_a_proj -> RMSNorm -> q_b_proj (softmax scale folded) ----
    q_a = jnp.dot(h, q_a_w_ref[...], preferred_element_type=f32)     # (M, Q_LORA)
    q_a = rms(q_a, q_a_ln, LORA_EPS).astype(bf16)
    q_all = jnp.dot(q_a, q_b_w_ref[...], preferred_element_type=f32)  # (M, NH*128)

    # ---- kv path: kv_a_proj_with_mqa (padded layout), rope(k_pe), kv_b ----
    ckv = jnp.dot(h, kv_a_w_ref[...], preferred_element_type=f32)    # (M,128) [c_kv|0|k_pe]
    k_pe = rope_blend(ckv, cos_k, sin_e, sin_o).astype(bf16)         # (M,128) [0...| roped k_pe]
    c_kv = rms(ckv[:, :KV_LORA], kv_a_ln, LORA_EPS).astype(bf16)     # (M, KV_LORA)
    kv = jnp.dot(c_kv, kv_b_w_ref[...],
                 preferred_element_type=f32).astype(bf16)            # (M, NH*256)

    # ---- causal mask, block-diagonal over the folded batch ----
    row = jax.lax.broadcasted_iota(jnp.int32, (M, M), 0)
    col = jax.lax.broadcasted_iota(jnp.int32, (M, M), 1)
    mask = (row >= col) & ((row >> S_SHIFT) == (col >> S_SHIFT))

    # ---- attention: per-head K=128 score matmul, heads accumulated into o_proj ----
    attn = jnp.zeros((M, HIDDEN), f32)
    for hh in range(NH):
        q_h = rope_blend(q_all[:, hh * QHD:(hh + 1) * QHD],
                         cos_q, sin_e, sin_o).astype(bf16)           # (M,128)
        k_h = kv[:, hh * KV_SLAB:hh * KV_SLAB + QHD] + k_pe          # disjoint-lane merge
        v_h = kv[:, hh * KV_SLAB + QHD:(hh + 1) * KV_SLAB]           # (M,128) [v|0]
        s = jax.lax.dot_general(q_h, k_h, (((1,), (1,)), ((), ())),
                                preferred_element_type=f32)          # (M, M)
        s = jnp.where(mask, s, NEG_INF)
        p = jnp.exp(s - jnp.max(s, axis=-1, keepdims=True))
        p = p * pl.reciprocal(jnp.sum(p, axis=-1, keepdims=True), approx=True)
        pv = jnp.dot(p.astype(bf16), v_h, preferred_element_type=f32)  # (M,128)
        attn = attn + jnp.dot(pv.astype(bf16),
                              o_w_ref[hh * QHD:(hh + 1) * QHD, :],
                              preferred_element_type=f32)
    x = x + attn                                                      # fused residual add

    # ---- MLP block: RMSNorm -> SwiGLU (w1/w3 fused) -> fused residual ----
    h2 = rms(x, ln2, RMS_EPS).astype(bf16)
    a13 = jnp.dot(h2, w13_ref[...], preferred_element_type=f32)       # (M, 2*FF)
    a1 = a13[:, :FF]
    a3 = a13[:, FF:]
    g = (a1 * jax.nn.sigmoid(a1)) * a3                                # SiLU(w1 x) * (w3 x)
    out_ref[...] = (x + jnp.dot(g.astype(bf16), w2_ref[...],
                                preferred_element_type=f32)).astype(out_ref.dtype)


def decoder_layer_forward(hidden, params, rope_tab):
    b, s, _ = hidden.shape
    x2d = hidden.reshape(b * s, HIDDEN)
    out = pl.pallas_call(
        _decoder_layer_kernel,
        out_shape=jax.ShapeDtypeStruct((b * s, HIDDEN), jnp.bfloat16),
    )(x2d, params['norms'], rope_tab,
      params['q_a_w'], params['q_b_w'], params['kv_a_w'], params['kv_b_w'],
      params['o_w'], params['w13'], params['w2'])
    return out.reshape(b, s, HIDDEN)


# ----------------------------- YaRN rope glue ------------------------------
def yarn_find_correction_dim(num_rotations, dim, base, max_pos):
    return dim * math.log(max_pos / (num_rotations * 2 * math.pi)) / (2 * math.log(base))


def yarn_find_correction_range(low_rot, high_rot, dim, base, max_pos):
    low = math.floor(yarn_find_correction_dim(low_rot, dim, base, max_pos))
    high = math.ceil(yarn_find_correction_dim(high_rot, dim, base, max_pos))
    return max(low, 0), min(high, dim - 1)


def yarn_get_mscale(scale=1.0, mscale=1.0):
    if scale <= 1:
        return 1.0
    return 0.1 * mscale * math.log(scale) + 1.0


def make_yarn_cos_sin(seq_len):
    dim = ROPE
    idx = jnp.arange(0, dim, 2, dtype=jnp.float32) / dim
    freq_extra = 1.0 / (ROPE_BASE ** idx)
    freq_inter = 1.0 / (SCALING_FACTOR * (ROPE_BASE ** idx))
    low, high = yarn_find_correction_range(BETA_FAST, BETA_SLOW, dim, ROPE_BASE, ORIG_MAX_POS)
    hi = high if high != low else low + 0.001
    ramp = jnp.clip((jnp.arange(dim // 2, dtype=jnp.float32) - low) / (hi - low), 0.0, 1.0)
    inv_freq_mask = 1.0 - ramp
    inv_freq = freq_inter * (1.0 - inv_freq_mask) + freq_extra * inv_freq_mask
    t = jnp.arange(seq_len, dtype=jnp.float32)
    freqs = jnp.outer(t, inv_freq)                                   # (S, ROPE//2)
    _mscale = yarn_get_mscale(SCALING_FACTOR, MSCALE) / yarn_get_mscale(SCALING_FACTOR, MSCALE_ALL_DIM)
    return jnp.cos(freqs) * _mscale, jnp.sin(freqs) * _mscale


def build_rope_tables(seq_len, batch):
    """Compact (4, B*S, 128) blend tables shared by q-head and kv slabs.

    Slab layout puts the 32 rope lanes at 96:128; cos is identity (1) on the
    nope lanes for q and zero for the kv slab (which also zeroes out c_kv when
    forming the padded k_pe).  sin tables carry the interleaved-pair signs.
    """
    cos, sin = make_yarn_cos_sin(seq_len)               # (S, ROPE//2)
    cos_rep = jnp.repeat(cos, 2, axis=1)                 # (S, ROPE)
    sin_rep = jnp.repeat(sin, 2, axis=1)
    even = (jnp.arange(ROPE) % 2 == 0)[None, :]
    sin_even = jnp.where(even, -sin_rep, 0.0)            # -sin on even lanes
    sin_odd = jnp.where(even, 0.0, sin_rep)              # +sin on odd lanes

    ones_n = jnp.ones((seq_len, QHD - ROPE), jnp.float32)
    zeros_n = jnp.zeros((seq_len, QHD - ROPE), jnp.float32)
    cos_q = jnp.concatenate([ones_n, cos_rep], axis=1)   # (S, 128)
    cos_k = jnp.concatenate([zeros_n, cos_rep], axis=1)
    sin_e = jnp.concatenate([zeros_n, sin_even], axis=1)
    sin_o = jnp.concatenate([zeros_n, sin_odd], axis=1)
    tab = jnp.stack([cos_q, cos_k, sin_e, sin_o], axis=0)  # (4, S, 128)
    return jnp.tile(tab, (1, batch, 1))                    # (4, B*S, 128)


# --------------------------- parameter creation ----------------------------
def init_params(key):
    ks = jax.random.split(key, 8)

    def wf(k, shape, scale=0.02):
        return scale * jax.random.normal(k, shape, jnp.float32)

    bf16 = jnp.bfloat16
    q_a_w = wf(ks[0], (HIDDEN, Q_LORA)).astype(bf16)
    # softmax scale folded into q_b (rope rotation commutes with scaling)
    q_b_w = (wf(ks[1], (Q_LORA, NH * QHD)) * SOFTMAX_SCALE).astype(bf16)
    kv_a_base = wf(ks[2], (HIDDEN, KV_LORA + ROPE)).astype(bf16)      # [c_kv | k_pe]
    kv_b_base = wf(ks[3], (KV_LORA, NH * (NOPE + VHD))).astype(bf16)  # per-head [nope|v]
    o_base = wf(ks[4], (NH * VHD, HIDDEN)).astype(bf16)
    w1 = wf(ks[5], (HIDDEN, FF)).astype(bf16)
    w3 = wf(ks[6], (HIDDEN, FF)).astype(bf16)
    w2 = wf(ks[7], (FF, HIDDEN)).astype(bf16)

    # kv_a packed: (HIDDEN, 128) = [c_kv(64) | 0(32) | k_pe(32)]  (k_pe at lanes 96:128)
    kv_a_w = jnp.concatenate(
        [kv_a_base[:, :KV_LORA],
         jnp.zeros((HIDDEN, QHD - KV_LORA - ROPE), bf16),
         kv_a_base[:, KV_LORA:]], axis=1)

    # kv_b packed: (KV_LORA, NH*256), per-head [k_nope(96) | 0(32) | v(64) | 0(64)]
    slabs = []
    for h in range(NH):
        base = kv_b_base[:, h * (NOPE + VHD):(h + 1) * (NOPE + VHD)]
        slabs.append(jnp.concatenate(
            [base[:, :NOPE],
             jnp.zeros((KV_LORA, ROPE), bf16),
             base[:, NOPE:],
             jnp.zeros((KV_LORA, QHD - VHD), bf16)], axis=1))
    kv_b_w = jnp.concatenate(slabs, axis=1)                           # (64, 1024)

    # o_proj padded: (NH*128, HIDDEN), per-head rows [o_w rows(64) ; 0(64)]
    o_slabs = []
    for h in range(NH):
        o_slabs.append(jnp.concatenate(
            [o_base[h * VHD:(h + 1) * VHD, :],
             jnp.zeros((QHD - VHD, HIDDEN), bf16)], axis=0))
    o_w = jnp.concatenate(o_slabs, axis=0)                            # (512, 128)

    w13 = jnp.concatenate([w1, w3], axis=1)                           # (128, 512)

    # packed RMSNorm weights: rows = [ln1, ln2, q_a_ln, kv_a_ln, pad...]
    norms = jnp.zeros((8, HIDDEN), jnp.float32)
    norms = norms.at[0, :].set(1.0)
    norms = norms.at[1, :].set(1.0)
    norms = norms.at[2, :Q_LORA].set(1.0)
    norms = norms.at[3, :KV_LORA].set(1.0)

    return dict(norms=norms, q_a_w=q_a_w, q_b_w=q_b_w, kv_a_w=kv_a_w,
                kv_b_w=kv_b_w, o_w=o_w, w13=w13, w2=w2)


# ----------------------------------- main -----------------------------------
if __name__ == "__main__":
    key = jax.random.PRNGKey(0)
    k_x, k_p = jax.random.split(key)

    hidden_states = jax.random.normal(k_x, (B, S, HIDDEN), jnp.float32).astype(jnp.bfloat16)
    params = init_params(k_p)
    rope_tab = build_rope_tables(S, B)

    fwd = jax.jit(decoder_layer_forward)
    out = jax.block_until_ready(fwd(hidden_states, params, rope_tab))

    assert out.shape == (B, S, HIDDEN)
    assert bool(jnp.all(jnp.isfinite(out.astype(jnp.float32))))
    print("KERNEL_OK")
</pallas_src>

<mosaic_0001>
module attributes {stable_mosaic.version = 11 : i64} {
  func.func @_decoder_layer_kernel(%arg0: memref<32x128xbf16, #tpu.memory_space<vmem>>, %arg1: memref<8x128xf32, #tpu.memory_space<vmem>>, %arg2: memref<4x32x128xf32, #tpu.memory_space<vmem>>, %arg3: memref<128x64xbf16, #tpu.memory_space<vmem>>, %arg4: memref<64x512xbf16, #tpu.memory_space<vmem>>, %arg5: memref<128x128xbf16, #tpu.memory_space<vmem>>, %arg6: memref<64x1024xbf16, #tpu.memory_space<vmem>>, %arg7: memref<512x128xbf16, #tpu.memory_space<vmem>>, %arg8: memref<128x512xbf16, #tpu.memory_space<vmem>>, %arg9: memref<256x128xbf16, #tpu.memory_space<vmem>>, %arg10: memref<32x128xbf16, #tpu.memory_space<vmem>>) attributes {dimension_semantics = [], scalar_prefetch = 0 : i64, scratch_operands = 0 : i64, tpu.core_type = #tpu.core_type<tc>} {
    %c0 = arith.constant 0 : index
    %c0_0 = arith.constant 0 : index
    %c0_1 = arith.constant 0 : index
    %0 = vector.load %arg2[%c0, %c0_0, %c0_1] : memref<4x32x128xf32, #tpu.memory_space<vmem>>, vector<1x32x128xf32>
    %1 = vector.shape_cast %0 : vector<1x32x128xf32> to vector<32x128xf32>
    %c1 = arith.constant 1 : index
    %c0_2 = arith.constant 0 : index
    %c0_3 = arith.constant 0 : index
    %2 = vector.load %arg2[%c1, %c0_2, %c0_3] : memref<4x32x128xf32, #tpu.memory_space<vmem>>, vector<1x32x128xf32>
    %3 = vector.shape_cast %2 : vector<1x32x128xf32> to vector<32x128xf32>
    %c2 = arith.constant 2 : index
    %c0_4 = arith.constant 0 : index
    %c0_5 = arith.constant 0 : index
    %4 = vector.load %arg2[%c2, %c0_4, %c0_5] : memref<4x32x128xf32, #tpu.memory_space<vmem>>, vector<1x32x128xf32>
    %5 = vector.shape_cast %4 : vector<1x32x128xf32> to vector<32x128xf32>
    %c3 = arith.constant 3 : index
    %c0_6 = arith.constant 0 : index
    %c0_7 = arith.constant 0 : index
    %6 = vector.load %arg2[%c3, %c0_6, %c0_7] : memref<4x32x128xf32, #tpu.memory_space<vmem>>, vector<1x32x128xf32>
    %7 = vector.shape_cast %6 : vector<1x32x128xf32> to vector<32x128xf32>
    %c0_8 = arith.constant 0 : index
    %c0_9 = arith.constant 0 : index
    %8 = vector.load %arg1[%c0_8, %c0_9] : memref<8x128xf32, #tpu.memory_space<vmem>>, vector<1x128xf32>
    %c1_10 = arith.constant 1 : index
    %c0_11 = arith.constant 0 : index
    %9 = vector.load %arg1[%c1_10, %c0_11] : memref<8x128xf32, #tpu.memory_space<vmem>>, vector<1x128xf32>
    %c2_12 = arith.constant 2 : index
    %c0_13 = arith.constant 0 : index
    %10 = vector.load %arg1[%c2_12, %c0_13] : memref<8x128xf32, #tpu.memory_space<vmem>>, vector<1x64xf32>
    %c3_14 = arith.constant 3 : index
    %c0_15 = arith.constant 0 : index
    %11 = vector.load %arg1[%c3_14, %c0_15] : memref<8x128xf32, #tpu.memory_space<vmem>>, vector<1x64xf32>
    %c0_16 = arith.constant 0 : index
    %c0_17 = arith.constant 0 : index
    %12 = vector.load %arg0[%c0_16, %c0_17] : memref<32x128xbf16, #tpu.memory_space<vmem>>, vector<32x128xbf16>
    %13 = arith.extf %12 : vector<32x128xbf16> to vector<32x128xf32>
    %14 = arith.mulf %13, %13 : vector<32x128xf32>
    %cst = arith.constant dense<0.000000e+00> : vector<32xf32>
    %15 = vector.multi_reduction <add>, %14, %cst [1] : vector<32x128xf32> to vector<32xf32>
    %16 = vector.shape_cast %15 : vector<32xf32> to vector<32x1xf32>
    %cst_18 = arith.constant 1.280000e+02 : f32
    %17 = vector.broadcast %cst_18 : f32 to vector<32x1xf32>
    %18 = arith.divf %16, %17 : vector<32x1xf32>
    %cst_19 = arith.constant 9.99999997E-7 : f32
    %19 = vector.broadcast %cst_19 : f32 to vector<32x1xf32>
    %20 = arith.addf %18, %19 : vector<32x1xf32>
    %21 = math.rsqrt %20 : vector<32x1xf32>
    %22 = vector.broadcast %21 : vector<32x1xf32> to vector<32x128xf32>
    %23 = arith.mulf %13, %22 : vector<32x128xf32>
    %24 = vector.broadcast %8 : vector<1x128xf32> to vector<32x128xf32>
    %25 = arith.mulf %23, %24 : vector<32x128xf32>
    %26 = arith.truncf %25 : vector<32x128xf32> to vector<32x128xbf16>
    %c0_20 = arith.constant 0 : index
    %c0_21 = arith.constant 0 : index
    %27 = vector.load %arg3[%c0_20, %c0_21] : memref<128x64xbf16, #tpu.memory_space<vmem>>, vector<128x64xbf16>
    %cst_22 = arith.constant dense<0.000000e+00> : vector<32x64xf32>
    %28 = tpu.matmul %26, %27, %cst_22 {dimension_numbers = #tpu.dot_dimension_numbers<[1], [0], [0], [1], [0, 0, 1, 1], [], []>} : vector<32x128xbf16>, vector<128x64xbf16>, vector<32x64xf32> -> vector<32x64xf32>
    %29 = arith.mulf %28, %28 : vector<32x64xf32>
    %cst_23 = arith.constant dense<0.000000e+00> : vector<32xf32>
    %30 = vector.multi_reduction <add>, %29, %cst_23 [1] : vector<32x64xf32> to vector<32xf32>
    %31 = vector.shape_cast %30 : vector<32xf32> to vector<32x1xf32>
    %cst_24 = arith.constant 6.400000e+01 : f32
    %32 = vector.broadcast %cst_24 : f32 to vector<32x1xf32>
    %33 = arith.divf %31, %32 : vector<32x1xf32>
    %cst_25 = arith.constant 9.99999974E-6 : f32
    %34 = vector.broadcast %cst_25 : f32 to vector<32x1xf32>
    %35 = arith.addf %33, %34 : vector<32x1xf32>
    %36 = math.rsqrt %35 : vector<32x1xf32>
    %37 = vector.broadcast %36 : vector<32x1xf32> to vector<32x64xf32>
    %38 = arith.mulf %28, %37 : vector<32x64xf32>
    %39 = vector.broadcast %10 : vector<1x64xf32> to vector<32x64xf32>
    %40 = arith.mulf %38, %39 : vector<32x64xf32>
    %41 = arith.truncf %40 : vector<32x64xf32> to vector<32x64xbf16>
    %c0_26 = arith.constant 0 : index
    %c0_27 = arith.constant 0 : index
    %42 = vector.load %arg4[%c0_26, %c0_27] : memref<64x512xbf16, #tpu.memory_space<vmem>>, vector<64x512xbf16>
    %cst_28 = arith.constant dense<0.000000e+00> : vector<32x512xf32>
    %43 = tpu.matmul %41, %42, %cst_28 {dimension_numbers = #tpu.dot_dimension_numbers<[1], [0], [0], [1], [0, 0, 1, 1], [], []>} : vector<32x64xbf16>, vector<64x512xbf16>, vector<32x512xf32> -> vector<32x512xf32>
    %c0_29 = arith.constant 0 : index
    %c0_30 = arith.constant 0 : index
    %44 = vector.load %arg5[%c0_29, %c0_30] : memref<128x128xbf16, #tpu.memory_space<vmem>>, vector<128x128xbf16>
    %cst_31 = arith.constant dense<0.000000e+00> : vector<32x128xf32>
    %45 = tpu.matmul %26, %44, %cst_31 {dimension_numbers = #tpu.dot_dimension_numbers<[1], [0], [0], [1], [0, 0, 1, 1], [], []>} : vector<32x128xbf16>, vector<128x128xbf16>, vector<32x128xf32> -> vector<32x128xf32>
    %c127_i32 = arith.constant 127 : i32
    %46 = tpu.dynamic_rotate %45 by %c127_i32 dim 1 : vector<32x128xf32>, i32 -> vector<32x128xf32>
    %c1_i32 = arith.constant 1 : i32
    %47 = tpu.dynamic_rotate %45 by %c1_i32 dim 1 : vector<32x128xf32>, i32 -> vector<32x128xf32>
    %48 = arith.mulf %45, %3 : vector<32x128xf32>
    %49 = arith.mulf %46, %5 : vector<32x128xf32>
    %50 = arith.addf %48, %49 : vector<32x128xf32>
    %51 = arith.mulf %47, %7 : vector<32x128xf32>
    %52 = arith.addf %50, %51 : vector<32x128xf32>
    %53 = arith.truncf %52 : vector<32x128xf32> to vector<32x128xbf16>
    %54 = vector.extract_strided_slice %45 {offsets = [0, 0], sizes = [32, 64], strides = [1, 1]} : vector<32x128xf32> to vector<32x64xf32>
    %55 = arith.mulf %54, %54 : vector<32x64xf32>
    %cst_32 = arith.constant dense<0.000000e+00> : vector<32xf32>
    %56 = vector.multi_reduction <add>, %55, %cst_32 [1] : vector<32x64xf32> to vector<32xf32>
    %57 = vector.shape_cast %56 : vector<32xf32> to vector<32x1xf32>
    %cst_33 = arith.constant 6.400000e+01 : f32
    %58 = vector.broadcast %cst_33 : f32 to vector<32x1xf32>
    %59 = arith.divf %57, %58 : vector<32x1xf32>
    %cst_34 = arith.constant 9.99999974E-6 : f32
    %60 = vector.broadcast %cst_34 : f32 to vector<32x1xf32>
    %61 = arith.addf %59, %60 : vector<32x1xf32>
    %62 = math.rsqrt %61 : vector<32x1xf32>
    %63 = vector.broadcast %62 : vector<32x1xf32> to vector<32x64xf32>
    %64 = arith.mulf %54, %63 : vector<32x64xf32>
    %65 = vector.broadcast %11 : vector<1x64xf32> to vector<32x64xf32>
    %66 = arith.mulf %64, %65 : vector<32x64xf32>
    %67 = arith.truncf %66 : vector<32x64xf32> to vector<32x64xbf16>
    %c0_35 = arith.constant 0 : index
    %c0_36 = arith.constant 0 : index
    %68 = vector.load %arg6[%c0_35, %c0_36] : memref<64x1024xbf16, #tpu.memory_space<vmem>>, vector<64x1024xbf16>
    %cst_37 = arith.constant dense<0.000000e+00> : vector<32x1024xf32>
    %69 = tpu.matmul %67, %68, %cst_37 {dimension_numbers = #tpu.dot_dimension_numbers<[1], [0], [0], [1], [0, 0, 1, 1], [], []>} : vector<32x64xbf16>, vector<64x1024xbf16>, vector<32x1024xf32> -> vector<32x1024xf32>
    %70 = arith.truncf %69 : vector<32x1024xf32> to vector<32x1024xbf16>
    %71 = tpu.iota {dimensions = array<i32: 0>} : vector<32x32xi32>
    %72 = tpu.iota {dimensions = array<i32: 1>} : vector<32x32xi32>
    %73 = arith.cmpi sge, %71, %72 : vector<32x32xi32>
    %c4_i32 = arith.constant 4 : i32
    %74 = vector.broadcast %c4_i32 : i32 to vector<32x32xi32>
    %75 = arith.shrsi %71, %74 : vector<32x32xi32>
    %c4_i32_38 = arith.constant 4 : i32
    %76 = vector.broadcast %c4_i32_38 : i32 to vector<32x32xi32>
    %77 = arith.shrsi %72, %76 : vector<32x32xi32>
    %78 = arith.cmpi eq, %75, %77 : vector<32x32xi32>
    %79 = arith.andi %73, %78 : vector<32x32xi1>
    %cst_39 = arith.constant 0.000000e+00 : f32
    %80 = vector.broadcast %cst_39 : f32 to vector<32x128xf32>
    %81 = vector.extract_strided_slice %43 {offsets = [0, 0], sizes = [32, 128], strides = [1, 1]} : vector<32x512xf32> to vector<32x128xf32>
    %c127_i32_40 = arith.constant 127 : i32
    %82 = tpu.dynamic_rotate %81 by %c127_i32_40 dim 1 : vector<32x128xf32>, i32 -> vector<32x128xf32>
    %c1_i32_41 = arith.constant 1 : i32
    %83 = tpu.dynamic_rotate %81 by %c1_i32_41 dim 1 : vector<32x128xf32>, i32 -> vector<32x128xf32>
    %84 = arith.mulf %81, %1 : vector<32x128xf32>
    %85 = arith.mulf %82, %5 : vector<32x128xf32>
    %86 = arith.addf %84, %85 : vector<32x128xf32>
    %87 = arith.mulf %83, %7 : vector<32x128xf32>
    %88 = arith.addf %86, %87 : vector<32x128xf32>
    %89 = arith.truncf %88 : vector<32x128xf32> to vector<32x128xbf16>
    %90 = vector.extract_strided_slice %70 {offsets = [0, 0], sizes = [32, 128], strides = [1, 1]} : vector<32x1024xbf16> to vector<32x128xbf16>
    %91 = arith.addf %90, %53 : vector<32x128xbf16>
    %92 = vector.extract_strided_slice %70 {offsets = [0, 128], sizes = [32, 128], strides = [1, 1]} : vector<32x1024xbf16> to vector<32x128xbf16>
    %cst_42 = arith.constant dense<0.000000e+00> : vector<32x32xf32>
    %93 = tpu.matmul %89, %91, %cst_42 {dimension_numbers = #tpu.dot_dimension_numbers<[1], [1], [0], [0], [0, 0, 1, 0], [], []>} : vector<32x128xbf16>, vector<32x128xbf16>, vector<32x32xf32> -> vector<32x32xf32>
    %cst_43 = arith.constant -1.000000e+30 : f32
    %94 = vector.broadcast %cst_43 : f32 to vector<32x32xf32>
    %95 = arith.select %79, %93, %94 : vector<32x32xi1>, vector<32x32xf32>
    %cst_44 = arith.constant dense<0xFF800000> : vector<32xf32>
    %96 = vector.multi_reduction <maximumf>, %95, %cst_44 [1] : vector<32x32xf32> to vector<32xf32>
    %97 = vector.shape_cast %96 : vector<32xf32> to vector<32x1xf32>
    %98 = vector.broadcast %97 : vector<32x1xf32> to vector<32x32xf32>
    %99 = arith.subf %95, %98 : vector<32x32xf32>
    %100 = math.exp %99 : vector<32x32xf32>
    %cst_45 = arith.constant dense<0.000000e+00> : vector<32xf32>
    %101 = vector.multi_reduction <add>, %100, %cst_45 [1] : vector<32x32xf32> to vector<32xf32>
    %102 = vector.shape_cast %101 : vector<32xf32> to vector<32x1xf32>
    %103 = tpu.reciprocal %102 {approx = true} : vector<32x1xf32> -> vector<32x1xf32>
    %104 = vector.broadcast %103 : vector<32x1xf32> to vector<32x32xf32>
    %105 = arith.mulf %100, %104 : vector<32x32xf32>
    %106 = arith.truncf %105 : vector<32x32xf32> to vector<32x32xbf16>
    %cst_46 = arith.constant dense<0.000000e+00> : vector<32x128xf32>
    %107 = tpu.matmul %106, %92, %cst_46 {dimension_numbers = #tpu.dot_dimension_numbers<[1], [0], [0], [1], [0, 0, 1, 1], [], []>} : vector<32x32xbf16>, vector<32x128xbf16>, vector<32x128xf32> -> vector<32x128xf32>
    %108 = arith.truncf %107 : vector<32x128xf32> to vector<32x128xbf16>
    %c0_47 = arith.constant 0 : index
    %c0_48 = arith.constant 0 : index
    %109 = vector.load %arg7[%c0_47, %c0_48] : memref<512x128xbf16, #tpu.memory_space<vmem>>, vector<128x128xbf16>
    %cst_49 = arith.constant dense<0.000000e+00> : vector<32x128xf32>
    %110 = tpu.matmul %108, %109, %cst_49 {dimension_numbers = #tpu.dot_dimension_numbers<[1], [0], [0], [1], [0, 0, 1, 1], [], []>} : vector<32x128xbf16>, vector<128x128xbf16>, vector<32x128xf32> -> vector<32x128xf32>
    %111 = arith.addf %80, %110 : vector<32x128xf32>
    %112 = vector.extract_strided_slice %43 {offsets = [0, 128], sizes = [32, 128], strides = [1, 1]} : vector<32x512xf32> to vector<32x128xf32>
    %c127_i32_50 = arith.constant 127 : i32
    %113 = tpu.dynamic_rotate %112 by %c127_i32_50 dim 1 : vector<32x128xf32>, i32 -> vector<32x128xf32>
    %c1_i32_51 = arith.constant 1 : i32
    %114 = tpu.dynamic_rotate %112 by %c1_i32_51 dim 1 : vector<32x128xf32>, i32 -> vector<32x128xf32>
    %115 = arith.mulf %112, %1 : vector<32x128xf32>
    %116 = arith.mulf %113, %5 : vector<32x128xf32>
    %117 = arith.addf %115, %116 : vector<32x128xf32>
    %118 = arith.mulf %114, %7 : vector<32x128xf32>
    %119 = arith.addf %117, %118 : vector<32x128xf32>
    %120 = arith.truncf %119 : vector<32x128xf32> to vector<32x128xbf16>
    %121 = vector.extract_strided_slice %70 {offsets = [0, 256], sizes = [32, 128], strides = [1, 1]} : vector<32x1024xbf16> to vector<32x128xbf16>
    %122 = arith.addf %121, %53 : vector<32x128xbf16>
    %123 = vector.extract_strided_slice %70 {offsets = [0, 384], sizes = [32, 128], strides = [1, 1]} : vector<32x1024xbf16> to vector<32x128xbf16>
    %cst_52 = arith.constant dense<0.000000e+00> : vector<32x32xf32>
    %124 = tpu.matmul %120, %122, %cst_52 {dimension_numbers = #tpu.dot_dimension_numbers<[1], [1], [0], [0], [0, 0, 1, 0], [], []>} : vector<32x128xbf16>, vector<32x128xbf16>, vector<32x32xf32> -> vector<32x32xf32>
    %cst_53 = arith.constant -1.000000e+30 : f32
    %125 = vector.broadcast %cst_53 : f32 to vector<32x32xf32>
    %126 = arith.select %79, %124, %125 : vector<32x32xi1>, vector<32x32xf32>
    %cst_54 = arith.constant dense<0xFF800000> : vector<32xf32>
    %127 = vector.multi_reduction <maximumf>, %126, %cst_54 [1] : vector<32x32xf32> to vector<32xf32>
    %128 = vector.shape_cast %127 : vector<32xf32> to vector<32x1xf32>
    %129 = vector.broadcast %128 : vector<32x1xf32> to vector<32x32xf32>
    %130 = arith.subf %126, %129 : vector<32x32xf32>
    %131 = math.exp %130 : vector<32x32xf32>
    %cst_55 = arith.constant dense<0.000000e+00> : vector<32xf32>
    %132 = vector.multi_reduction <add>, %131, %cst_55 [1] : vector<32x32xf32> to vector<32xf32>
    %133 = vector.shape_cast %132 : vector<32xf32> to vector<32x1xf32>
    %134 = tpu.reciprocal %133 {approx = true} : vector<32x1xf32> -> vector<32x1xf32>
    %135 = vector.broadcast %134 : vector<32x1xf32> to vector<32x32xf32>
    %136 = arith.mulf %131, %135 : vector<32x32xf32>
    %137 = arith.truncf %136 : vector<32x32xf32> to vector<32x32xbf16>
    %cst_56 = arith.constant dense<0.000000e+00> : vector<32x128xf32>
    %138 = tpu.matmul %137, %123, %cst_56 {dimension_numbers = #tpu.dot_dimension_numbers<[1], [0], [0], [1], [0, 0, 1, 1], [], []>} : vector<32x32xbf16>, vector<32x128xbf16>, vector<32x128xf32> -> vector<32x128xf32>
    %139 = arith.truncf %138 : vector<32x128xf32> to vector<32x128xbf16>
    %c128 = arith.constant 128 : index
    %c0_57 = arith.constant 0 : index
    %140 = vector.load %arg7[%c128, %c0_57] : memref<512x128xbf16, #tpu.memory_space<vmem>>, vector<128x128xbf16>
    %cst_58 = arith.constant dense<0.000000e+00> : vector<32x128xf32>
    %141 = tpu.matmul %139, %140, %cst_58 {dimension_numbers = #tpu.dot_dimension_numbers<[1], [0], [0], [1], [0, 0, 1, 1], [], []>} : vector<32x128xbf16>, vector<128x128xbf16>, vector<32x128xf32> -> vector<32x128xf32>
    %142 = arith.addf %111, %141 : vector<32x128xf32>
    %143 = vector.extract_strided_slice %43 {offsets = [0, 256], sizes = [32, 128], strides = [1, 1]} : vector<32x512xf32> to vector<32x128xf32>
    %c127_i32_59 = arith.constant 127 : i32
    %144 = tpu.dynamic_rotate %143 by %c127_i32_59 dim 1 : vector<32x128xf32>, i32 -> vector<32x128xf32>
    %c1_i32_60 = arith.constant 1 : i32
    %145 = tpu.dynamic_rotate %143 by %c1_i32_60 dim 1 : vector<32x128xf32>, i32 -> vector<32x128xf32>
    %146 = arith.mulf %143, %1 : vector<32x128xf32>
    %147 = arith.mulf %144, %5 : vector<32x128xf32>
    %148 = arith.addf %146, %147 : vector<32x128xf32>
    %149 = arith.mulf %145, %7 : vector<32x128xf32>
    %150 = arith.addf %148, %149 : vector<32x128xf32>
    %151 = arith.truncf %150 : vector<32x128xf32> to vector<32x128xbf16>
    %152 = vector.extract_strided_slice %70 {offsets = [0, 512], sizes = [32, 128], strides = [1, 1]} : vector<32x1024xbf16> to vector<32x128xbf16>
    %153 = arith.addf %152, %53 : vector<32x128xbf16>
    %154 = vector.extract_strided_slice %70 {offsets = [0, 640], sizes = [32, 128], strides = [1, 1]} : vector<32x1024xbf16> to vector<32x128xbf16>
    %cst_61 = arith.constant dense<0.000000e+00> : vector<32x32xf32>
    %155 = tpu.matmul %151, %153, %cst_61 {dimension_numbers = #tpu.dot_dimension_numbers<[1], [1], [0], [0], [0, 0, 1, 0], [], []>} : vector<32x128xbf16>, vector<32x128xbf16>, vector<32x32xf32> -> vector<32x32xf32>
    %cst_62 = arith.constant -1.000000e+30 : f32
    %156 = vector.broadcast %cst_62 : f32 to vector<32x32xf32>
    %157 = arith.select %79, %155, %156 : vector<32x32xi1>, vector<32x32xf32>
    %cst_63 = arith.constant dense<0xFF800000> : vector<32xf32>
    %158 = vector.multi_reduction <maximumf>, %157, %cst_63 [1] : vector<32x32xf32> to vector<32xf32>
    %159 = vector.shape_cast %158 : vector<32xf32> to vector<32x1xf32>
    %160 = vector.broadcast %159 : vector<32x1xf32> to vector<32x32xf32>
    %161 = arith.subf %157, %160 : vector<32x32xf32>
    %162 = math.exp %161 : vector<32x32xf32>
    %cst_64 = arith.constant dense<0.000000e+00> : vector<32xf32>
    %163 = vector.multi_reduction <add>, %162, %cst_64 [1] : vector<32x32xf32> to vector<32xf32>
    %164 = vector.shape_cast %163 : vector<32xf32> to vector<32x1xf32>
    %165 = tpu.reciprocal %164 {approx = true} : vector<32x1xf32> -> vector<32x1xf32>
    %166 = vector.broadcast %165 : vector<32x1xf32> to vector<32x32xf32>
    %167 = arith.mulf %162, %166 : vector<32x32xf32>
    %168 = arith.truncf %167 : vector<32x32xf32> to vector<32x32xbf16>
    %cst_65 = arith.constant dense<0.000000e+00> : vector<32x128xf32>
    %169 = tpu.matmul %168, %154, %cst_65 {dimension_numbers = #tpu.dot_dimension_numbers<[1], [0], [0], [1], [0, 0, 1, 1], [], []>} : vector<32x32xbf16>, vector<32x128xbf16>, vector<32x128xf32> -> vector<32x128xf32>
    %170 = arith.truncf %169 : vector<32x128xf32> to vector<32x128xbf16>
    %c256 = arith.constant 256 : index
    %c0_66 = arith.constant 0 : index
    %171 = vector.load %arg7[%c256, %c0_66] : memref<512x128xbf16, #tpu.memory_space<vmem>>, vector<128x128xbf16>
    %cst_67 = arith.constant dense<0.000000e+00> : vector<32x128xf32>
    %172 = tpu.matmul %170, %171, %cst_67 {dimension_numbers = #tpu.dot_dimension_numbers<[1], [0], [0], [1], [0, 0, 1, 1], [], []>} : vector<32x128xbf16>, vector<128x128xbf16>, vector<32x128xf32> -> vector<32x128xf32>
    %173 = arith.addf %142, %172 : vector<32x128xf32>
    %174 = vector.extract_strided_slice %43 {offsets = [0, 384], sizes = [32, 128], strides = [1, 1]} : vector<32x512xf32> to vector<32x128xf32>
    %c127_i32_68 = arith.constant 127 : i32
    %175 = tpu.dynamic_rotate %174 by %c127_i32_68 dim 1 : vector<32x128xf32>, i32 -> vector<32x128xf32>
    %c1_i32_69 = arith.constant 1 : i32
    %176 = tpu.dynamic_rotate %174 by %c1_i32_69 dim 1 : vector<32x128xf32>, i32 -> vector<32x128xf32>
    %177 = arith.mulf %174, %1 : vector<32x128xf32>
    %178 = arith.mulf %175, %5 : vector<32x128xf32>
    %179 = arith.addf %177, %178 : vector<32x128xf32>
    %180 = arith.mulf %176, %7 : vector<32x128xf32>
    %181 = arith.addf %179, %180 : vector<32x128xf32>
    %182 = arith.truncf %181 : vector<32x128xf32> to vector<32x128xbf16>
    %183 = vector.extract_strided_slice %70 {offsets = [0, 768], sizes = [32, 128], strides = [1, 1]} : vector<32x1024xbf16> to vector<32x128xbf16>
    %184 = arith.addf %183, %53 : vector<32x128xbf16>
    %185 = vector.extract_strided_slice %70 {offsets = [0, 896], sizes = [32, 128], strides = [1, 1]} : vector<32x1024xbf16> to vector<32x128xbf16>
    %cst_70 = arith.constant dense<0.000000e+00> : vector<32x32xf32>
    %186 = tpu.matmul %182, %184, %cst_70 {dimension_numbers = #tpu.dot_dimension_numbers<[1], [1], [0], [0], [0, 0, 1, 0], [], []>} : vector<32x128xbf16>, vector<32x128xbf16>, vector<32x32xf32> -> vector<32x32xf32>
    %cst_71 = arith.constant -1.000000e+30 : f32
    %187 = vector.broadcast %cst_71 : f32 to vector<32x32xf32>
    %188 = arith.select %79, %186, %187 : vector<32x32xi1>, vector<32x32xf32>
    %cst_72 = arith.constant dense<0xFF800000> : vector<32xf32>
    %189 = vector.multi_reduction <maximumf>, %188, %cst_72 [1] : vector<32x32xf32> to vector<32xf32>
    %190 = vector.shape_cast %189 : vector<32xf32> to vector<32x1xf32>
    %191 = vector.broadcast %190 : vector<32x1xf32> to vector<32x32xf32>
    %192 = arith.subf %188, %191 : vector<32x32xf32>
    %193 = math.exp %192 : vector<32x32xf32>
    %cst_73 = arith.constant dense<0.000000e+00> : vector<32xf32>
    %194 = vector.multi_reduction <add>, %193, %cst_73 [1] : vector<32x32xf32> to vector<32xf32>
    %195 = vector.shape_cast %194 : vector<32xf32> to vector<32x1xf32>
    %196 = tpu.reciprocal %195 {approx = true} : vector<32x1xf32> -> vector<32x1xf32>
    %197 = vector.broadcast %196 : vector<32x1xf32> to vector<32x32xf32>
    %198 = arith.mulf %193, %197 : vector<32x32xf32>
    %199 = arith.truncf %198 : vector<32x32xf32> to vector<32x32xbf16>
    %cst_74 = arith.constant dense<0.000000e+00> : vector<32x128xf32>
    %200 = tpu.matmul %199, %185, %cst_74 {dimension_numbers = #tpu.dot_dimension_numbers<[1], [0], [0], [1], [0, 0, 1, 1], [], []>} : vector<32x32xbf16>, vector<32x128xbf16>, vector<32x128xf32> -> vector<32x128xf32>
    %201 = arith.truncf %200 : vector<32x128xf32> to vector<32x128xbf16>
    %c384 = arith.constant 384 : index
    %c0_75 = arith.constant 0 : index
    %202 = vector.load %arg7[%c384, %c0_75] : memref<512x128xbf16, #tpu.memory_space<vmem>>, vector<128x128xbf16>
    %cst_76 = arith.constant dense<0.000000e+00> : vector<32x128xf32>
    %203 = tpu.matmul %201, %202, %cst_76 {dimension_numbers = #tpu.dot_dimension_numbers<[1], [0], [0], [1], [0, 0, 1, 1], [], []>} : vector<32x128xbf16>, vector<128x128xbf16>, vector<32x128xf32> -> vector<32x128xf32>
    %204 = arith.addf %173, %203 : vector<32x128xf32>
    %205 = arith.addf %13, %204 : vector<32x128xf32>
    %206 = arith.mulf %205, %205 : vector<32x128xf32>
    %cst_77 = arith.constant dense<0.000000e+00> : vector<32xf32>
    %207 = vector.multi_reduction <add>, %206, %cst_77 [1] : vector<32x128xf32> to vector<32xf32>
    %208 = vector.shape_cast %207 : vector<32xf32> to vector<32x1xf32>
    %cst_78 = arith.constant 1.280000e+02 : f32
    %209 = vector.broadcast %cst_78 : f32 to vector<32x1xf32>
    %210 = arith.divf %208, %209 : vector<32x1xf32>
    %cst_79 = arith.constant 9.99999997E-7 : f32
    %211 = vector.broadcast %cst_79 : f32 to vector<32x1xf32>
    %212 = arith.addf %210, %211 : vector<32x1xf32>
    %213 = math.rsqrt %212 : vector<32x1xf32>
    %214 = vector.broadcast %213 : vector<32x1xf32> to vector<32x128xf32>
    %215 = arith.mulf %205, %214 : vector<32x128xf32>
    %216 = vector.broadcast %9 : vector<1x128xf32> to vector<32x128xf32>
    %217 = arith.mulf %215, %216 : vector<32x128xf32>
    %218 = arith.truncf %217 : vector<32x128xf32> to vector<32x128xbf16>
    %c0_80 = arith.constant 0 : index
    %c0_81 = arith.constant 0 : index
    %219 = vector.load %arg8[%c0_80, %c0_81] : memref<128x512xbf16, #tpu.memory_space<vmem>>, vector<128x512xbf16>
    %cst_82 = arith.constant dense<0.000000e+00> : vector<32x512xf32>
    %220 = tpu.matmul %218, %219, %cst_82 {dimension_numbers = #tpu.dot_dimension_numbers<[1], [0], [0], [1], [0, 0, 1, 1], [], []>} : vector<32x128xbf16>, vector<128x512xbf16>, vector<32x512xf32> -> vector<32x512xf32>
    %221 = vector.extract_strided_slice %220 {offsets = [0, 0], sizes = [32, 256], strides = [1, 1]} : vector<32x512xf32> to vector<32x256xf32>
    %222 = vector.extract_strided_slice %220 {offsets = [0, 256], sizes = [32, 256], strides = [1, 1]} : vector<32x512xf32> to vector<32x256xf32>
    %223 = arith.negf %221 : vector<32x256xf32>
    %224 = math.exp %223 : vector<32x256xf32>
    %cst_83 = arith.constant 1.000000e+00 : f32
    %225 = vector.broadcast %cst_83 : f32 to vector<32x256xf32>
    %226 = arith.addf %225, %224 : vector<32x256xf32>
    %227 = arith.divf %225, %226 : vector<32x256xf32>
    %228 = arith.mulf %221, %227 : vector<32x256xf32>
    %229 = arith.mulf %228, %222 : vector<32x256xf32>
    %230 = arith.truncf %229 : vector<32x256xf32> to vector<32x256xbf16>
    %c0_84 = arith.constant 0 : index
    %c0_85 = arith.constant 0 : index
    %231 = vector.load %arg9[%c0_84, %c0_85] : memref<256x128xbf16, #tpu.memory_space<vmem>>, vector<256x128xbf16>
    %cst_86 = arith.constant dense<0.000000e+00> : vector<32x128xf32>
    %232 = tpu.matmul %230, %231, %cst_86 {dimension_numbers = #tpu.dot_dimension_numbers<[1], [0], [0], [1], [0, 0, 1, 1], [], []>} : vector<32x256xbf16>, vector<256x128xbf16>, vector<32x128xf32> -> vector<32x128xf32>
    %233 = arith.addf %205, %232 : vector<32x128xf32>
    %234 = arith.truncf %233 : vector<32x128xf32> to vector<32x128xbf16>
    %c0_87 = arith.constant 0 : index
    %c0_88 = arith.constant 0 : index
    %235 = vector.load %arg10[%c0_87, %c0_88] : memref<32x128xbf16, #tpu.memory_space<vmem>>, vector<32x128xbf16>
    tpu.vector_store %arg10[%c0_87, %c0_88], %234 {strides = array<i32>} : memref<32x128xbf16, #tpu.memory_space<vmem>>, vector<32x128xbf16>,
    return
  }
}

</mosaic_0001>

<llo_original>
// kernel: decoder_layer_forward.1
$region0: #{decoder_layer_forward.1}
  #allocation0 [shape = 'u32[]', space=smem, size = 0x4, offset = 0x4, fixed_abs, tag = 'smem constant byte address 0x4 - core index']
  #allocation1 [shape = 'u32[144,128]{1,0:T(1,128)}', space=vmem, size = 0x12000, scoped, tag = 'internal scratch']
  %s0 = inlined_call_operand.vmem [shape: bf16[32,128], index: 0, kind: input, shape index: {}]
  %s1 = inlined_call_operand.vmem [shape: f32[8,128], index: 1, kind: input, shape index: {}]
  %s2 = inlined_call_operand.hbm [shape: f32[4,32,128], index: 2, kind: input, shape index: {}]
  %s3 = inlined_call_operand.vmem [shape: bf16[128,64], index: 3, kind: input, shape index: {}]
  %s4 = inlined_call_operand.hbm [shape: bf16[64,512], index: 4, kind: input, shape index: {}]
  %s5 = inlined_call_operand.vmem [shape: bf16[128,128], index: 5, kind: input, shape index: {}]
  %s6 = inlined_call_operand.hbm [shape: bf16[64,1024], index: 6, kind: input, shape index: {}]
  %s7 = inlined_call_operand.hbm [shape: bf16[512,128], index: 7, kind: input, shape index: {}]
  %s8 = inlined_call_operand.hbm [shape: bf16[128,512], index: 8, kind: input, shape index: {}]
  %s9 = inlined_call_operand.hbm [shape: bf16[256,128], index: 9, kind: input, shape index: {}]
  %s10 = inlined_call_operand.hbm [shape: bf16[32,128], index: 10, kind: output, shape index: {}]
  %s11 = sld [smem:[#allocation0]]
  $region74: #{decoder_layer_forward.1} parent=0
    _
  %s13 = ssub.s32 1, %s11
  %s14 = scalar_select 0, %s13, %s11
  $region1: #{decoder_layer_forward.1} parent=0
    #allocation2 [shape = 'u8[65536]{0}', space=vmem, size = 0x10000, scoped, tag = 'input window, operand 2, single buffered']
    #allocation3 [shape = 's32[1]{0}', space=sflag, size = 0x4, scoped, tag = 'scoped memory for decoder_layer_forward.1']
    #allocation4 [shape = 's32[1]{0}', space=sflag, size = 0x4, scoped, tag = 'scoped memory for decoder_layer_forward.1']
    #allocation5 [shape = 'u8[65536]{0}', space=vmem, size = 0x10000, scoped, tag = 'input window, operand 4, single buffered']
    #allocation6 [shape = 's32[1]{0}', space=sflag, size = 0x4, scoped, tag = 'scoped memory for decoder_layer_forward.1']
    #allocation7 [shape = 'u8[131072]{0}', space=vmem, size = 0x20000, scoped, tag = 'input window, operand 6, single buffered']
    #allocation8 [shape = 'u8[131072]{0}', space=vmem, size = 0x20000, scoped, tag = 'input window, operand 7, single buffered']
    #allocation9 [shape = 's32[1]{0}', space=sflag, size = 0x4, scoped, tag = 'scoped memory for decoder_layer_forward.1']
    #allocation10 [shape = 'u8[131072]{0}', space=vmem, size = 0x20000, scoped, tag = 'input window, operand 8, single buffered']
    #allocation11 [shape = 'u8[65536]{0}', space=vmem, size = 0x10000, scoped, tag = 'input window, operand 9, single buffered']
    #allocation12 [shape = 's32[1]{0}', space=sflag, size = 0x4, scoped, tag = 'scoped memory for decoder_layer_forward.1']
    #allocation13 [shape = 'u8[8192]{0}', space=vmem, size = 0x2000, scoped, tag = 'output window, operand 0, single buffered']
    %15 = vsyncpa [#allocation3], 0
    %16 = vsyncpa [#allocation6], 0
    %17 = vsyncpa [#allocation9], 0
    %18 = vsyncpa [#allocation12], 0
    %19 = vsyncpa [#allocation4], 0
    // Predicated region
    $region2: #{decoder_layer_forward.1} parent=1 // pred_check
      _
    $region3: #{decoder_layer_forward.1} parent=1 // pred_check_branch
      %21 = sbr.rel (0) target = $region5
    $region4: #{decoder_layer_forward.1} parent=1 // pred_region
      _
    $region5: #{decoder_layer_forward.1} parent=1 // pred_fallthru
      _
    // Predicated region
    $region6: #{decoder_layer_forward.1} parent=1 // pred_check
      _
    $region7: #{decoder_layer_forward.1} parent=1 // pred_check_branch
      %23 = sbr.rel (0) target = $region9
    $region8: #{decoder_layer_forward.1} parent=1 // pred_region
      _
    $region9: #{decoder_layer_forward.1} parent=1 // pred_fallthru
      _
    // Predicated region
    $region10: #{decoder_layer_forward.1} parent=1 // pred_check
      _
    $region11: #{decoder_layer_forward.1} parent=1 // pred_check_branch
      %25 = sbr.rel (0) target = $region13
    $region12: #{decoder_layer_forward.1} parent=1 // pred_region
      %s27 = ssub.s32 2048, 2048
      %28 = vsyncadd [#allocation3], %s27
      %s29 = sshll.u32 [#allocation2], 4
      %s30 = int_to_ptr.vmem [resolvable:$true] %s29
      %35 = dma.hbm_to_vmem [thread:$0]  %s2, 2048, %s30, [#allocation3], 128, 128, 8
    $region13: #{decoder_layer_forward.1} parent=1 // pred_fallthru
      _
    // Predicated region
    $region14: #{decoder_layer_forward.1} parent=1 // pred_check
      _
    $region15: #{decoder_layer_forward.1} parent=1 // pred_check_branch
      %37 = sbr.rel (0) target = $region17
    $region16: #{decoder_layer_forward.1} parent=1 // pred_region
      _
    $region17: #{decoder_layer_forward.1} parent=1 // pred_fallthru
      _
    // Predicated region
    $region18: #{decoder_layer_forward.1} parent=1 // pred_check
      _
    $region19: #{decoder_layer_forward.1} parent=1 // pred_check_branch
      %39 = sbr.rel (0) target = $region21
    $region20: #{decoder_layer_forward.1} parent=1 // pred_region
      %s41 = ssub.s32 2048, 2048
      %42 = vsyncadd [#allocation6], %s41
      %s43 = sshll.u32 [#allocation5], 4
      %s44 = int_to_ptr.vmem [resolvable:$true] %s43
      %49 = dma.hbm_to_vmem [thread:$0]  %s4, 2048, %s44, [#allocation6], 256, 256, 16
    $region21: #{decoder_layer_forward.1} parent=1 // pred_fallthru
      _
    // Predicated region
    $region22: #{decoder_layer_forward.1} parent=1 // pred_check
      _
    $region23: #{decoder_layer_forward.1} parent=1 // pred_check_branch
      %51 = sbr.rel (0) target = $region25
    $region24: #{decoder_layer_forward.1} parent=1 // pred_region
      _
    $region25: #{decoder_layer_forward.1} parent=1 // pred_fallthru
      _
    // Predicated region
    $region26: #{decoder_layer_forward.1} parent=1 // pred_check
      _
    $region27: #{decoder_layer_forward.1} parent=1 // pred_check_branch
      %53 = sbr.rel (0) target = $region29
    $region28: #{decoder_layer_forward.1} parent=1 // pred_region
      %s55 = ssub.s32 4096, 4096
      %56 = vsyncadd [#allocation6], %s55
      %s57 = sshll.u32 [#allocation7], 4
      %s58 = int_to_ptr.vmem [resolvable:$true] %s57
      %63 = dma.hbm_to_vmem [thread:$0]  %s6, 4096, %s58, [#allocation6], 512, 512, 32
    $region29: #{decoder_layer_forward.1} parent=1 // pred_fallthru
      _
    // Predicated region
    $region30: #{decoder_layer_forward.1} parent=1 // pred_check
      _
    $region31: #{decoder_layer_forward.1} parent=1 // pred_check_branch
      %65 = sbr.rel (0) target = $region33
    $region32: #{decoder_layer_forward.1} parent=1 // pred_region
      %s67 = ssub.s32 4096, 4096
      %68 = vsyncadd [#allocation9], %s67
      %s69 = sshll.u32 [#allocation8], 4
      %s70 = int_to_ptr.vmem [resolvable:$true] %s69
      %75 = dma.hbm_to_vmem [thread:$0]  %s7, 4096, %s70, [#allocation9], 64, 64, 4
    $region33: #{decoder_layer_forward.1} parent=1 // pred_fallthru
      _
    // Predicated region
    $region34: #{decoder_layer_forward.1} parent=1 // pred_check
      _
    $region35: #{decoder_layer_forward.1} parent=1 // pred_check_branch
      %77 = sbr.rel (0) target = $region37
    $region36: #{decoder_layer_forward.1} parent=1 // pred_region
      %s79 = ssub.s32 4096, 4096
      %80 = vsyncadd [#allocation9], %s79
      %s81 = sshll.u32 [#allocation10], 4
      %s82 = int_to_ptr.vmem [resolvable:$true] %s81
      %87 = dma.hbm_to_vmem [thread:$0]  %s8, 4096, %s82, [#allocation9], 256, 256, 16
    $region37: #{decoder_layer_forward.1} parent=1 // pred_fallthru
      _
    // Predicated region
    $region38: #{decoder_layer_forward.1} parent=1 // pred_check
      _
    $region39: #{decoder_layer_forward.1} parent=1 // pred_check_branch
      %89 = sbr.rel (0) target = $region41
    $region40: #{decoder_layer_forward.1} parent=1 // pred_region
      %s91 = ssub.s32 2048, 2048
      %92 = vsyncadd [#allocation12], %s91
      %s93 = sshll.u32 [#allocation11], 4
      %s94 = int_to_ptr.vmem [resolvable:$true] %s93
      %99 = dma.hbm_to_vmem [thread:$0]  %s9, 2048, %s94, [#allocation12], 64, 64, 4
    $region41: #{decoder_layer_forward.1} parent=1 // pred_fallthru
      _
    // Predicated region
    $region42: #{decoder_layer_forward.1} parent=1 // pred_check
      _
    $region43: #{decoder_layer_forward.1} parent=1 // pred_check_branch
      %101 = sbr.rel (0) target = $region45
    $region44: #{decoder_layer_forward.1} parent=1 // pred_region
      %102 = dma.done [#allocation3], 2048
    $region45: #{decoder_layer_forward.1} parent=1 // pred_fallthru
      _
    // Predicated region
    $region46: #{decoder_layer_forward.1} parent=1 // pred_check
      _
    $region47: #{decoder_layer_forward.1} parent=1 // pred_check_branch
      %104 = sbr.rel (0) target = $region49
    $region48: #{decoder_layer_forward.1} parent=1 // pred_region
      %105 = dma.done [#allocation6], 2048
    $region49: #{decoder_layer_forward.1} parent=1 // pred_fallthru
      _
    // Predicated region
    $region50: #{decoder_layer_forward.1} parent=1 // pred_check
      _
    $region51: #{decoder_layer_forward.1} parent=1 // pred_check_branch
      %107 = sbr.rel (0) target = $region53
    $region52: #{decoder_layer_forward.1} parent=1 // pred_region
      %108 = dma.done [#allocation6], 4096
    $region53: #{decoder_layer_forward.1} parent=1 // pred_fallthru
      _
    // Predicated region
    $region54: #{decoder_layer_forward.1} parent=1 // pred_check
      _
    $region55: #{decoder_layer_forward.1} parent=1 // pred_check_branch
      %110 = sbr.rel (0) target = $region57
    $region56: #{decoder_layer_forward.1} parent=1 // pred_region
      %111 = dma.done [#allocation9], 4096
    $region57: #{decoder_layer_forward.1} parent=1 // pred_fallthru
      _
    // Predicated region
    $region58: #{decoder_layer_forward.1} parent=1 // pred_check
      _
    $region59: #{decoder_layer_forward.1} parent=1 // pred_check_branch
      %113 = sbr.rel (0) target = $region61
    $region60: #{decoder_layer_forward.1} parent=1 // pred_region
      %114 = dma.done [#allocation9], 4096
    $region61: #{decoder_layer_forward.1} parent=1 // pred_fallthru
      _
    // Predicated region
    $region62: #{decoder_layer_forward.1} parent=1 // pred_check
      _
    $region63: #{decoder_layer_forward.1} parent=1 // pred_check_branch
      %116 = sbr.rel (0) target = $region65
    $region64: #{decoder_layer_forward.1} parent=1 // pred_region
      %117 = dma.done [#allocation12], 2048
    $region65: #{decoder_layer_forward.1} parent=1 // pred_fallthru
      _
    %v119 = vld [vmem:[#allocation2] sm:$0xff]
    %v120 = vld [vmem:[#allocation2 + $0x8] sm:$0xff]
    %v121 = vld [vmem:[#allocation2 + $0x10] sm:$0xff]
    %v122 = vld [vmem:[#allocation2 + $0x18] sm:$0xff]
    %s123 = scalar_lea.vmem [#allocation2], 32
    %v124 = vld [vmem:[%s123] sm:$0xff]
    %v125 = vld [vmem:[%s123 + $0x8] sm:$0xff]
    %v126 = vld [vmem:[%s123 + $0x10] sm:$0xff]
    %v127 = vld [vmem:[%s123 + $0x18] sm:$0xff]
    %s128 = scalar_lea.vmem [#allocation2], 64
    %v129 = vld [vmem:[%s128] sm:$0xff]
    %v130 = vld [vmem:[%s128 + $0x8] sm:$0xff]
    %v131 = vld [vmem:[%s128 + $0x10] sm:$0xff]
    %v132 = vld [vmem:[%s128 + $0x18] sm:$0xff]
    %s133 = scalar_lea.vmem [#allocation2], 96
    %v134 = vld [vmem:[%s133] sm:$0xff]
    %v135 = vld [vmem:[%s133 + $0x8] sm:$0xff]
    %v136 = vld [vmem:[%s133 + $0x10] sm:$0xff]
    %v137 = vld [vmem:[%s133 + $0x18] sm:$0xff]
    %v138 = vld [vmem:[%s1] sm:$0x1]
    %v139 = vld [vmem:[%s1 + $0x1] sm:$0x1]
    %v140 = vld [vmem:[%s1 + $0x2] sm:$0x1]
    %v141 = vld [vmem:[%s1 + $0x3] sm:$0x1]
    %v142 = vld [vmem:[%s0] sm:$0xf]
    %v143 = vld [vmem:[%s0 + $0x4] sm:$0xf]
    %v144 = vld [vmem:[%s0 + $0x8] sm:$0xf]
    %v145 = vld [vmem:[%s0 + $0xc] sm:$0xf]
    %v146 = vunpack.c.l.bf16 %v142
    %v147 = vunpack.c.l.bf16 %v143
    %v148 = vunpack.c.l.bf16 %v144
    %v149 = vunpack.c.l.bf16 %v145
    %v150 = vmul.f32 %v146, %v146
    %v151 = vmul.f32 %v147, %v147
    %v152 = vmul.f32 %v148, %v148
    %v153 = vmul.f32 %v149, %v149
    %154 = vadd.xlane.f32.xlu0 %v150
    %v155 = vpop.xlane.xlu0 %154
    %156 = vadd.xlane.f32.xlu0 %v151
    %v157 = vpop.xlane.xlu0 %156
    %158 = vadd.xlane.f32.xlu0 %v152
    %v159 = vpop.xlane.xlu0 %158
    %160 = vadd.xlane.f32.xlu0 %v153
    %v161 = vpop.xlane.xlu0 %160
    %v162 = vrcp.pop 128.0
    %v163 = vmul.f32 %v155, %v162
    %v164 = vmul.f32 %v157, %v162
    %v165 = vmul.f32 %v159, %v162
    %v166 = vmul.f32 %v161, %v162
    %v167 = vadd.f32 %v163, 1e-06
    %v168 = vadd.f32 %v164, 1e-06
    %v169 = vadd.f32 %v165, 1e-06
    %v170 = vadd.f32 %v166, 1e-06
    %v171 = vrsqrt.pop %v167
    %v172 = vrsqrt.pop %v168
    %v173 = vrsqrt.pop %v169
    %v174 = vrsqrt.pop %v170
    %v175 = vmul.f32 %v146, %v171
    %v176 = vmul.f32 %v147, %v172
    %v177 = vmul.f32 %v148, %v173
    %v178 = vmul.f32 %v149, %v174
    %v179 = vlaneseq
    %v180 = vshrl.u32 %v179, 7
    %v181 = vsub.s32 0, %v180
    %v182 = vrot.slane %v138, %v181
    %v183 = vmul.f32 %v175, %v182
    %v184 = vmul.f32 %v176, %v182
    %v185 = vmul.f32 %v177, %v182
    %v186 = vmul.f32 %v178, %v182
    %v187 = vpack.c.bf16 %v184, %v183
    %v188 = vpack.c.bf16 %v186, %v185
    %v189 = vld [vmem:[%s3] sm:$0xf]
    %v190 = vld [vmem:[%s3 + $0x4] sm:$0xf]
    %v191 = vld [vmem:[%s3 + $0x8] sm:$0xf]
    %v192 = vld [vmem:[%s3 + $0xc] sm:$0xf]
    %v193 = vld [vmem:[%s3 + $0x10] sm:$0xf]
    %v194 = vld [vmem:[%s3 + $0x14] sm:$0xf]
    %v195 = vld [vmem:[%s3 + $0x18] sm:$0xf]
    %v196 = vld [vmem:[%s3 + $0x1c] sm:$0xf]
    %v197 = vld [vmem:[%s3 + $0x20] sm:$0xf]
    %v198 = vld [vmem:[%s3 + $0x24] sm:$0xf]
    %v199 = vld [vmem:[%s3 + $0x28] sm:$0xf]
    %v200 = vld [vmem:[%s3 + $0x2c] sm:$0xf]
    %v201 = vld [vmem:[%s3 + $0x30] sm:$0xf]
    %v202 = vld [vmem:[%s3 + $0x34] sm:$0xf]
    %v203 = vld [vmem:[%s3 + $0x38] sm:$0xf]
    %v204 = vld [vmem:[%s3 + $0x3c] sm:$0xf]
    %v221 = vunpack.c.l.b16 %v189
    %v222 = vunpack.c.l.b16 %v190
    %v223 = vunpack.c.l.b16 %v191
    %v224 = vunpack.c.l.b16 %v192
    %v225 = vunpack.c.l.b16 %v193
    %v226 = vunpack.c.l.b16 %v194
    %v227 = vunpack.c.l.b16 %v195
    %v228 = vunpack.c.l.b16 %v196
    %v229 = vunpack.c.l.b16 %v197
    %v230 = vunpack.c.l.b16 %v198
    %v231 = vunpack.c.l.b16 %v199
    %v232 = vunpack.c.l.b16 %v200
    %v233 = vunpack.c.l.b16 %v201
    %v234 = vunpack.c.l.b16 %v202
    %v235 = vunpack.c.l.b16 %v203
    %v236 = vunpack.c.l.b16 %v204
    %v237 = vpack.c.b16 %v222, %v221
    %v238 = vpack.c.b16 %v224, %v223
    %v239 = vpack.c.b16 %v226, %v225
    %v240 = vpack.c.b16 %v228, %v227
    %v241 = vpack.c.b16 %v230, %v229
    %v242 = vpack.c.b16 %v232, %v231
    %v243 = vpack.c.b16 %v234, %v233
    %v244 = vpack.c.b16 %v236, %v235
    %253 = vmatprep.subr.bf16.mxu0 0
    %254 = vmatpush1.bf16.msra.mxu0 %v244
    %255 = vmatprep.subr.bf16.mxu0 0
    %256 = vmatpush1.bf16.msra.mxu0 %v243
    %257 = vmatprep.subr.bf16.mxu0 0
    %258 = vmatpush1.bf16.msra.mxu0 %v242
    %259 = vmatprep.subr.bf16.mxu0 0
    %260 = vmatpush1.bf16.msra.mxu0 %v241
    %261 = vmatprep.subr.bf16.mxu0 0
    %262 = vmatpush1.bf16.msra.mxu0 %v240
    %263 = vmatprep.subr.bf16.mxu0 0
    %264 = vmatpush1.bf16.msra.mxu0 %v239
    %265 = vmatprep.subr.bf16.mxu0 0
    %266 = vmatpush1.bf16.msra.mxu0 %v238
    %267 = vmatprep.subr.bf16.mxu0 0
    %268 = vmatpush1.bf16.msra.mxu0 %v237
    %269 = vmatprep.subr.bf16.mxu0 0
    %270 = vmatpush2.bf16.msra.mxu0 0
    %271 = vmatprep.subr.bf16.mxu0 0
    %272 = vmatpush2.bf16.msra.mxu0 0
    %273 = vmatprep.subr.bf16.mxu0 0
    %274 = vmatpush2.bf16.msra.mxu0 0
    %275 = vmatprep.subr.bf16.mxu0 0
    %276 = vmatpush2.bf16.msra.mxu0 0
    %277 = vmatprep.subr.bf16.mxu0 0
    %278 = vmatpush2.bf16.msra.mxu0 0
    %279 = vmatprep.subr.bf16.mxu0 0
    %280 = vmatpush2.bf16.msra.mxu0 0
    %281 = vmatprep.subr.bf16.mxu0 0
    %282 = vmatpush2.bf16.msra.mxu0 0
    %283 = vmatprep.subr.bf16.mxu0 0
    %284 = vmatpush2.bf16.msra.mxu0 0
    %285 = vmatprep.mubr.bf16.mxu0 0
    %286 = vmatmul.mubr.bf16.gmra.mxu0 %v187
    %v287 = vpop.f32.mrf.mxu0
    %v288 = vadd.f32 0.0, %v287
    %v289 = vpop.f32.mrf.mxu0
    %v290 = vpop.f32.mrf.mxu0
    %v291 = vadd.f32 0.0, %v290
    %v292 = vpop.f32.mrf.mxu0
    %293 = vmatprep.mubr.bf16.mxu0 0
    %294 = vmatmul.mubr.bf16.gmra.mxu0 %v188
    %v295 = vpop.f32.mrf.mxu0
    %v296 = vadd.f32 0.0, %v295
    %v297 = vpop.f32.mrf.mxu0
    %v298 = vpop.f32.mrf.mxu0
    %v299 = vadd.f32 0.0, %v298
    %v300 = vpop.f32.mrf.mxu0
    %301 = vdwg.mxu0
    %v302 = vmul.f32 %v288, %v288
    %v303 = vmul.f32 %v291, %v291
    %v304 = vmul.f32 %v296, %v296
    %v305 = vmul.f32 %v299, %v299
    %vm306 = vcmask 523264
    %v307 = vsel %vm306, %v302, 0.0
    %308 = vadd.xlane.f32.xlu0 %v307
    %v309 = vpop.xlane.xlu0 %308
    %v310 = vsel %vm306, %v303, 0.0
    %311 = vadd.xlane.f32.xlu0 %v310
    %v312 = vpop.xlane.xlu0 %311
    %v313 = vsel %vm306, %v304, 0.0
    %314 = vadd.xlane.f32.xlu0 %v313
    %v315 = vpop.xlane.xlu0 %314
    %v316 = vsel %vm306, %v305, 0.0
    %317 = vadd.xlane.f32.xlu0 %v316
    %v318 = vpop.xlane.xlu0 %317
    %v319 = vrcp.pop 64.0
    %v320 = vmul.f32 %v309, %v319
    %v321 = vmul.f32 %v312, %v319
    %v322 = vmul.f32 %v315, %v319
    %v323 = vmul.f32 %v318, %v319
    %v324 = vadd.f32 %v320, 1e-05
    %v325 = vadd.f32 %v321, 1e-05
    %v326 = vadd.f32 %v322, 1e-05
    %v327 = vadd.f32 %v323, 1e-05
    %v328 = vrsqrt.pop %v324
    %v329 = vrsqrt.pop %v325
    %v330 = vrsqrt.pop %v326
    %v331 = vrsqrt.pop %v327
    %v332 = vmul.f32 %v288, %v328
    %v333 = vmul.f32 %v291, %v329
    %v334 = vmul.f32 %v296, %v330
    %v335 = vmul.f32 %v299, %v331
    %v336 = vlaneseq
    %v337 = vshrl.u32 %v336, 7
    %v338 = vsub.s32 0, %v337
    %v339 = vrot.slane %v140, %v338
    %v340 = vmul.f32 %v332, %v339
    %v341 = vmul.f32 %v333, %v339
    %v342 = vmul.f32 %v334, %v339
    %v343 = vmul.f32 %v335, %v339
    %v344 = vpack.c.bf16 %v341, %v340
    %v345 = vpack.c.bf16 %v343, %v342
    %v346 = vld [vmem:[#allocation5] sm:$0xff]
    %v347 = vld [vmem:[#allocation5 + $0x8] sm:$0xff]
    %v348 = vld [vmem:[#allocation5 + $0x10] sm:$0xff]
    %v349 = vld [vmem:[#allocation5 + $0x18] sm:$0xff]
    %v350 = vld [vmem:[#allocation5 + $0x20] sm:$0xff]
    %v351 = vld [vmem:[#allocation5 + $0x28] sm:$0xff]
    %v352 = vld [vmem:[#allocation5 + $0x30] sm:$0xff]
    %v353 = vld [vmem:[#allocation5 + $0x38] sm:$0xff]
    %v354 = vld [vmem:[#allocation5 + $0x40] sm:$0xff]
    %v355 = vld [vmem:[#allocation5 + $0x48] sm:$0xff]
    %v356 = vld [vmem:[#allocation5 + $0x50] sm:$0xff]
    %v357 = vld [vmem:[#allocation5 + $0x58] sm:$0xff]
    %v358 = vld [vmem:[#allocation5 + $0x60] sm:$0xff]
    %v359 = vld [vmem:[#allocation5 + $0x68] sm:$0xff]
    %v360 = vld [vmem:[#allocation5 + $0x70] sm:$0xff]
    %v361 = vld [vmem:[#allocation5 + $0x78] sm:$0xff]
    %v378 = vunpack.c.l.b16 %v346
    %v379 = vunpack.c.h.b16 %v346
    %v380 = vunpack.c.l.b16 %v347
    %v381 = vunpack.c.h.b16 %v347
    %v382 = vunpack.c.l.b16 %v348
    %v383 = vunpack.c.h.b16 %v348
    %v384 = vunpack.c.l.b16 %v349
    %v385 = vunpack.c.h.b16 %v349
    %v386 = vunpack.c.l.b16 %v350
    %v387 = vunpack.c.h.b16 %v350
    %v388 = vunpack.c.l.b16 %v351
    %v389 = vunpack.c.h.b16 %v351
    %v390 = vunpack.c.l.b16 %v352
    %v391 = vunpack.c.h.b16 %v352
    %v392 = vunpack.c.l.b16 %v353
    %v393 = vunpack.c.h.b16 %v353
    %v394 = vunpack.c.l.b16 %v354
    %v395 = vunpack.c.h.b16 %v354
    %v396 = vunpack.c.l.b16 %v355
    %v397 = vunpack.c.h.b16 %v355
    %v398 = vunpack.c.l.b16 %v356
    %v399 = vunpack.c.h.b16 %v356
    %v400 = vunpack.c.l.b16 %v357
    %v401 = vunpack.c.h.b16 %v357
    %v402 = vunpack.c.l.b16 %v358
    %v403 = vunpack.c.h.b16 %v358
    %v404 = vunpack.c.l.b16 %v359
    %v405 = vunpack.c.h.b16 %v359
    %v406 = vunpack.c.l.b16 %v360
    %v407 = vunpack.c.h.b16 %v360
    %v408 = vunpack.c.l.b16 %v361
    %v409 = vunpack.c.h.b16 %v361
    %v410 = vpack.c.b16 %v382, %v378
    %v411 = vpack.c.b16 %v383, %v379
    %v412 = vpack.c.b16 %v384, %v380
    %v413 = vpack.c.b16 %v385, %v381
    %v414 = vpack.c.b16 %v390, %v386
    %v415 = vpack.c.b16 %v391, %v387
    %v416 = vpack.c.b16 %v392, %v388
    %v417 = vpack.c.b16 %v393, %v389
    %v418 = vpack.c.b16 %v398, %v394
    %v419 = vpack.c.b16 %v399, %v395
    %v420 = vpack.c.b16 %v400, %v396
    %v421 = vpack.c.b16 %v401, %v397
    %v422 = vpack.c.b16 %v406, %v402
    %v423 = vpack.c.b16 %v407, %v403
    %v424 = vpack.c.b16 %v408, %v404
    %v425 = vpack.c.b16 %v409, %v405
    %v443 = vsel %vm306, %v344, 0
    %v446 = vsel %vm306, %v345, 0
    %448 = vmatprep.subr.bf16.mxu0 0
    %449 = vmatpush1.bf16.msra.mxu0 0
    %450 = vmatprep.subr.bf16.mxu0 0
    %451 = vmatpush1.bf16.msra.mxu0 0
    %452 = vmatprep.subr.bf16.mxu0 0
    %453 = vmatpush1.bf16.msra.mxu0 0
    %454 = vmatprep.subr.bf16.mxu0 0
    %455 = vmatpush1.bf16.msra.mxu0 0
    %456 = vmatprep.subr.bf16.mxu0 %v423
    %457 = vmatpush1.bf16.msra.mxu0 %v422
    %458 = vmatprep.subr.bf16.mxu0 %v419
    %459 = vmatpush1.bf16.msra.mxu0 %v418
    %460 = vmatprep.subr.bf16.mxu0 %v415
    %461 = vmatpush1.bf16.msra.mxu0 %v414
    %462 = vmatprep.subr.bf16.mxu0 %v411
    %463 = vmatpush1.bf16.msra.mxu0 %v410
    %464 = vmatprep.subr.bf16.mxu0 0
    %465 = vmatpush2.bf16.msra.mxu0 0
    %466 = vmatprep.subr.bf16.mxu0 0
    %467 = vmatpush2.bf16.msra.mxu0 0
    %468 = vmatprep.subr.bf16.mxu0 0
    %469 = vmatpush2.bf16.msra.mxu0 0
    %470 = vmatprep.subr.bf16.mxu0 0
    %471 = vmatpush2.bf16.msra.mxu0 0
    %472 = vmatprep.subr.bf16.mxu0 0
    %473 = vmatpush2.bf16.msra.mxu0 0
    %474 = vmatprep.subr.bf16.mxu0 0
    %475 = vmatpush2.bf16.msra.mxu0 0
    %476 = vmatprep.subr.bf16.mxu0 0
    %477 = vmatpush2.bf16.msra.mxu0 0
    %478 = vmatprep.subr.bf16.mxu0 0
    %479 = vmatpush2.bf16.msra.mxu0 0
    %480 = vmatprep.mubr.bf16.mxu0 0
    %481 = vmatmul.mubr.bf16.gmra.mxu0 %v443
    %v482 = vpop.f32.mrf.mxu0
    %v483 = vadd.f32 0.0, %v482
    %v484 = vpop.f32.mrf.mxu0
    %v485 = vadd.f32 0.0, %v484
    %v486 = vpop.f32.mrf.mxu0
    %v487 = vadd.f32 0.0, %v486
    %v488 = vpop.f32.mrf.mxu0
    %v489 = vadd.f32 0.0, %v488
    %490 = vmatprep.mubr.bf16.mxu0 0
    %491 = vmatmul.mubr.bf16.gmra.mxu0 %v446
    %v492 = vpop.f32.mrf.mxu0
    %v493 = vadd.f32 0.0, %v492
    %v494 = vpop.f32.mrf.mxu0
    %v495 = vadd.f32 0.0, %v494
    %v496 = vpop.f32.mrf.mxu0
    %v497 = vadd.f32 0.0, %v496
    %v498 = vpop.f32.mrf.mxu0
    %v499 = vadd.f32 0.0, %v498
    %500 = vdwg.mxu0
    %501 = vmatprep.subr.bf16.mxu0 0
    %502 = vmatpush1.bf16.msra.mxu0 0
    %503 = vmatprep.subr.bf16.mxu0 0
    %504 = vmatpush1.bf16.msra.mxu0 0
    %505 = vmatprep.subr.bf16.mxu0 0
    %506 = vmatpush1.bf16.msra.mxu0 0
    %507 = vmatprep.subr.bf16.mxu0 0
    %508 = vmatpush1.bf16.msra.mxu0 0
    %509 = vmatprep.subr.bf16.mxu0 %v425
    %510 = vmatpush1.bf16.msra.mxu0 %v424
    %511 = vmatprep.subr.bf16.mxu0 %v421
    %512 = vmatpush1.bf16.msra.mxu0 %v420
    %513 = vmatprep.subr.bf16.mxu0 %v417
    %514 = vmatpush1.bf16.msra.mxu0 %v416
    %515 = vmatprep.subr.bf16.mxu0 %v413
    %516 = vmatpush1.bf16.msra.mxu0 %v412
    %517 = vmatprep.subr.bf16.mxu0 0
    %518 = vmatpush2.bf16.msra.mxu0 0
    %519 = vmatprep.subr.bf16.mxu0 0
    %520 = vmatpush2.bf16.msra.mxu0 0
    %521 = vmatprep.subr.bf16.mxu0 0
    %522 = vmatpush2.bf16.msra.mxu0 0
    %523 = vmatprep.subr.bf16.mxu0 0
    %524 = vmatpush2.bf16.msra.mxu0 0
    %525 = vmatprep.subr.bf16.mxu0 0
    %526 = vmatpush2.bf16.msra.mxu0 0
    %527 = vmatprep.subr.bf16.mxu0 0
    %528 = vmatpush2.bf16.msra.mxu0 0
    %529 = vmatprep.subr.bf16.mxu0 0
    %530 = vmatpush2.bf16.msra.mxu0 0
    %531 = vmatprep.subr.bf16.mxu0 0
    %532 = vmatpush2.bf16.msra.mxu0 0
    %533 = vmatprep.mubr.bf16.mxu0 0
    %534 = vmatmul.mubr.bf16.gmra.mxu0 %v443
    %v535 = vpop.f32.mrf.mxu0
    %v536 = vadd.f32 0.0, %v535
    %v537 = vpop.f32.mrf.mxu0
    %v538 = vadd.f32 0.0, %v537
    %v539 = vpop.f32.mrf.mxu0
    %v540 = vadd.f32 0.0, %v539
    %v541 = vpop.f32.mrf.mxu0
    %v542 = vadd.f32 0.0, %v541
    %543 = vmatprep.mubr.bf16.mxu0 0
    %544 = vmatmul.mubr.bf16.gmra.mxu0 %v446
    %v545 = vpop.f32.mrf.mxu0
    %v546 = vadd.f32 0.0, %v545
    %v547 = vpop.f32.mrf.mxu0
    %v548 = vadd.f32 0.0, %v547
    %v549 = vpop.f32.mrf.mxu0
    %v550 = vadd.f32 0.0, %v549
    %v551 = vpop.f32.mrf.mxu0
    %v552 = vadd.f32 0.0, %v551
    %553 = vdwg.mxu0
    %v554 = vld [vmem:[%s5] sm:$0xf]
    %v555 = vld [vmem:[%s5 + $0x4] sm:$0xf]
    %v556 = vld [vmem:[%s5 + $0x8] sm:$0xf]
    %v557 = vld [vmem:[%s5 + $0xc] sm:$0xf]
    %v558 = vld [vmem:[%s5 + $0x10] sm:$0xf]
    %v559 = vld [vmem:[%s5 + $0x14] sm:$0xf]
    %v560 = vld [vmem:[%s5 + $0x18] sm:$0xf]
    %v561 = vld [vmem:[%s5 + $0x1c] sm:$0xf]
    %v562 = vld [vmem:[%s5 + $0x20] sm:$0xf]
    %v563 = vld [vmem:[%s5 + $0x24] sm:$0xf]
    %v564 = vld [vmem:[%s5 + $0x28] sm:$0xf]
    %v565 = vld [vmem:[%s5 + $0x2c] sm:$0xf]
    %v566 = vld [vmem:[%s5 + $0x30] sm:$0xf]
    %v567 = vld [vmem:[%s5 + $0x34] sm:$0xf]
    %v568 = vld [vmem:[%s5 + $0x38] sm:$0xf]
    %v569 = vld [vmem:[%s5 + $0x3c] sm:$0xf]
    %v586 = vunpack.c.l.b16 %v554
    %v587 = vunpack.c.l.b16 %v555
    %v588 = vunpack.c.l.b16 %v556
    %v589 = vunpack.c.l.b16 %v557
    %v590 = vunpack.c.l.b16 %v558
    %v591 = vunpack.c.l.b16 %v559
    %v592 = vunpack.c.l.b16 %v560
    %v593 = vunpack.c.l.b16 %v561
    %v594 = vunpack.c.l.b16 %v562
    %v595 = vunpack.c.l.b16 %v563
    %v596 = vunpack.c.l.b16 %v564
    %v597 = vunpack.c.l.b16 %v565
    %v598 = vunpack.c.l.b16 %v566
    %v599 = vunpack.c.l.b16 %v567
    %v600 = vunpack.c.l.b16 %v568
    %v601 = vunpack.c.l.b16 %v569
    %v602 = vpack.c.b16 %v587, %v586
    %v603 = vpack.c.b16 %v589, %v588
    %v604 = vpack.c.b16 %v591, %v590
    %v605 = vpack.c.b16 %v593, %v592
    %v606 = vpack.c.b16 %v595, %v594
    %v607 = vpack.c.b16 %v597, %v596
    %v608 = vpack.c.b16 %v599, %v598
    %v609 = vpack.c.b16 %v601, %v600
    %618 = vmatprep.subr.bf16.mxu0 0
    %619 = vmatpush1.bf16.msra.mxu0 %v609
    %620 = vmatprep.subr.bf16.mxu0 0
    %621 = vmatpush1.bf16.msra.mxu0 %v608
    %622 = vmatprep.subr.bf16.mxu0 0
    %623 = vmatpush1.bf16.msra.mxu0 %v607
    %624 = vmatprep.subr.bf16.mxu0 0
    %625 = vmatpush1.bf16.msra.mxu0 %v606
    %626 = vmatprep.subr.bf16.mxu0 0
    %627 = vmatpush1.bf16.msra.mxu0 %v605
    %628 = vmatprep.subr.bf16.mxu0 0
    %629 = vmatpush1.bf16.msra.mxu0 %v604
    %630 = vmatprep.subr.bf16.mxu0 0
    %631 = vmatpush1.bf16.msra.mxu0 %v603
    %632 = vmatprep.subr.bf16.mxu0 0
    %633 = vmatpush1.bf16.msra.mxu0 %v602
    %634 = vmatprep.subr.bf16.mxu0 0
    %635 = vmatpush2.bf16.msra.mxu0 0
    %636 = vmatprep.subr.bf16.mxu0 0
    %637 = vmatpush2.bf16.msra.mxu0 0
    %638 = vmatprep.subr.bf16.mxu0 0
    %639 = vmatpush2.bf16.msra.mxu0 0
    %640 = vmatprep.subr.bf16.mxu0 0
    %641 = vmatpush2.bf16.msra.mxu0 0
    %642 = vmatprep.subr.bf16.mxu0 0
    %643 = vmatpush2.bf16.msra.mxu0 0
    %644 = vmatprep.subr.bf16.mxu0 0
    %645 = vmatpush2.bf16.msra.mxu0 0
    %646 = vmatprep.subr.bf16.mxu0 0
    %647 = vmatpush2.bf16.msra.mxu0 0
    %648 = vmatprep.subr.bf16.mxu0 0
    %649 = vmatpush2.bf16.msra.mxu0 0
    %650 = vmatprep.mubr.bf16.mxu0 0
    %651 = vmatmul.mubr.bf16.gmra.mxu0 %v187
    %v652 = vpop.f32.mrf.mxu0
    %v653 = vadd.f32 0.0, %v652
    %v654 = vpop.f32.mrf.mxu0
    %v655 = vpop.f32.mrf.mxu0
    %v656 = vadd.f32 0.0, %v655
    %v657 = vpop.f32.mrf.mxu0
    %658 = vmatprep.mubr.bf16.mxu0 0
    %659 = vmatmul.mubr.bf16.gmra.mxu0 %v188
    %v660 = vpop.f32.mrf.mxu0
    %v661 = vadd.f32 0.0, %v660
    %v662 = vpop.f32.mrf.mxu0
    %v663 = vpop.f32.mrf.mxu0
    %v664 = vadd.f32 0.0, %v663
    %v665 = vpop.f32.mrf.mxu0
    %666 = vdwg.mxu0
    %667 = vrot.lane.b32.xlu0 %v653, 127
    %v668 = vpop.permute.xlu0 %667
    %669 = vrot.lane.b32.xlu0 %v656, 127
    %v670 = vpop.permute.xlu0 %669
    %671 = vrot.lane.b32.xlu0 %v661, 127
    %v672 = vpop.permute.xlu0 %671
    %673 = vrot.lane.b32.xlu0 %v664, 127
    %v674 = vpop.permute.xlu0 %673
    %675 = vrot.lane.b32.xlu0 %v653, 1
    %v676 = vpop.permute.xlu0 %675
    %677 = vrot.lane.b32.xlu0 %v656, 1
    %v678 = vpop.permute.xlu0 %677
    %679 = vrot.lane.b32.xlu0 %v661, 1
    %v680 = vpop.permute.xlu0 %679
    %681 = vrot.lane.b32.xlu0 %v664, 1
    %v682 = vpop.permute.xlu0 %681
    %v683 = vmul.f32 %v653, %v124
    %v684 = vmul.f32 %v656, %v125
    %v685 = vmul.f32 %v661, %v126
    %v686 = vmul.f32 %v664, %v127
    %v687 = vmul.f32 %v668, %v129
    %v688 = vmul.f32 %v670, %v130
    %v689 = vmul.f32 %v672, %v131
    %v690 = vmul.f32 %v674, %v132
    %v691 = vadd.f32 %v683, %v687
    %v692 = vadd.f32 %v684, %v688
    %v693 = vadd.f32 %v685, %v689
    %v694 = vadd.f32 %v686, %v690
    %v695 = vmul.f32 %v676, %v134
    %v696 = vmul.f32 %v678, %v135
    %v697 = vmul.f32 %v680, %v136
    %v698 = vmul.f32 %v682, %v137
    %v699 = vadd.f32 %v691, %v695
    %v700 = vadd.f32 %v692, %v696
    %v701 = vadd.f32 %v693, %v697
    %v702 = vadd.f32 %v694, %v698
    %v703 = vpack.c.bf16 %v700, %v699
    %v704 = vpack.c.bf16 %v702, %v701
    %v705 = vmul.f32 %v653, %v653
    %v706 = vmul.f32 %v656, %v656
    %v707 = vmul.f32 %v661, %v661
    %v708 = vmul.f32 %v664, %v664
    %v709 = vsel %vm306, %v705, 0.0
    %710 = vadd.xlane.f32.xlu0 %v709
    %v711 = vpop.xlane.xlu0 %710
    %v712 = vsel %vm306, %v706, 0.0
    %713 = vadd.xlane.f32.xlu0 %v712
    %v714 = vpop.xlane.xlu0 %713
    %v715 = vsel %vm306, %v707, 0.0
    %716 = vadd.xlane.f32.xlu0 %v715
    %v717 = vpop.xlane.xlu0 %716
    %v718 = vsel %vm306, %v708, 0.0
    %719 = vadd.xlane.f32.xlu0 %v718
    %v720 = vpop.xlane.xlu0 %719
    %v721 = vmul.f32 %v711, %v319
    %v722 = vmul.f32 %v714, %v319
    %v723 = vmul.f32 %v717, %v319
    %v724 = vmul.f32 %v720, %v319
    %v725 = vadd.f32 %v721, 1e-05
    %v726 = vadd.f32 %v722, 1e-05
    %v727 = vadd.f32 %v723, 1e-05
    %v728 = vadd.f32 %v724, 1e-05
    %v729 = vrsqrt.pop %v725
    %v730 = vrsqrt.pop %v726
    %v731 = vrsqrt.pop %v727
    %v732 = vrsqrt.pop %v728
    %v733 = vmul.f32 %v653, %v729
    %v734 = vmul.f32 %v656, %v730
    %v735 = vmul.f32 %v661, %v731
    %v736 = vmul.f32 %v664, %v732
    %v737 = vlaneseq
    %v738 = vshrl.u32 %v737, 7
    %v739 = vsub.s32 0, %v738
    %v740 = vrot.slane %v141, %v739
    %v741 = vmul.f32 %v733, %v740
    %v742 = vmul.f32 %v734, %v740
    %v743 = vmul.f32 %v735, %v740
    %v744 = vmul.f32 %v736, %v740
    %v745 = vpack.c.bf16 %v742, %v741
    %v746 = vpack.c.bf16 %v744, %v743
    %v747 = vld [vmem:[#allocation7] sm:$0xff]
    %v748 = vld [vmem:[#allocation7 + $0x8] sm:$0xff]
    %v749 = vld [vmem:[#allocation7 + $0x10] sm:$0xff]
    %v750 = vld [vmem:[#allocation7 + $0x18] sm:$0xff]
    %v751 = vld [vmem:[#allocation7 + $0x20] sm:$0xff]
    %v752 = vld [vmem:[#allocation7 + $0x28] sm:$0xff]
    %v753 = vld [vmem:[#allocation7 + $0x30] sm:$0xff]
    %v754 = vld [vmem:[#allocation7 + $0x38] sm:$0xff]
    %v755 = vld [vmem:[#allocation7 + $0x40] sm:$0xff]
    %v756 = vld [vmem:[#allocation7 + $0x48] sm:$0xff]
    %v757 = vld [vmem:[#allocation7 + $0x50] sm:$0xff]
    %v758 = vld [vmem:[#allocation7 + $0x58] sm:$0xff]
    %v759 = vld [vmem:[#allocation7 + $0x60] sm:$0xff]
    %v760 = vld [vmem:[#allocation7 + $0x68] sm:$0xff]
    %v761 = vld [vmem:[#allocation7 + $0x70] sm:$0xff]
    %v762 = vld [vmem:[#allocation7 + $0x78] sm:$0xff]
    %v763 = vld [vmem:[#allocation7 + $0x80] sm:$0xff]
    %v764 = vld [vmem:[#allocation7 + $0x88] sm:$0xff]
    %v765 = vld [vmem:[#allocation7 + $0x90] sm:$0xff]
    %v766 = vld [vmem:[#allocation7 + $0x98] sm:$0xff]
    %v767 = vld [vmem:[#allocation7 + $0xa0] sm:$0xff]
    %v768 = vld [vmem:[#allocation7 + $0xa8] sm:$0xff]
    %v769 = vld [vmem:[#allocation7 + $0xb0] sm:$0xff]
    %v770 = vld [vmem:[#allocation7 + $0xb8] sm:$0xff]
    %v771 = vld [vmem:[#allocation7 + $0xc0] sm:$0xff]
    %v772 = vld [vmem:[#allocation7 + $0xc8] sm:$0xff]
    %v773 = vld [vmem:[#allocation7 + $0xd0] sm:$0xff]
    %v774 = vld [vmem:[#allocation7 + $0xd8] sm:$0xff]
    %v775 = vld [vmem:[#allocation7 + $0xe0] sm:$0xff]
    %v776 = vld [vmem:[#allocation7 + $0xe8] sm:$0xff]
    %v777 = vld [vmem:[#allocation7 + $0xf0] sm:$0xff]
    %v778 = vld [vmem:[#allocation7 + $0xf8] sm:$0xff]
    %v811 = vunpack.c.l.b16 %v747
    %v812 = vunpack.c.h.b16 %v747
    %v813 = vunpack.c.l.b16 %v748
    %v814 = vunpack.c.h.b16 %v748
    %v815 = vunpack.c.l.b16 %v749
    %v816 = vunpack.c.h.b16 %v749
    %v817 = vunpack.c.l.b16 %v750
    %v818 = vunpack.c.h.b16 %v750
    %v819 = vunpack.c.l.b16 %v751
    %v820 = vunpack.c.h.b16 %v751
    %v821 = vunpack.c.l.b16 %v752
    %v822 = vunpack.c.h.b16 %v752
    %v823 = vunpack.c.l.b16 %v753
    %v824 = vunpack.c.h.b16 %v753
    %v825 = vunpack.c.l.b16 %v754
    %v826 = vunpack.c.h.b16 %v754
    %v827 = vunpack.c.l.b16 %v755
    %v828 = vunpack.c.h.b16 %v755
    %v829 = vunpack.c.l.b16 %v756
    %v830 = vunpack.c.h.b16 %v756
    %v831 = vunpack.c.l.b16 %v757
    %v832 = vunpack.c.h.b16 %v757
    %v833 = vunpack.c.l.b16 %v758
    %v834 = vunpack.c.h.b16 %v758
    %v835 = vunpack.c.l.b16 %v759
    %v836 = vunpack.c.h.b16 %v759
    %v837 = vunpack.c.l.b16 %v760
    %v838 = vunpack.c.h.b16 %v760
    %v839 = vunpack.c.l.b16 %v761
    %v840 = vunpack.c.h.b16 %v761
    %v841 = vunpack.c.l.b16 %v762
    %v842 = vunpack.c.h.b16 %v762
    %v843 = vunpack.c.l.b16 %v763
    %v844 = vunpack.c.h.b16 %v763
    %v845 = vunpack.c.l.b16 %v764
    %v846 = vunpack.c.h.b16 %v764
    %v847 = vunpack.c.l.b16 %v765
    %v848 = vunpack.c.h.b16 %v765
    %v849 = vunpack.c.l.b16 %v766
    %v850 = vunpack.c.h.b16 %v766
    %v851 = vunpack.c.l.b16 %v767
    %v852 = vunpack.c.h.b16 %v767
    %v853 = vunpack.c.l.b16 %v768
    %v854 = vunpack.c.h.b16 %v768
    %v855 = vunpack.c.l.b16 %v769
    %v856 = vunpack.c.h.b16 %v769
    %v857 = vunpack.c.l.b16 %v770
    %v858 = vunpack.c.h.b16 %v770
    %v859 = vunpack.c.l.b16 %v771
    %v860 = vunpack.c.h.b16 %v771
    %v861 = vunpack.c.l.b16 %v772
    %v862 = vunpack.c.h.b16 %v772
    %v863 = vunpack.c.l.b16 %v773
    %v864 = vunpack.c.h.b16 %v773
    %v865 = vunpack.c.l.b16 %v774
    %v866 = vunpack.c.h.b16 %v774
    %v867 = vunpack.c.l.b16 %v775
    %v868 = vunpack.c.h.b16 %v775
    %v869 = vunpack.c.l.b16 %v776
    %v870 = vunpack.c.h.b16 %v776
    %v871 = vunpack.c.l.b16 %v777
    %v872 = vunpack.c.h.b16 %v777
    %v873 = vunpack.c.l.b16 %v778
    %v874 = vunpack.c.h.b16 %v778
    %v875 = vpack.c.b16 %v819, %v811
    %v876 = vpack.c.b16 %v820, %v812
    %v877 = vpack.c.b16 %v821, %v813
    %v878 = vpack.c.b16 %v822, %v814
    %v879 = vpack.c.b16 %v823, %v815
    %v880 = vpack.c.b16 %v824, %v816
    %v881 = vpack.c.b16 %v825, %v817
    %v882 = vpack.c.b16 %v826, %v818
    %v883 = vpack.c.b16 %v835, %v827
    %v884 = vpack.c.b16 %v836, %v828
    %v885 = vpack.c.b16 %v837, %v829
    %v886 = vpack.c.b16 %v838, %v830
    %v887 = vpack.c.b16 %v839, %v831
    %v888 = vpack.c.b16 %v840, %v832
    %v889 = vpack.c.b16 %v841, %v833
    %v890 = vpack.c.b16 %v842, %v834
    %v891 = vpack.c.b16 %v851, %v843
    %v892 = vpack.c.b16 %v852, %v844
    %v893 = vpack.c.b16 %v853, %v845
    %v894 = vpack.c.b16 %v854, %v846
    %v895 = vpack.c.b16 %v855, %v847
    %v896 = vpack.c.b16 %v856, %v848
    %v897 = vpack.c.b16 %v857, %v849
    %v898 = vpack.c.b16 %v858, %v850
    %v899 = vpack.c.b16 %v867, %v859
    %v900 = vpack.c.b16 %v868, %v860
    %v901 = vpack.c.b16 %v869, %v861
    %v902 = vpack.c.b16 %v870, %v862
    %v903 = vpack.c.b16 %v871, %v863
    %v904 = vpack.c.b16 %v872, %v864
    %v905 = vpack.c.b16 %v873, %v865
    %v906 = vpack.c.b16 %v874, %v866
    %v940 = vsel %vm306, %v745, 0
    %v943 = vsel %vm306, %v746, 0
    %945 = vmatprep.subr.bf16.mxu0 0
    %946 = vmatpush1.bf16.msra.mxu0 0
    %947 = vmatprep.subr.bf16.mxu0 0
    %948 = vmatpush1.bf16.msra.mxu0 0
    %949 = vmatprep.subr.bf16.mxu0 0
    %950 = vmatpush1.bf16.msra.mxu0 0
    %951 = vmatprep.subr.bf16.mxu0 0
    %952 = vmatpush1.bf16.msra.mxu0 0
    %953 = vmatprep.subr.bf16.mxu0 %v900
    %954 = vmatpush1.bf16.msra.mxu0 %v899
    %955 = vmatprep.subr.bf16.mxu0 %v892
    %956 = vmatpush1.bf16.msra.mxu0 %v891
    %957 = vmatprep.subr.bf16.mxu0 %v884
    %958 = vmatpush1.bf16.msra.mxu0 %v883
    %959 = vmatprep.subr.bf16.mxu0 %v876
    %960 = vmatpush1.bf16.msra.mxu0 %v875
    %961 = vmatprep.subr.bf16.mxu0 0
    %962 = vmatpush2.bf16.msra.mxu0 0
    %963 = vmatprep.subr.bf16.mxu0 0
    %964 = vmatpush2.bf16.msra.mxu0 0
    %965 = vmatprep.subr.bf16.mxu0 0
    %966 = vmatpush2.bf16.msra.mxu0 0
    %967 = vmatprep.subr.bf16.mxu0 0
    %968 = vmatpush2.bf16.msra.mxu0 0
    %969 = vmatprep.subr.bf16.mxu0 0
    %970 = vmatpush2.bf16.msra.mxu0 0
    %971 = vmatprep.subr.bf16.mxu0 0
    %972 = vmatpush2.bf16.msra.mxu0 0
    %973 = vmatprep.subr.bf16.mxu0 0
    %974 = vmatpush2.bf16.msra.mxu0 0
    %975 = vmatprep.subr.bf16.mxu0 0
    %976 = vmatpush2.bf16.msra.mxu0 0
    %977 = vmatprep.mubr.bf16.mxu0 0
    %978 = vmatmul.mubr.bf16.gmra.mxu0 %v940
    %v979 = vpop.f32.mrf.mxu0
    %v980 = vadd.f32 0.0, %v979
    %v981 = vpop.f32.mrf.mxu0
    %v982 = vadd.f32 0.0, %v981
    %v983 = vpop.f32.mrf.mxu0
    %v984 = vadd.f32 0.0, %v983
    %v985 = vpop.f32.mrf.mxu0
    %v986 = vadd.f32 0.0, %v985
    %987 = vmatprep.mubr.bf16.mxu0 0
    %988 = vmatmul.mubr.bf16.gmra.mxu0 %v943
    %v989 = vpop.f32.mrf.mxu0
    %v990 = vadd.f32 0.0, %v989
    %v991 = vpop.f32.mrf.mxu0
    %v992 = vadd.f32 0.0, %v991
    %v993 = vpop.f32.mrf.mxu0
    %v994 = vadd.f32 0.0, %v993
    %v995 = vpop.f32.mrf.mxu0
    %v996 = vadd.f32 0.0, %v995
    %997 = vdwg.mxu0
    %998 = vmatprep.subr.bf16.mxu0 0
    %999 = vmatpush1.bf16.msra.mxu0 0
    %1000 = vmatprep.subr.bf16.mxu0 0
    %1001 = vmatpush1.bf16.msra.mxu0 0
    %1002 = vmatprep.subr.bf16.mxu0 0
    %1003 = vmatpush1.bf16.msra.mxu0 0
    %1004 = vmatprep.subr.bf16.mxu0 0
    %1005 = vmatpush1.bf16.msra.mxu0 0
    %1006 = vmatprep.subr.bf16.mxu0 %v902
    %1007 = vmatpush1.bf16.msra.mxu0 %v901
    %1008 = vmatprep.subr.bf16.mxu0 %v894
    %1009 = vmatpush1.bf16.msra.mxu0 %v893
    %1010 = vmatprep.subr.bf16.mxu0 %v886
    %1011 = vmatpush1.bf16.msra.mxu0 %v885
    %1012 = vmatprep.subr.bf16.mxu0 %v878
    %1013 = vmatpush1.bf16.msra.mxu0 %v877
    %1014 = vmatprep.subr.bf16.mxu0 0
    %1015 = vmatpush2.bf16.msra.mxu0 0
    %1016 = vmatprep.subr.bf16.mxu0 0
    %1017 = vmatpush2.bf16.msra.mxu0 0
    %1018 = vmatprep.subr.bf16.mxu0 0
    %1019 = vmatpush2.bf16.msra.mxu0 0
    %1020 = vmatprep.subr.bf16.mxu0 0
    %1021 = vmatpush2.bf16.msra.mxu0 0
    %1022 = vmatprep.subr.bf16.mxu0 0
    %1023 = vmatpush2.bf16.msra.mxu0 0
    %1024 = vmatprep.subr.bf16.mxu0 0
    %1025 = vmatpush2.bf16.msra.mxu0 0
    %1026 = vmatprep.subr.bf16.mxu0 0
    %1027 = vmatpush2.bf16.msra.mxu0 0
    %1028 = vmatprep.subr.bf16.mxu0 0
    %1029 = vmatpush2.bf16.msra.mxu0 0
    %1030 = vmatprep.mubr.bf16.mxu0 0
    %1031 = vmatmul.mubr.bf16.gmra.mxu0 %v940
    %v1032 = vpop.f32.mrf.mxu0
    %v1033 = vadd.f32 0.0, %v1032
    %v1034 = vpop.f32.mrf.mxu0
    %v1035 = vadd.f32 0.0, %v1034
    %v1036 = vpop.f32.mrf.mxu0
    %v1037 = vadd.f32 0.0, %v1036
    %v1038 = vpop.f32.mrf.mxu0
    %v1039 = vadd.f32 0.0, %v1038
    %1040 = vmatprep.mubr.bf16.mxu0 0
    %1041 = vmatmul.mubr.bf16.gmra.mxu0 %v943
    %v1042 = vpop.f32.mrf.mxu0
    %v1043 = vadd.f32 0.0, %v1042
    %v1044 = vpop.f32.mrf.mxu0
    %v1045 = vadd.f32 0.0, %v1044
    %v1046 = vpop.f32.mrf.mxu0
    %v1047 = vadd.f32 0.0, %v1046
    %v1048 = vpop.f32.mrf.mxu0
    %v1049 = vadd.f32 0.0, %v1048
    %1050 = vdwg.mxu0
    %1051 = vmatprep.subr.bf16.mxu0 0
    %1052 = vmatpush1.bf16.msra.mxu0 0
    %1053 = vmatprep.subr.bf16.mxu0 0
    %1054 = vmatpush1.bf16.msra.mxu0 0
    %1055 = vmatprep.subr.bf16.mxu0 0
    %1056 = vmatpush1.bf16.msra.mxu0 0
    %1057 = vmatprep.subr.bf16.mxu0 0
    %1058 = vmatpush1.bf16.msra.mxu0 0
    %1059 = vmatprep.subr.bf16.mxu0 %v904
    %1060 = vmatpush1.bf16.msra.mxu0 %v903
    %1061 = vmatprep.subr.bf16.mxu0 %v896
    %1062 = vmatpush1.bf16.msra.mxu0 %v895
    %1063 = vmatprep.subr.bf16.mxu0 %v888
    %1064 = vmatpush1.bf16.msra.mxu0 %v887
    %1065 = vmatprep.subr.bf16.mxu0 %v880
    %1066 = vmatpush1.bf16.msra.mxu0 %v879
    %1067 = vmatprep.subr.bf16.mxu0 0
    %1068 = vmatpush2.bf16.msra.mxu0 0
    %1069 = vmatprep.subr.bf16.mxu0 0
    %1070 = vmatpush2.bf16.msra.mxu0 0
    %1071 = vmatprep.subr.bf16.mxu0 0
    %1072 = vmatpush2.bf16.msra.mxu0 0
    %1073 = vmatprep.subr.bf16.mxu0 0
    %1074 = vmatpush2.bf16.msra.mxu0 0
    %1075 = vmatprep.subr.bf16.mxu0 0
    %1076 = vmatpush2.bf16.msra.mxu0 0
    %1077 = vmatprep.subr.bf16.mxu0 0
    %1078 = vmatpush2.bf16.msra.mxu0 0
    %1079 = vmatprep.subr.bf16.mxu0 0
    %1080 = vmatpush2.bf16.msra.mxu0 0
    %1081 = vmatprep.subr.bf16.mxu0 0
    %1082 = vmatpush2.bf16.msra.mxu0 0
    %1083 = vmatprep.mubr.bf16.mxu0 0
    %1084 = vmatmul.mubr.bf16.gmra.mxu0 %v940
    %v1085 = vpop.f32.mrf.mxu0
    %v1086 = vadd.f32 0.0, %v1085
    %v1087 = vpop.f32.mrf.mxu0
    %v1088 = vadd.f32 0.0, %v1087
    %v1089 = vpop.f32.mrf.mxu0
    %v1090 = vadd.f32 0.0, %v1089
    %v1091 = vpop.f32.mrf.mxu0
    %v1092 = vadd.f32 0.0, %v1091
    %1093 = vmatprep.mubr.bf16.mxu0 0
    %1094 = vmatmul.mubr.bf16.gmra.mxu0 %v943
    %v1095 = vpop.f32.mrf.mxu0
    %v1096 = vadd.f32 0.0, %v1095
    %v1097 = vpop.f32.mrf.mxu0
    %v1098 = vadd.f32 0.0, %v1097
    %v1099 = vpop.f32.mrf.mxu0
    %v1100 = vadd.f32 0.0, %v1099
    %v1101 = vpop.f32.mrf.mxu0
    %v1102 = vadd.f32 0.0, %v1101
    %1103 = vdwg.mxu0
    %1104 = vmatprep.subr.bf16.mxu0 0
    %1105 = vmatpush1.bf16.msra.mxu0 0
    %1106 = vmatprep.subr.bf16.mxu0 0
    %1107 = vmatpush1.bf16.msra.mxu0 0
    %1108 = vmatprep.subr.bf16.mxu0 0
    %1109 = vmatpush1.bf16.msra.mxu0 0
    %1110 = vmatprep.subr.bf16.mxu0 0
    %1111 = vmatpush1.bf16.msra.mxu0 0
    %1112 = vmatprep.subr.bf16.mxu0 %v906
    %1113 = vmatpush1.bf16.msra.mxu0 %v905
    %1114 = vmatprep.subr.bf16.mxu0 %v898
    %1115 = vmatpush1.bf16.msra.mxu0 %v897
    %1116 = vmatprep.subr.bf16.mxu0 %v890
    %1117 = vmatpush1.bf16.msra.mxu0 %v889
    %1118 = vmatprep.subr.bf16.mxu0 %v882
    %1119 = vmatpush1.bf16.msra.mxu0 %v881
    %1120 = vmatprep.subr.bf16.mxu0 0
    %1121 = vmatpush2.bf16.msra.mxu0 0
    %1122 = vmatprep.subr.bf16.mxu0 0
    %1123 = vmatpush2.bf16.msra.mxu0 0
    %1124 = vmatprep.subr.bf16.mxu0 0
    %1125 = vmatpush2.bf16.msra.mxu0 0
    %1126 = vmatprep.subr.bf16.mxu0 0
    %1127 = vmatpush2.bf16.msra.mxu0 0
    %1128 = vmatprep.subr.bf16.mxu0 0
    %1129 = vmatpush2.bf16.msra.mxu0 0
    %1130 = vmatprep.subr.bf16.mxu0 0
    %1131 = vmatpush2.bf16.msra.mxu0 0
    %1132 = vmatprep.subr.bf16.mxu0 0
    %1133 = vmatpush2.bf16.msra.mxu0 0
    %1134 = vmatprep.subr.bf16.mxu0 0
    %1135 = vmatpush2.bf16.msra.mxu0 0
    %1136 = vmatprep.mubr.bf16.mxu0 0
    %1137 = vmatmul.mubr.bf16.gmra.mxu0 %v940
    %v1138 = vpop.f32.mrf.mxu0
    %v1139 = vadd.f32 0.0, %v1138
    %v1140 = vpop.f32.mrf.mxu0
    %v1141 = vadd.f32 0.0, %v1140
    %v1142 = vpop.f32.mrf.mxu0
    %v1143 = vadd.f32 0.0, %v1142
    %v1144 = vpop.f32.mrf.mxu0
    %v1145 = vadd.f32 0.0, %v1144
    %1146 = vmatprep.mubr.bf16.mxu0 0
    %1147 = vmatmul.mubr.bf16.gmra.mxu0 %v943
    %v1148 = vpop.f32.mrf.mxu0
    %v1149 = vadd.f32 0.0, %v1148
    %v1150 = vpop.f32.mrf.mxu0
    %v1151 = vadd.f32 0.0, %v1150
    %v1152 = vpop.f32.mrf.mxu0
    %v1153 = vadd.f32 0.0, %v1152
    %v1154 = vpop.f32.mrf.mxu0
    %v1155 = vadd.f32 0.0, %v1154
    %1156 = vdwg.mxu0
    %v1157 = vpack.c.bf16 %v984, %v980
    %v1158 = vpack.c.bf16 %v986, %v982
    %v1159 = vpack.c.bf16 %v1037, %v1033
    %v1160 = vpack.c.bf16 %v1039, %v1035
    %v1161 = vpack.c.bf16 %v1090, %v1086
    %v1162 = vpack.c.bf16 %v1092, %v1088
    %v1163 = vpack.c.bf16 %v1143, %v1139
    %v1164 = vpack.c.bf16 %v1145, %v1141
    %v1165 = vpack.c.bf16 %v994, %v990
    %v1166 = vpack.c.bf16 %v996, %v992
    %v1167 = vpack.c.bf16 %v1047, %v1043
    %v1168 = vpack.c.bf16 %v1049, %v1045
    %v1169 = vpack.c.bf16 %v1100, %v1096
    %v1170 = vpack.c.bf16 %v1102, %v1098
    %v1171 = vpack.c.bf16 %v1153, %v1149
    %v1172 = vpack.c.bf16 %v1155, %v1151
    %v1173 = vlaneseq
    %v1174 = vshrl.u32 %v1173, 7
    %v1175 = vadd.s32 %v1174, 8
    %v1176 = vadd.s32 %v1174, 16
    %v1177 = vadd.s32 %v1174, 24
    %v1178 = vlaneseq
    %v1179 = vand.u32 %v1178, 127
    %vm1180 = vcmp.ge.s32.totalorder %v1174, %v1179
    %vm1181 = vcmp.ge.s32.totalorder %v1175, %v1179
    %vm1182 = vcmp.ge.s32.totalorder %v1176, %v1179
    %vm1183 = vcmp.ge.s32.totalorder %v1177, %v1179
    %v1184 = vshra.s32 %v1174, 4
    %v1185 = vshra.s32 %v1175, 4
    %v1186 = vshra.s32 %v1176, 4
    %v1187 = vshra.s32 %v1177, 4
    %v1188 = vshra.s32 %v1179, 4
    %vm1189 = vcmp.eq.s32.totalorder %v1184, %v1188
    %vm1190 = vcmp.eq.s32.totalorder %v1185, %v1188
    %vm1191 = vcmp.eq.s32.totalorder %v1186, %v1188
    %vm1192 = vcmp.eq.s32.totalorder %v1187, %v1188
    %vm1193 = vmand %vm1180, %vm1189
    %vm1194 = vmand %vm1181, %vm1190
    %vm1195 = vmand %vm1182, %vm1191
    %vm1196 = vmand %vm1183, %vm1192
    %1197 = vrot.lane.b32.xlu0 %v483, 127
    %v1198 = vpop.permute.xlu0 %1197
    %1199 = vrot.lane.b32.xlu0 %v487, 127
    %v1200 = vpop.permute.xlu0 %1199
    %1201 = vrot.lane.b32.xlu0 %v493, 127
    %v1202 = vpop.permute.xlu0 %1201
    %1203 = vrot.lane.b32.xlu0 %v497, 127
    %v1204 = vpop.permute.xlu0 %1203
    %1205 = vrot.lane.b32.xlu0 %v483, 1
    %v1206 = vpop.permute.xlu0 %1205
    %1207 = vrot.lane.b32.xlu0 %v487, 1
    %v1208 = vpop.permute.xlu0 %1207
    %1209 = vrot.lane.b32.xlu0 %v493, 1
    %v1210 = vpop.permute.xlu0 %1209
    %1211 = vrot.lane.b32.xlu0 %v497, 1
    %v1212 = vpop.permute.xlu0 %1211
    %v1213 = vmul.f32 %v483, %v119
    %v1214 = vmul.f32 %v487, %v120
    %v1215 = vmul.f32 %v493, %v121
    %v1216 = vmul.f32 %v497, %v122
    %v1217 = vmul.f32 %v1198, %v129
    %v1218 = vmul.f32 %v1200, %v130
    %v1219 = vmul.f32 %v1202, %v131
    %v1220 = vmul.f32 %v1204, %v132
    %v1221 = vadd.f32 %v1213, %v1217
    %v1222 = vadd.f32 %v1214, %v1218
    %v1223 = vadd.f32 %v1215, %v1219
    %v1224 = vadd.f32 %v1216, %v1220
    %v1225 = vmul.f32 %v1206, %v134
    %v1226 = vmul.f32 %v1208, %v135
    %v1227 = vmul.f32 %v1210, %v136
    %v1228 = vmul.f32 %v1212, %v137
    %v1229 = vadd.f32 %v1221, %v1225
    %v1230 = vadd.f32 %v1222, %v1226
    %v1231 = vadd.f32 %v1223, %v1227
    %v1232 = vadd.f32 %v1224, %v1228
    %v1233 = vpack.c.bf16 %v1230, %v1229
    %v1234 = vpack.c.bf16 %v1232, %v1231
    %v1235 = vadd.bf16 %v1157, %v703
    %v1236 = vadd.bf16 %v1165, %v704
    %1237 = vmatprep.subr.bf16.mxu0 0
    %1238 = vmatpush1.bf16.xpose.msra.mxu0 0
    %1239 = vmatprep.subr.bf16.mxu0 0
    %1240 = vmatpush1.bf16.xpose.msra.mxu0 0
    %1241 = vmatprep.subr.bf16.mxu0 0
    %1242 = vmatpush1.bf16.xpose.msra.mxu0 0
    %1243 = vmatprep.subr.bf16.mxu0 0
    %1244 = vmatpush1.bf16.xpose.msra.mxu0 0
    %1245 = vmatprep.subr.bf16.mxu0 0
    %1246 = vmatpush1.bf16.xpose.msra.mxu0 0
    %1247 = vmatprep.subr.bf16.mxu0 0
    %1248 = vmatpush1.bf16.xpose.msra.mxu0 0
    %1249 = vmatprep.subr.bf16.mxu0 0
    %1250 = vmatpush1.bf16.xpose.msra.mxu0 %v1236
    %1251 = vmatprep.subr.bf16.mxu0 0
    %1252 = vmatpush1.bf16.xpose.msra.mxu0 %v1235
    %1253 = vmatprep.subr.bf16.mxu0 0
    %1254 = vmatpush2.bf16.xpose.msra.mxu0 0
    %1255 = vmatprep.subr.bf16.mxu0 0
    %1256 = vmatpush2.bf16.xpose.msra.mxu0 0
    %1257 = vmatprep.subr.bf16.mxu0 0
    %1258 = vmatpush2.bf16.xpose.msra.mxu0 0
    %1259 = vmatprep.subr.bf16.mxu0 0
    %1260 = vmatpush2.bf16.xpose.msra.mxu0 0
    %1261 = vmatprep.subr.bf16.mxu0 0
    %1262 = vmatpush2.bf16.xpose.msra.mxu0 0
    %1263 = vmatprep.subr.bf16.mxu0 0
    %1264 = vmatpush2.bf16.xpose.msra.mxu0 0
    %1265 = vmatprep.subr.bf16.mxu0 0
    %1266 = vmatpush2.bf16.xpose.msra.mxu0 0
    %1267 = vmatprep.subr.bf16.mxu0 0
    %1268 = vmatpush2.bf16.xpose.msra.mxu0 0
    %1269 = vmatprep.mubr.bf16.mxu0 0
    %1270 = vmatmul.mubr.bf16.gmra.mxu0 %v1233
    %v1271 = vpop.f32.mrf.mxu0
    %v1272 = vadd.f32 0.0, %v1271
    %v1273 = vpop.f32.mrf.mxu0
    %v1274 = vpop.f32.mrf.mxu0
    %v1275 = vadd.f32 0.0, %v1274
    %v1276 = vpop.f32.mrf.mxu0
    %1277 = vmatprep.mubr.bf16.mxu0 0
    %1278 = vmatmul.mubr.bf16.gmra.mxu0 %v1234
    %v1279 = vpop.f32.mrf.mxu0
    %v1280 = vadd.f32 0.0, %v1279
    %v1281 = vpop.f32.mrf.mxu0
    %v1282 = vpop.f32.mrf.mxu0
    %v1283 = vadd.f32 0.0, %v1282
    %v1284 = vpop.f32.mrf.mxu0
    %1285 = vdwg.mxu0
    %v1286 = vsel %vm1193, %v1272, -1e+30
    %v1287 = vsel %vm1194, %v1275, -1e+30
    %v1288 = vsel %vm1195, %v1280, -1e+30
    %v1289 = vsel %vm1196, %v1283, -1e+30
    %vm1290 = vcmask 261120
    %v1291 = vsel %vm1290, %v1286, -inf
    %1292 = vmax.xlane.f32.xlu0 %v1291
    %v1293 = vpop.xlane.xlu0 %1292
    %v1294 = vsel %vm1290, %v1287, -inf
    %1295 = vmax.xlane.f32.xlu0 %v1294
    %v1296 = vpop.xlane.xlu0 %1295
    %v1297 = vsel %vm1290, %v1288, -inf
    %1298 = vmax.xlane.f32.xlu0 %v1297
    %v1299 = vpop.xlane.xlu0 %1298
    %v1300 = vsel %vm1290, %v1289, -inf
    %1301 = vmax.xlane.f32.xlu0 %v1300
    %v1302 = vpop.xlane.xlu0 %1301
    %v1303 = vsub.f32 %v1286, %v1293
    %v1304 = vsub.f32 %v1287, %v1296
    %v1305 = vsub.f32 %v1288, %v1299
    %v1306 = vsub.f32 %v1289, %v1302
    %v1307 = vmul.f32 %v1303, 1.442695
    %v1308 = vpow.pop %v1307
    %v1309 = vmul.f32 %v1304, 1.442695
    %v1310 = vpow.pop %v1309
    %v1311 = vmul.f32 %v1305, 1.442695
    %v1312 = vpow.pop %v1311
    %v1313 = vmul.f32 %v1306, 1.442695
    %v1314 = vpow.pop %v1313
    %v1315 = vsel %vm1290, %v1308, 0.0
    %1316 = vadd.xlane.f32.xlu0 %v1315
    %v1317 = vpop.xlane.xlu0 %1316
    %v1318 = vsel %vm1290, %v1310, 0.0
    %1319 = vadd.xlane.f32.xlu0 %v1318
    %v1320 = vpop.xlane.xlu0 %1319
    %v1321 = vsel %vm1290, %v1312, 0.0
    %1322 = vadd.xlane.f32.xlu0 %v1321
    %v1323 = vpop.xlane.xlu0 %1322
    %v1324 = vsel %vm1290, %v1314, 0.0
    %1325 = vadd.xlane.f32.xlu0 %v1324
    %v1326 = vpop.xlane.xlu0 %1325
    %v1327 = vrcp.pop %v1317
    %v1328 = vrcp.pop %v1320
    %v1329 = vrcp.pop %v1323
    %v1330 = vrcp.pop %v1326
    %v1331 = vmul.f32 %v1308, %v1327
    %v1332 = vmul.f32 %v1310, %v1328
    %v1333 = vmul.f32 %v1312, %v1329
    %v1334 = vmul.f32 %v1314, %v1330
    %v1335 = vpack.c.bf16 %v1332, %v1331
    %v1336 = vpack.c.bf16 %v1334, %v1333
    %v1338 = vsel %vm1290, %v1335, 0
    %v1341 = vsel %vm1290, %v1336, 0
    %1343 = vmatprep.subr.bf16.mxu0 0
    %1344 = vmatpush1.bf16.msra.mxu0 0
    %1345 = vmatprep.subr.bf16.mxu0 0
    %1346 = vmatpush1.bf16.msra.mxu0 0
    %1347 = vmatprep.subr.bf16.mxu0 0
    %1348 = vmatpush1.bf16.msra.mxu0 0
    %1349 = vmatprep.subr.bf16.mxu0 0
    %1350 = vmatpush1.bf16.msra.mxu0 0
    %1351 = vmatprep.subr.bf16.mxu0 0
    %1352 = vmatpush1.bf16.msra.mxu0 0
    %1353 = vmatprep.subr.bf16.mxu0 0
    %1354 = vmatpush1.bf16.msra.mxu0 0
    %1355 = vmatprep.subr.bf16.mxu0 0
    %1356 = vmatpush1.bf16.msra.mxu0 %v1166
    %1357 = vmatprep.subr.bf16.mxu0 0
    %1358 = vmatpush1.bf16.msra.mxu0 %v1158
    %1359 = vmatprep.subr.bf16.mxu0 0
    %1360 = vmatpush2.bf16.msra.mxu0 0
    %1361 = vmatprep.subr.bf16.mxu0 0
    %1362 = vmatpush2.bf16.msra.mxu0 0
    %1363 = vmatprep.subr.bf16.mxu0 0
    %1364 = vmatpush2.bf16.msra.mxu0 0
    %1365 = vmatprep.subr.bf16.mxu0 0
    %1366 = vmatpush2.bf16.msra.mxu0 0
    %1367 = vmatprep.subr.bf16.mxu0 0
    %1368 = vmatpush2.bf16.msra.mxu0 0
    %1369 = vmatprep.subr.bf16.mxu0 0
    %1370 = vmatpush2.bf16.msra.mxu0 0
    %1371 = vmatprep.subr.bf16.mxu0 0
    %1372 = vmatpush2.bf16.msra.mxu0 0
    %1373 = vmatprep.subr.bf16.mxu0 0
    %1374 = vmatpush2.bf16.msra.mxu0 0
    %1375 = vmatprep.mubr.bf16.mxu0 0
    %1376 = vmatmul.mubr.bf16.gmra.mxu0 %v1338
    %v1377 = vpop.f32.mrf.mxu0
    %v1378 = vadd.f32 0.0, %v1377
    %v1379 = vpop.f32.mrf.mxu0
    %v1380 = vpop.f32.mrf.mxu0
    %v1381 = vadd.f32 0.0, %v1380
    %v1382 = vpop.f32.mrf.mxu0
    %1383 = vmatprep.mubr.bf16.mxu0 0
    %1384 = vmatmul.mubr.bf16.gmra.mxu0 %v1341
    %v1385 = vpop.f32.mrf.mxu0
    %v1386 = vadd.f32 0.0, %v1385
    %v1387 = vpop.f32.mrf.mxu0
    %v1388 = vpop.f32.mrf.mxu0
    %v1389 = vadd.f32 0.0, %v1388
    %v1390 = vpop.f32.mrf.mxu0
    %1391 = vdwg.mxu0
    %v1392 = vpack.c.bf16 %v1381, %v1378
    %v1393 = vpack.c.bf16 %v1389, %v1386
    %v1394 = vld [vmem:[#allocation8] sm:$0xf]
    %v1395 = vld [vmem:[#allocation8 + $0x4] sm:$0xf]
    %v1396 = vld [vmem:[#allocation8 + $0x8] sm:$0xf]
    %v1397 = vld [vmem:[#allocation8 + $0xc] sm:$0xf]
    %v1398 = vld [vmem:[#allocation8 + $0x10] sm:$0xf]
    %v1399 = vld [vmem:[#allocation8 + $0x14] sm:$0xf]
    %v1400 = vld [vmem:[#allocation8 + $0x18] sm:$0xf]
    %v1401 = vld [vmem:[#allocation8 + $0x1c] sm:$0xf]
    %v1402 = vld [vmem:[#allocation8 + $0x20] sm:$0xf]
    %v1403 = vld [vmem:[#allocation8 + $0x24] sm:$0xf]
    %v1404 = vld [vmem:[#allocation8 + $0x28] sm:$0xf]
    %v1405 = vld [vmem:[#allocation8 + $0x2c] sm:$0xf]
    %v1406 = vld [vmem:[#allocation8 + $0x30] sm:$0xf]
    %v1407 = vld [vmem:[#allocation8 + $0x34] sm:$0xf]
    %v1408 = vld [vmem:[#allocation8 + $0x38] sm:$0xf]
    %v1409 = vld [vmem:[#allocation8 + $0x3c] sm:$0xf]
    %1410 = vrot.lane.b32.xlu0 %v485, 127
    %v1411 = vpop.permute.xlu0 %1410
    %1412 = vrot.lane.b32.xlu0 %v489, 127
    %v1413 = vpop.permute.xlu0 %1412
    %1414 = vrot.lane.b32.xlu0 %v495, 127
    %v1415 = vpop.permute.xlu0 %1414
    %1416 = vrot.lane.b32.xlu0 %v499, 127
    %v1417 = vpop.permute.xlu0 %1416
    %1418 = vrot.lane.b32.xlu0 %v485, 1
    %v1419 = vpop.permute.xlu0 %1418
    %1420 = vrot.lane.b32.xlu0 %v489, 1
    %v1421 = vpop.permute.xlu0 %1420
    %1422 = vrot.lane.b32.xlu0 %v495, 1
    %v1423 = vpop.permute.xlu0 %1422
    %1424 = vrot.lane.b32.xlu0 %v499, 1
    %v1425 = vpop.permute.xlu0 %1424
    %v1426 = vmul.f32 %v485, %v119
    %v1427 = vmul.f32 %v489, %v120
    %v1428 = vmul.f32 %v495, %v121
    %v1429 = vmul.f32 %v499, %v122
    %v1430 = vmul.f32 %v1411, %v129
    %v1431 = vmul.f32 %v1413, %v130
    %v1432 = vmul.f32 %v1415, %v131
    %v1433 = vmul.f32 %v1417, %v132
    %v1434 = vadd.f32 %v1426, %v1430
    %v1435 = vadd.f32 %v1427, %v1431
    %v1436 = vadd.f32 %v1428, %v1432
    %v1437 = vadd.f32 %v1429, %v1433
    %v1438 = vmul.f32 %v1419, %v134
    %v1439 = vmul.f32 %v1421, %v135
    %v1440 = vmul.f32 %v1423, %v136
    %v1441 = vmul.f32 %v1425, %v137
    %v1442 = vadd.f32 %v1434, %v1438
    %v1443 = vadd.f32 %v1435, %v1439
    %v1444 = vadd.f32 %v1436, %v1440
    %v1445 = vadd.f32 %v1437, %v1441
    %v1446 = vpack.c.bf16 %v1443, %v1442
    %v1447 = vpack.c.bf16 %v1445, %v1444
    %v1448 = vadd.bf16 %v1159, %v703
    %v1449 = vadd.bf16 %v1167, %v704
    %1450 = vmatprep.subr.bf16.mxu0 0
    %1451 = vmatpush1.bf16.xpose.msra.mxu0 0
    %1452 = vmatprep.subr.bf16.mxu0 0
    %1453 = vmatpush1.bf16.xpose.msra.mxu0 0
    %1454 = vmatprep.subr.bf16.mxu0 0
    %1455 = vmatpush1.bf16.xpose.msra.mxu0 0
    %1456 = vmatprep.subr.bf16.mxu0 0
    %1457 = vmatpush1.bf16.xpose.msra.mxu0 0
    %1458 = vmatprep.subr.bf16.mxu0 0
    %1459 = vmatpush1.bf16.xpose.msra.mxu0 0
    %1460 = vmatprep.subr.bf16.mxu0 0
    %1461 = vmatpush1.bf16.xpose.msra.mxu0 0
    %1462 = vmatprep.subr.bf16.mxu0 0
    %1463 = vmatpush1.bf16.xpose.msra.mxu0 %v1449
    %1464 = vmatprep.subr.bf16.mxu0 0
    %1465 = vmatpush1.bf16.xpose.msra.mxu0 %v1448
    %1466 = vmatprep.subr.bf16.mxu0 0
    %1467 = vmatpush2.bf16.xpose.msra.mxu0 0
    %1468 = vmatprep.subr.bf16.mxu0 0
    %1469 = vmatpush2.bf16.xpose.msra.mxu0 0
    %1470 = vmatprep.subr.bf16.mxu0 0
    %1471 = vmatpush2.bf16.xpose.msra.mxu0 0
    %1472 = vmatprep.subr.bf16.mxu0 0
    %1473 = vmatpush2.bf16.xpose.msra.mxu0 0
    %1474 = vmatprep.subr.bf16.mxu0 0
    %1475 = vmatpush2.bf16.xpose.msra.mxu0 0
    %1476 = vmatprep.subr.bf16.mxu0 0
    %1477 = vmatpush2.bf16.xpose.msra.mxu0 0
    %1478 = vmatprep.subr.bf16.mxu0 0
    %1479 = vmatpush2.bf16.xpose.msra.mxu0 0
    %1480 = vmatprep.subr.bf16.mxu0 0
    %1481 = vmatpush2.bf16.xpose.msra.mxu0 0
    %1482 = vmatprep.mubr.bf16.mxu0 0
    %1483 = vmatmul.mubr.bf16.gmra.mxu0 %v1446
    %v1484 = vpop.f32.mrf.mxu0
    %v1485 = vadd.f32 0.0, %v1484
    %v1486 = vpop.f32.mrf.mxu0
    %v1487 = vpop.f32.mrf.mxu0
    %v1488 = vadd.f32 0.0, %v1487
    %v1489 = vpop.f32.mrf.mxu0
    %1490 = vmatprep.mubr.bf16.mxu0 0
    %1491 = vmatmul.mubr.bf16.gmra.mxu0 %v1447
    %v1492 = vpop.f32.mrf.mxu0
    %v1493 = vadd.f32 0.0, %v1492
    %v1494 = vpop.f32.mrf.mxu0
    %v1495 = vpop.f32.mrf.mxu0
    %v1496 = vadd.f32 0.0, %v1495
    %v1497 = vpop.f32.mrf.mxu0
    %1498 = vdwg.mxu0
    %v1499 = vsel %vm1193, %v1485, -1e+30
    %v1500 = vsel %vm1194, %v1488, -1e+30
    %v1501 = vsel %vm1195, %v1493, -1e+30
    %v1502 = vsel %vm1196, %v1496, -1e+30
    %v1503 = vsel %vm1290, %v1499, -inf
    %1504 = vmax.xlane.f32.xlu0 %v1503
    %v1505 = vpop.xlane.xlu0 %1504
    %v1506 = vsel %vm1290, %v1500, -inf
    %1507 = vmax.xlane.f32.xlu0 %v1506
    %v1508 = vpop.xlane.xlu0 %1507
    %v1509 = vsel %vm1290, %v1501, -inf
    %1510 = vmax.xlane.f32.xlu0 %v1509
    %v1511 = vpop.xlane.xlu0 %1510
    %v1512 = vsel %vm1290, %v1502, -inf
    %1513 = vmax.xlane.f32.xlu0 %v1512
    %v1514 = vpop.xlane.xlu0 %1513
    %v1515 = vsub.f32 %v1499, %v1505
    %v1516 = vsub.f32 %v1500, %v1508
    %v1517 = vsub.f32 %v1501, %v1511
    %v1518 = vsub.f32 %v1502, %v1514
    %v1519 = vmul.f32 %v1515, 1.442695
    %v1520 = vpow.pop %v1519
    %v1521 = vmul.f32 %v1516, 1.442695
    %v1522 = vpow.pop %v1521
    %v1523 = vmul.f32 %v1517, 1.442695
    %v1524 = vpow.pop %v1523
    %v1525 = vmul.f32 %v1518, 1.442695
    %v1526 = vpow.pop %v1525
    %v1527 = vsel %vm1290, %v1520, 0.0
    %1528 = vadd.xlane.f32.xlu0 %v1527
    %v1529 = vpop.xlane.xlu0 %1528
    %v1530 = vsel %vm1290, %v1522, 0.0
    %1531 = vadd.xlane.f32.xlu0 %v1530
    %v1532 = vpop.xlane.xlu0 %1531
    %v1533 = vsel %vm1290, %v1524, 0.0
    %1534 = vadd.xlane.f32.xlu0 %v1533
    %v1535 = vpop.xlane.xlu0 %1534
    %v1536 = vsel %vm1290, %v1526, 0.0
    %1537 = vadd.xlane.f32.xlu0 %v1536
    %v1538 = vpop.xlane.xlu0 %1537
    %v1539 = vrcp.pop %v1529
    %v1540 = vrcp.pop %v1532
    %v1541 = vrcp.pop %v1535
    %v1542 = vrcp.pop %v1538
    %v1543 = vmul.f32 %v1520, %v1539
    %v1544 = vmul.f32 %v1522, %v1540
    %v1545 = vmul.f32 %v1524, %v1541
    %v1546 = vmul.f32 %v1526, %v1542
    %v1547 = vpack.c.bf16 %v1544, %v1543
    %v1548 = vpack.c.bf16 %v1546, %v1545
    %v1550 = vsel %vm1290, %v1547, 0
    %v1553 = vsel %vm1290, %v1548, 0
    %1555 = vmatprep.subr.bf16.mxu0 0
    %1556 = vmatpush1.bf16.msra.mxu0 0
    %1557 = vmatprep.subr.bf16.mxu0 0
    %1558 = vmatpush1.bf16.msra.mxu0 0
    %1559 = vmatprep.subr.bf16.mxu0 0
    %1560 = vmatpush1.bf16.msra.mxu0 0
    %1561 = vmatprep.subr.bf16.mxu0 0
    %1562 = vmatpush1.bf16.msra.mxu0 0
    %1563 = vmatprep.subr.bf16.mxu0 0
    %1564 = vmatpush1.bf16.msra.mxu0 0
    %1565 = vmatprep.subr.bf16.mxu0 0
    %1566 = vmatpush1.bf16.msra.mxu0 0
    %1567 = vmatprep.subr.bf16.mxu0 0
    %1568 = vmatpush1.bf16.msra.mxu0 %v1168
    %1569 = vmatprep.subr.bf16.mxu0 0
    %1570 = vmatpush1.bf16.msra.mxu0 %v1160
    %1571 = vmatprep.subr.bf16.mxu0 0
    %1572 = vmatpush2.bf16.msra.mxu0 0
    %1573 = vmatprep.subr.bf16.mxu0 0
    %1574 = vmatpush2.bf16.msra.mxu0 0
    %1575 = vmatprep.subr.bf16.mxu0 0
    %1576 = vmatpush2.bf16.msra.mxu0 0
    %1577 = vmatprep.subr.bf16.mxu0 0
    %1578 = vmatpush2.bf16.msra.mxu0 0
    %1579 = vmatprep.subr.bf16.mxu0 0
    %1580 = vmatpush2.bf16.msra.mxu0 0
    %1581 = vmatprep.subr.bf16.mxu0 0
    %1582 = vmatpush2.bf16.msra.mxu0 0
    %1583 = vmatprep.subr.bf16.mxu0 0
    %1584 = vmatpush2.bf16.msra.mxu0 0
    %1585 = vmatprep.subr.bf16.mxu0 0
    %1586 = vmatpush2.bf16.msra.mxu0 0
    %1587 = vmatprep.mubr.bf16.mxu0 0
    %1588 = vmatmul.mubr.bf16.gmra.mxu0 %v1550
    %v1589 = vpop.f32.mrf.mxu0
    %v1590 = vadd.f32 0.0, %v1589
    %v1591 = vpop.f32.mrf.mxu0
    %v1592 = vpop.f32.mrf.mxu0
    %v1593 = vadd.f32 0.0, %v1592
    %v1594 = vpop.f32.mrf.mxu0
    %1595 = vmatprep.mubr.bf16.mxu0 0
    %1596 = vmatmul.mubr.bf16.gmra.mxu0 %v1553
    %v1597 = vpop.f32.mrf.mxu0
    %v1598 = vadd.f32 0.0, %v1597
    %v1599 = vpop.f32.mrf.mxu0
    %v1600 = vpop.f32.mrf.mxu0
    %v1601 = vadd.f32 0.0, %v1600
    %v1602 = vpop.f32.mrf.mxu0
    %1603 = vdwg.mxu0
    %v1604 = vpack.c.bf16 %v1593, %v1590
    %v1605 = vpack.c.bf16 %v1601, %v1598
    %v1606 = vld [vmem:[#allocation8 + $0x40] sm:$0xf]
    %v1607 = vld [vmem:[#allocation8 + $0x44] sm:$0xf]
    %v1608 = vld [vmem:[#allocation8 + $0x48] sm:$0xf]
    %v1609 = vld [vmem:[#allocation8 + $0x4c] sm:$0xf]
    %v1610 = vld [vmem:[#allocation8 + $0x50] sm:$0xf]
    %v1611 = vld [vmem:[#allocation8 + $0x54] sm:$0xf]
    %v1612 = vld [vmem:[#allocation8 + $0x58] sm:$0xf]
    %v1613 = vld [vmem:[#allocation8 + $0x5c] sm:$0xf]
    %v1614 = vld [vmem:[#allocation8 + $0x60] sm:$0xf]
    %v1615 = vld [vmem:[#allocation8 + $0x64] sm:$0xf]
    %v1616 = vld [vmem:[#allocation8 + $0x68] sm:$0xf]
    %v1617 = vld [vmem:[#allocation8 + $0x6c] sm:$0xf]
    %v1618 = vld [vmem:[#allocation8 + $0x70] sm:$0xf]
    %v1619 = vld [vmem:[#allocation8 + $0x74] sm:$0xf]
    %v1620 = vld [vmem:[#allocation8 + $0x78] sm:$0xf]
    %v1621 = vld [vmem:[#allocation8 + $0x7c] sm:$0xf]
    %v1638 = vunpack.c.l.b16 %v1606
    %v1639 = vunpack.c.l.b16 %v1607
    %v1640 = vunpack.c.l.b16 %v1608
    %v1641 = vunpack.c.l.b16 %v1609
    %v1642 = vunpack.c.l.b16 %v1610
    %v1643 = vunpack.c.l.b16 %v1611
    %v1644 = vunpack.c.l.b16 %v1612
    %v1645 = vunpack.c.l.b16 %v1613
    %v1646 = vunpack.c.l.b16 %v1614
    %v1647 = vunpack.c.l.b16 %v1615
    %v1648 = vunpack.c.l.b16 %v1616
    %v1649 = vunpack.c.l.b16 %v1617
    %v1650 = vunpack.c.l.b16 %v1618
    %v1651 = vunpack.c.l.b16 %v1619
    %v1652 = vunpack.c.l.b16 %v1620
    %v1653 = vunpack.c.l.b16 %v1621
    %v1654 = vpack.c.b16 %v1639, %v1638
    %v1655 = vpack.c.b16 %v1641, %v1640
    %v1656 = vpack.c.b16 %v1643, %v1642
    %v1657 = vpack.c.b16 %v1645, %v1644
    %v1658 = vpack.c.b16 %v1647, %v1646
    %v1659 = vpack.c.b16 %v1649, %v1648
    %v1660 = vpack.c.b16 %v1651, %v1650
    %v1661 = vpack.c.b16 %v1653, %v1652
    %1670 = vmatprep.subr.bf16.mxu0 0
    %1671 = vmatpush1.bf16.msra.mxu0 %v1661
    %1672 = vmatprep.subr.bf16.mxu0 0
    %1673 = vmatpush1.bf16.msra.mxu0 %v1660
    %1674 = vmatprep.subr.bf16.mxu0 0
    %1675 = vmatpush1.bf16.msra.mxu0 %v1659
    %1676 = vmatprep.subr.bf16.mxu0 0
    %1677 = vmatpush1.bf16.msra.mxu0 %v1658
    %1678 = vmatprep.subr.bf16.mxu0 0
    %1679 = vmatpush1.bf16.msra.mxu0 %v1657
    %1680 = vmatprep.subr.bf16.mxu0 0
    %1681 = vmatpush1.bf16.msra.mxu0 %v1656
    %1682 = vmatprep.subr.bf16.mxu0 0
    %1683 = vmatpush1.bf16.msra.mxu0 %v1655
    %1684 = vmatprep.subr.bf16.mxu0 0
    %1685 = vmatpush1.bf16.msra.mxu0 %v1654
    %1686 = vmatprep.subr.bf16.mxu0 0
    %1687 = vmatpush2.bf16.msra.mxu0 0
    %1688 = vmatprep.subr.bf16.mxu0 0
    %1689 = vmatpush2.bf16.msra.mxu0 0
    %1690 = vmatprep.subr.bf16.mxu0 0
    %1691 = vmatpush2.bf16.msra.mxu0 0
    %1692 = vmatprep.subr.bf16.mxu0 0
    %1693 = vmatpush2.bf16.msra.mxu0 0
    %1694 = vmatprep.subr.bf16.mxu0 0
    %1695 = vmatpush2.bf16.msra.mxu0 0
    %1696 = vmatprep.subr.bf16.mxu0 0
    %1697 = vmatpush2.bf16.msra.mxu0 0
    %1698 = vmatprep.subr.bf16.mxu0 0
    %1699 = vmatpush2.bf16.msra.mxu0 0
    %1700 = vmatprep.subr.bf16.mxu0 0
    %1701 = vmatpush2.bf16.msra.mxu0 0
    %1702 = vmatprep.mubr.bf16.mxu0 0
    %1703 = vmatmul.mubr.bf16.gmra.mxu0 %v1604
    %v1704 = vpop.f32.mrf.mxu0
    %v1705 = vadd.f32 0.0, %v1704
    %v1706 = vpop.f32.mrf.mxu0
    %v1707 = vpop.f32.mrf.mxu0
    %v1708 = vadd.f32 0.0, %v1707
    %v1709 = vpop.f32.mrf.mxu0
    %1710 = vmatprep.mubr.bf16.mxu0 0
    %1711 = vmatmul.mubr.bf16.gmra.mxu0 %v1605
    %v1712 = vpop.f32.mrf.mxu0
    %v1713 = vadd.f32 0.0, %v1712
    %v1714 = vpop.f32.mrf.mxu0
    %v1715 = vpop.f32.mrf.mxu0
    %v1716 = vadd.f32 0.0, %v1715
    %v1717 = vpop.f32.mrf.mxu0
    %1718 = vdwg.mxu0
    %v1735 = vunpack.c.l.b16 %v1394
    %v1736 = vunpack.c.l.b16 %v1395
    %v1737 = vunpack.c.l.b16 %v1396
    %v1738 = vunpack.c.l.b16 %v1397
    %v1739 = vunpack.c.l.b16 %v1398
    %v1740 = vunpack.c.l.b16 %v1399
    %v1741 = vunpack.c.l.b16 %v1400
    %v1742 = vunpack.c.l.b16 %v1401
    %v1743 = vunpack.c.l.b16 %v1402
    %v1744 = vunpack.c.l.b16 %v1403
    %v1745 = vunpack.c.l.b16 %v1404
    %v1746 = vunpack.c.l.b16 %v1405
    %v1747 = vunpack.c.l.b16 %v1406
    %v1748 = vunpack.c.l.b16 %v1407
    %v1749 = vunpack.c.l.b16 %v1408
    %v1750 = vunpack.c.l.b16 %v1409
    %v1751 = vpack.c.b16 %v1736, %v1735
    %v1752 = vpack.c.b16 %v1738, %v1737
    %v1753 = vpack.c.b16 %v1740, %v1739
    %v1754 = vpack.c.b16 %v1742, %v1741
    %v1755 = vpack.c.b16 %v1744, %v1743
    %v1756 = vpack.c.b16 %v1746, %v1745
    %v1757 = vpack.c.b16 %v1748, %v1747
    %v1758 = vpack.c.b16 %v1750, %v1749
    %1767 = vmatprep.subr.bf16.mxu0 0
    %1768 = vmatpush1.bf16.msra.mxu0 %v1758
    %1769 = vmatprep.subr.bf16.mxu0 0
    %1770 = vmatpush1.bf16.msra.mxu0 %v1757
    %1771 = vmatprep.subr.bf16.mxu0 0
    %1772 = vmatpush1.bf16.msra.mxu0 %v1756
    %1773 = vmatprep.subr.bf16.mxu0 0
    %1774 = vmatpush1.bf16.msra.mxu0 %v1755
    %1775 = vmatprep.subr.bf16.mxu0 0
    %1776 = vmatpush1.bf16.msra.mxu0 %v1754
    %1777 = vmatprep.subr.bf16.mxu0 0
    %1778 = vmatpush1.bf16.msra.mxu0 %v1753
    %1779 = vmatprep.subr.bf16.mxu0 0
    %1780 = vmatpush1.bf16.msra.mxu0 %v1752
    %1781 = vmatprep.subr.bf16.mxu0 0
    %1782 = vmatpush1.bf16.msra.mxu0 %v1751
    %1783 = vmatprep.subr.bf16.mxu0 0
    %1784 = vmatpush2.bf16.msra.mxu0 0
    %1785 = vmatprep.subr.bf16.mxu0 0
    %1786 = vmatpush2.bf16.msra.mxu0 0
    %1787 = vmatprep.subr.bf16.mxu0 0
    %1788 = vmatpush2.bf16.msra.mxu0 0
    %1789 = vmatprep.subr.bf16.mxu0 0
    %1790 = vmatpush2.bf16.msra.mxu0 0
    %1791 = vmatprep.subr.bf16.mxu0 0
    %1792 = vmatpush2.bf16.msra.mxu0 0
    %1793 = vmatprep.subr.bf16.mxu0 0
    %1794 = vmatpush2.bf16.msra.mxu0 0
    %1795 = vmatprep.subr.bf16.mxu0 0
    %1796 = vmatpush2.bf16.msra.mxu0 0
    %1797 = vmatprep.subr.bf16.mxu0 0
    %1798 = vmatpush2.bf16.msra.mxu0 0
    %1799 = vmatprep.mubr.bf16.mxu0 0
    %1800 = vmatmul.mubr.bf16.gmra.mxu0 %v1392
    %v1801 = vpop.f32.mrf.mxu0
    %v1802 = vadd.f32 %v1705, %v1801
    %v1803 = vpop.f32.mrf.mxu0
    %v1804 = vpop.f32.mrf.mxu0
    %v1805 = vadd.f32 %v1708, %v1804
    %v1806 = vpop.f32.mrf.mxu0
    %1807 = vmatprep.mubr.bf16.mxu0 0
    %1808 = vmatmul.mubr.bf16.gmra.mxu0 %v1393
    %v1809 = vpop.f32.mrf.mxu0
    %v1810 = vadd.f32 %v1713, %v1809
    %v1811 = vpop.f32.mrf.mxu0
    %v1812 = vpop.f32.mrf.mxu0
    %v1813 = vadd.f32 %v1716, %v1812
    %v1814 = vpop.f32.mrf.mxu0
    %1815 = vdwg.mxu0
    %1816 = vrot.lane.b32.xlu0 %v536, 127
    %v1817 = vpop.permute.xlu0 %1816
    %1818 = vrot.lane.b32.xlu0 %v540, 127
    %v1819 = vpop.permute.xlu0 %1818
    %1820 = vrot.lane.b32.xlu0 %v546, 127
    %v1821 = vpop.permute.xlu0 %1820
    %1822 = vrot.lane.b32.xlu0 %v550, 127
    %v1823 = vpop.permute.xlu0 %1822
    %1824 = vrot.lane.b32.xlu0 %v536, 1
    %v1825 = vpop.permute.xlu0 %1824
    %1826 = vrot.lane.b32.xlu0 %v540, 1
    %v1827 = vpop.permute.xlu0 %1826
    %1828 = vrot.lane.b32.xlu0 %v546, 1
    %v1829 = vpop.permute.xlu0 %1828
    %1830 = vrot.lane.b32.xlu0 %v550, 1
    %v1831 = vpop.permute.xlu0 %1830
    %v1832 = vmul.f32 %v536, %v119
    %v1833 = vmul.f32 %v540, %v120
    %v1834 = vmul.f32 %v546, %v121
    %v1835 = vmul.f32 %v550, %v122
    %v1836 = vmul.f32 %v1817, %v129
    %v1837 = vmul.f32 %v1819, %v130
    %v1838 = vmul.f32 %v1821, %v131
    %v1839 = vmul.f32 %v1823, %v132
    %v1840 = vadd.f32 %v1832, %v1836
    %v1841 = vadd.f32 %v1833, %v1837
    %v1842 = vadd.f32 %v1834, %v1838
    %v1843 = vadd.f32 %v1835, %v1839
    %v1844 = vmul.f32 %v1825, %v134
    %v1845 = vmul.f32 %v1827, %v135
    %v1846 = vmul.f32 %v1829, %v136
    %v1847 = vmul.f32 %v1831, %v137
    %v1848 = vadd.f32 %v1840, %v1844
    %v1849 = vadd.f32 %v1841, %v1845
    %v1850 = vadd.f32 %v1842, %v1846
    %v1851 = vadd.f32 %v1843, %v1847
    %v1852 = vpack.c.bf16 %v1849, %v1848
    %v1853 = vpack.c.bf16 %v1851, %v1850
    %v1854 = vadd.bf16 %v1161, %v703
    %v1855 = vadd.bf16 %v1169, %v704
    %1856 = vmatprep.subr.bf16.mxu0 0
    %1857 = vmatpush1.bf16.xpose.msra.mxu0 0
    %1858 = vmatprep.subr.bf16.mxu0 0
    %1859 = vmatpush1.bf16.xpose.msra.mxu0 0
    %1860 = vmatprep.subr.bf16.mxu0 0
    %1861 = vmatpush1.bf16.xpose.msra.mxu0 0
    %1862 = vmatprep.subr.bf16.mxu0 0
    %1863 = vmatpush1.bf16.xpose.msra.mxu0 0
    %1864 = vmatprep.subr.bf16.mxu0 0
    %1865 = vmatpush1.bf16.xpose.msra.mxu0 0
    %1866 = vmatprep.subr.bf16.mxu0 0
    %1867 = vmatpush1.bf16.xpose.msra.mxu0 0
    %1868 = vmatprep.subr.bf16.mxu0 0
    %1869 = vmatpush1.bf16.xpose.msra.mxu0 %v1855
    %1870 = vmatprep.subr.bf16.mxu0 0
    %1871 = vmatpush1.bf16.xpose.msra.mxu0 %v1854
    %1872 = vmatprep.subr.bf16.mxu0 0
    %1873 = vmatpush2.bf16.xpose.msra.mxu0 0
    %1874 = vmatprep.subr.bf16.mxu0 0
    %1875 = vmatpush2.bf16.xpose.msra.mxu0 0
    %1876 = vmatprep.subr.bf16.mxu0 0
    %1877 = vmatpush2.bf16.xpose.msra.mxu0 0
    %1878 = vmatprep.subr.bf16.mxu0 0
    %1879 = vmatpush2.bf16.xpose.msra.mxu0 0
    %1880 = vmatprep.subr.bf16.mxu0 0
    %1881 = vmatpush2.bf16.xpose.msra.mxu0 0
    %1882 = vmatprep.subr.bf16.mxu0 0
    %1883 = vmatpush2.bf16.xpose.msra.mxu0 0
    %1884 = vmatprep.subr.bf16.mxu0 0
    %1885 = vmatpush2.bf16.xpose.msra.mxu0 0
    %1886 = vmatprep.subr.bf16.mxu0 0
    %1887 = vmatpush2.bf16.xpose.msra.mxu0 0
    %1888 = vmatprep.mubr.bf16.mxu0 0
    %1889 = vmatmul.mubr.bf16.gmra.mxu0 %v1852
    %v1890 = vpop.f32.mrf.mxu0
    %v1891 = vadd.f32 0.0, %v1890
    %v1892 = vpop.f32.mrf.mxu0
    %v1893 = vpop.f32.mrf.mxu0
    %v1894 = vadd.f32 0.0, %v1893
    %v1895 = vpop.f32.mrf.mxu0
    %1896 = vmatprep.mubr.bf16.mxu0 0
    %1897 = vmatmul.mubr.bf16.gmra.mxu0 %v1853
    %v1898 = vpop.f32.mrf.mxu0
    %v1899 = vadd.f32 0.0, %v1898
    %v1900 = vpop.f32.mrf.mxu0
    %v1901 = vpop.f32.mrf.mxu0
    %v1902 = vadd.f32 0.0, %v1901
    %v1903 = vpop.f32.mrf.mxu0
    %1904 = vdwg.mxu0
    %v1905 = vsel %vm1193, %v1891, -1e+30
    %v1906 = vsel %vm1194, %v1894, -1e+30
    %v1907 = vsel %vm1195, %v1899, -1e+30
    %v1908 = vsel %vm1196, %v1902, -1e+30
    %v1909 = vsel %vm1290, %v1905, -inf
    %1910 = vmax.xlane.f32.xlu0 %v1909
    %v1911 = vpop.xlane.xlu0 %1910
    %v1912 = vsel %vm1290, %v1906, -inf
    %1913 = vmax.xlane.f32.xlu0 %v1912
    %v1914 = vpop.xlane.xlu0 %1913
    %v1915 = vsel %vm1290, %v1907, -inf
    %1916 = vmax.xlane.f32.xlu0 %v1915
    %v1917 = vpop.xlane.xlu0 %1916
    %v1918 = vsel %vm1290, %v1908, -inf
    %1919 = vmax.xlane.f32.xlu0 %v1918
    %v1920 = vpop.xlane.xlu0 %1919
    %v1921 = vsub.f32 %v1905, %v1911
    %v1922 = vsub.f32 %v1906, %v1914
    %v1923 = vsub.f32 %v1907, %v1917
    %v1924 = vsub.f32 %v1908, %v1920
    %v1925 = vmul.f32 %v1921, 1.442695
    %v1926 = vpow.pop %v1925
    %v1927 = vmul.f32 %v1922, 1.442695
    %v1928 = vpow.pop %v1927
    %v1929 = vmul.f32 %v1923, 1.442695
    %v1930 = vpow.pop %v1929
    %v1931 = vmul.f32 %v1924, 1.442695
    %v1932 = vpow.pop %v1931
    %v1933 = vsel %vm1290, %v1926, 0.0
    %1934 = vadd.xlane.f32.xlu0 %v1933
    %v1935 = vpop.xlane.xlu0 %1934
    %v1936 = vsel %vm1290, %v1928, 0.0
    %1937 = vadd.xlane.f32.xlu0 %v1936
    %v1938 = vpop.xlane.xlu0 %1937
    %v1939 = vsel %vm1290, %v1930, 0.0
    %1940 = vadd.xlane.f32.xlu0 %v1939
    %v1941 = vpop.xlane.xlu0 %1940
    %v1942 = vsel %vm1290, %v1932, 0.0
    %1943 = vadd.xlane.f32.xlu0 %v1942
    %v1944 = vpop.xlane.xlu0 %1943
    %v1945 = vrcp.pop %v1935
    %v1946 = vrcp.pop %v1938
    %v1947 = vrcp.pop %v1941
    %v1948 = vrcp.pop %v1944
    %v1949 = vmul.f32 %v1926, %v1945
    %v1950 = vmul.f32 %v1928, %v1946
    %v1951 = vmul.f32 %v1930, %v1947
    %v1952 = vmul.f32 %v1932, %v1948
    %v1953 = vpack.c.bf16 %v1950, %v1949
    %v1954 = vpack.c.bf16 %v1952, %v1951
    %v1956 = vsel %vm1290, %v1953, 0
    %v1959 = vsel %vm1290, %v1954, 0
    %1961 = vmatprep.subr.bf16.mxu0 0
    %1962 = vmatpush1.bf16.msra.mxu0 0
    %1963 = vmatprep.subr.bf16.mxu0 0
    %1964 = vmatpush1.bf16.msra.mxu0 0
    %1965 = vmatprep.subr.bf16.mxu0 0
    %1966 = vmatpush1.bf16.msra.mxu0 0
    %1967 = vmatprep.subr.bf16.mxu0 0
    %1968 = vmatpush1.bf16.msra.mxu0 0
    %1969 = vmatprep.subr.bf16.mxu0 0
    %1970 = vmatpush1.bf16.msra.mxu0 0
    %1971 = vmatprep.subr.bf16.mxu0 0
    %1972 = vmatpush1.bf16.msra.mxu0 0
    %1973 = vmatprep.subr.bf16.mxu0 0
    %1974 = vmatpush1.bf16.msra.mxu0 %v1170
    %1975 = vmatprep.subr.bf16.mxu0 0
    %1976 = vmatpush1.bf16.msra.mxu0 %v1162
    %1977 = vmatprep.subr.bf16.mxu0 0
    %1978 = vmatpush2.bf16.msra.mxu0 0
    %1979 = vmatprep.subr.bf16.mxu0 0
    %1980 = vmatpush2.bf16.msra.mxu0 0
    %1981 = vmatprep.subr.bf16.mxu0 0
    %1982 = vmatpush2.bf16.msra.mxu0 0
    %1983 = vmatprep.subr.bf16.mxu0 0
    %1984 = vmatpush2.bf16.msra.mxu0 0
    %1985 = vmatprep.subr.bf16.mxu0 0
    %1986 = vmatpush2.bf16.msra.mxu0 0
    %1987 = vmatprep.subr.bf16.mxu0 0
    %1988 = vmatpush2.bf16.msra.mxu0 0
    %1989 = vmatprep.subr.bf16.mxu0 0
    %1990 = vmatpush2.bf16.msra.mxu0 0
    %1991 = vmatprep.subr.bf16.mxu0 0
    %1992 = vmatpush2.bf16.msra.mxu0 0
    %1993 = vmatprep.mubr.bf16.mxu0 0
    %1994 = vmatmul.mubr.bf16.gmra.mxu0 %v1956
    %v1995 = vpop.f32.mrf.mxu0
    %v1996 = vadd.f32 0.0, %v1995
    %v1997 = vpop.f32.mrf.mxu0
    %v1998 = vpop.f32.mrf.mxu0
    %v1999 = vadd.f32 0.0, %v1998
    %v2000 = vpop.f32.mrf.mxu0
    %2001 = vmatprep.mubr.bf16.mxu0 0
    %2002 = vmatmul.mubr.bf16.gmra.mxu0 %v1959
    %v2003 = vpop.f32.mrf.mxu0
    %v2004 = vadd.f32 0.0, %v2003
    %v2005 = vpop.f32.mrf.mxu0
    %v2006 = vpop.f32.mrf.mxu0
    %v2007 = vadd.f32 0.0, %v2006
    %v2008 = vpop.f32.mrf.mxu0
    %2009 = vdwg.mxu0
    %v2010 = vpack.c.bf16 %v1999, %v1996
    %v2011 = vpack.c.bf16 %v2007, %v2004
    %v2012 = vld [vmem:[#allocation8 + $0x80] sm:$0xf]
    %v2013 = vld [vmem:[#allocation8 + $0x84] sm:$0xf]
    %v2014 = vld [vmem:[#allocation8 + $0x88] sm:$0xf]
    %v2015 = vld [vmem:[#allocation8 + $0x8c] sm:$0xf]
    %v2016 = vld [vmem:[#allocation8 + $0x90] sm:$0xf]
    %v2017 = vld [vmem:[#allocation8 + $0x94] sm:$0xf]
    %v2018 = vld [vmem:[#allocation8 + $0x98] sm:$0xf]
    %v2019 = vld [vmem:[#allocation8 + $0x9c] sm:$0xf]
    %v2020 = vld [vmem:[#allocation8 + $0xa0] sm:$0xf]
    %v2021 = vld [vmem:[#allocation8 + $0xa4] sm:$0xf]
    %v2022 = vld [vmem:[#allocation8 + $0xa8] sm:$0xf]
    %v2023 = vld [vmem:[#allocation8 + $0xac] sm:$0xf]
    %v2024 = vld [vmem:[#allocation8 + $0xb0] sm:$0xf]
    %v2025 = vld [vmem:[#allocation8 + $0xb4] sm:$0xf]
    %v2026 = vld [vmem:[#allocation8 + $0xb8] sm:$0xf]
    %v2027 = vld [vmem:[#allocation8 + $0xbc] sm:$0xf]
    %v2044 = vunpack.c.l.b16 %v2012
    %v2045 = vunpack.c.l.b16 %v2013
    %v2046 = vunpack.c.l.b16 %v2014
    %v2047 = vunpack.c.l.b16 %v2015
    %v2048 = vunpack.c.l.b16 %v2016
    %v2049 = vunpack.c.l.b16 %v2017
    %v2050 = vunpack.c.l.b16 %v2018
    %v2051 = vunpack.c.l.b16 %v2019
    %v2052 = vunpack.c.l.b16 %v2020
    %v2053 = vunpack.c.l.b16 %v2021
    %v2054 = vunpack.c.l.b16 %v2022
    %v2055 = vunpack.c.l.b16 %v2023
    %v2056 = vunpack.c.l.b16 %v2024
    %v2057 = vunpack.c.l.b16 %v2025
    %v2058 = vunpack.c.l.b16 %v2026
    %v2059 = vunpack.c.l.b16 %v2027
    %v2060 = vpack.c.b16 %v2045, %v2044
    %v2061 = vpack.c.b16 %v2047, %v2046
    %v2062 = vpack.c.b16 %v2049, %v2048
    %v2063 = vpack.c.b16 %v2051, %v2050
    %v2064 = vpack.c.b16 %v2053, %v2052
    %v2065 = vpack.c.b16 %v2055, %v2054
    %v2066 = vpack.c.b16 %v2057, %v2056
    %v2067 = vpack.c.b16 %v2059, %v2058
    %2076 = vmatprep.subr.bf16.mxu0 0
    %2077 = vmatpush1.bf16.msra.mxu0 %v2067
    %2078 = vmatprep.subr.bf16.mxu0 0
    %2079 = vmatpush1.bf16.msra.mxu0 %v2066
    %2080 = vmatprep.subr.bf16.mxu0 0
    %2081 = vmatpush1.bf16.msra.mxu0 %v2065
    %2082 = vmatprep.subr.bf16.mxu0 0
    %2083 = vmatpush1.bf16.msra.mxu0 %v2064
    %2084 = vmatprep.subr.bf16.mxu0 0
    %2085 = vmatpush1.bf16.msra.mxu0 %v2063
    %2086 = vmatprep.subr.bf16.mxu0 0
    %2087 = vmatpush1.bf16.msra.mxu0 %v2062
    %2088 = vmatprep.subr.bf16.mxu0 0
    %2089 = vmatpush1.bf16.msra.mxu0 %v2061
    %2090 = vmatprep.subr.bf16.mxu0 0
    %2091 = vmatpush1.bf16.msra.mxu0 %v2060
    %2092 = vmatprep.subr.bf16.mxu0 0
    %2093 = vmatpush2.bf16.msra.mxu0 0
    %2094 = vmatprep.subr.bf16.mxu0 0
    %2095 = vmatpush2.bf16.msra.mxu0 0
    %2096 = vmatprep.subr.bf16.mxu0 0
    %2097 = vmatpush2.bf16.msra.mxu0 0
    %2098 = vmatprep.subr.bf16.mxu0 0
    %2099 = vmatpush2.bf16.msra.mxu0 0
    %2100 = vmatprep.subr.bf16.mxu0 0
    %2101 = vmatpush2.bf16.msra.mxu0 0
    %2102 = vmatprep.subr.bf16.mxu0 0
    %2103 = vmatpush2.bf16.msra.mxu0 0
    %2104 = vmatprep.subr.bf16.mxu0 0
    %2105 = vmatpush2.bf16.msra.mxu0 0
    %2106 = vmatprep.subr.bf16.mxu0 0
    %2107 = vmatpush2.bf16.msra.mxu0 0
    %2108 = vmatprep.mubr.bf16.mxu0 0
    %2109 = vmatmul.mubr.bf16.gmra.mxu0 %v2010
    %v2110 = vpop.f32.mrf.mxu0
    %v2111 = vadd.f32 0.0, %v2110
    %v2112 = vpop.f32.mrf.mxu0
    %v2113 = vpop.f32.mrf.mxu0
    %v2114 = vadd.f32 0.0, %v2113
    %v2115 = vpop.f32.mrf.mxu0
    %2116 = vmatprep.mubr.bf16.mxu0 0
    %2117 = vmatmul.mubr.bf16.gmra.mxu0 %v2011
    %v2118 = vpop.f32.mrf.mxu0
    %v2119 = vadd.f32 0.0, %v2118
    %v2120 = vpop.f32.mrf.mxu0
    %v2121 = vpop.f32.mrf.mxu0
    %v2122 = vadd.f32 0.0, %v2121
    %v2123 = vpop.f32.mrf.mxu0
    %2124 = vdwg.mxu0
    %v2125 = vadd.f32 %v1802, %v2111
    %v2126 = vadd.f32 %v1805, %v2114
    %v2127 = vadd.f32 %v1810, %v2119
    %v2128 = vadd.f32 %v1813, %v2122
    %2129 = vrot.lane.b32.xlu0 %v538, 127
    %v2130 = vpop.permute.xlu0 %2129
    %2131 = vrot.lane.b32.xlu0 %v542, 127
    %v2132 = vpop.permute.xlu0 %2131
    %2133 = vrot.lane.b32.xlu0 %v548, 127
    %v2134 = vpop.permute.xlu0 %2133
    %2135 = vrot.lane.b32.xlu0 %v552, 127
    %v2136 = vpop.permute.xlu0 %2135
    %2137 = vrot.lane.b32.xlu0 %v538, 1
    %v2138 = vpop.permute.xlu0 %2137
    %2139 = vrot.lane.b32.xlu0 %v542, 1
    %v2140 = vpop.permute.xlu0 %2139
    %2141 = vrot.lane.b32.xlu0 %v548, 1
    %v2142 = vpop.permute.xlu0 %2141
    %2143 = vrot.lane.b32.xlu0 %v552, 1
    %v2144 = vpop.permute.xlu0 %2143
    %v2145 = vmul.f32 %v538, %v119
    %v2146 = vmul.f32 %v542, %v120
    %v2147 = vmul.f32 %v548, %v121
    %v2148 = vmul.f32 %v552, %v122
    %v2149 = vmul.f32 %v2130, %v129
    %v2150 = vmul.f32 %v2132, %v130
    %v2151 = vmul.f32 %v2134, %v131
    %v2152 = vmul.f32 %v2136, %v132
    %v2153 = vadd.f32 %v2145, %v2149
    %v2154 = vadd.f32 %v2146, %v2150
    %v2155 = vadd.f32 %v2147, %v2151
    %v2156 = vadd.f32 %v2148, %v2152
    %v2157 = vmul.f32 %v2138, %v134
    %v2158 = vmul.f32 %v2140, %v135
    %v2159 = vmul.f32 %v2142, %v136
    %v2160 = vmul.f32 %v2144, %v137
    %v2161 = vadd.f32 %v2153, %v2157
    %v2162 = vadd.f32 %v2154, %v2158
    %v2163 = vadd.f32 %v2155, %v2159
    %v2164 = vadd.f32 %v2156, %v2160
    %v2165 = vpack.c.bf16 %v2162, %v2161
    %v2166 = vpack.c.bf16 %v2164, %v2163
    %v2167 = vadd.bf16 %v1163, %v703
    %v2168 = vadd.bf16 %v1171, %v704
    %2169 = vmatprep.subr.bf16.mxu0 0
    %2170 = vmatpush1.bf16.xpose.msra.mxu0 0
    %2171 = vmatprep.subr.bf16.mxu0 0
    %2172 = vmatpush1.bf16.xpose.msra.mxu0 0
    %2173 = vmatprep.subr.bf16.mxu0 0
    %2174 = vmatpush1.bf16.xpose.msra.mxu0 0
    %2175 = vmatprep.subr.bf16.mxu0 0
    %2176 = vmatpush1.bf16.xpose.msra.mxu0 0
    %2177 = vmatprep.subr.bf16.mxu0 0
    %2178 = vmatpush1.bf16.xpose.msra.mxu0 0
    %2179 = vmatprep.subr.bf16.mxu0 0
    %2180 = vmatpush1.bf16.xpose.msra.mxu0 0
    %2181 = vmatprep.subr.bf16.mxu0 0
    %2182 = vmatpush1.bf16.xpose.msra.mxu0 %v2168
    %2183 = vmatprep.subr.bf16.mxu0 0
    %2184 = vmatpush1.bf16.xpose.msra.mxu0 %v2167
    %2185 = vmatprep.subr.bf16.mxu0 0
    %2186 = vmatpush2.bf16.xpose.msra.mxu0 0
    %2187 = vmatprep.subr.bf16.mxu0 0
    %2188 = vmatpush2.bf16.xpose.msra.mxu0 0
    %2189 = vmatprep.subr.bf16.mxu0 0
    %2190 = vmatpush2.bf16.xpose.msra.mxu0 0
    %2191 = vmatprep.subr.bf16.mxu0 0
    %2192 = vmatpush2.bf16.xpose.msra.mxu0 0
    %2193 = vmatprep.subr.bf16.mxu0 0
    %2194 = vmatpush2.bf16.xpose.msra.mxu0 0
    %2195 = vmatprep.subr.bf16.mxu0 0
    %2196 = vmatpush2.bf16.xpose.msra.mxu0 0
    %2197 = vmatprep.subr.bf16.mxu0 0
    %2198 = vmatpush2.bf16.xpose.msra.mxu0 0
    %2199 = vmatprep.subr.bf16.mxu0 0
    %2200 = vmatpush2.bf16.xpose.msra.mxu0 0
    %2201 = vmatprep.mubr.bf16.mxu0 0
    %2202 = vmatmul.mubr.bf16.gmra.mxu0 %v2165
    %v2203 = vpop.f32.mrf.mxu0
    %v2204 = vadd.f32 0.0, %v2203
    %v2205 = vpop.f32.mrf.mxu0
    %v2206 = vpop.f32.mrf.mxu0
    %v2207 = vadd.f32 0.0, %v2206
    %v2208 = vpop.f32.mrf.mxu0
    %2209 = vmatprep.mubr.bf16.mxu0 0
    %2210 = vmatmul.mubr.bf16.gmra.mxu0 %v2166
    %v2211 = vpop.f32.mrf.mxu0
    %v2212 = vadd.f32 0.0, %v2211
    %v2213 = vpop.f32.mrf.mxu0
    %v2214 = vpop.f32.mrf.mxu0
    %v2215 = vadd.f32 0.0, %v2214
    %v2216 = vpop.f32.mrf.mxu0
    %2217 = vdwg.mxu0
    %v2218 = vsel %vm1193, %v2204, -1e+30
    %v2219 = vsel %vm1194, %v2207, -1e+30
    %v2220 = vsel %vm1195, %v2212, -1e+30
    %v2221 = vsel %vm1196, %v2215, -1e+30
    %v2222 = vsel %vm1290, %v2218, -inf
    %2223 = vmax.xlane.f32.xlu0 %v2222
    %v2224 = vpop.xlane.xlu0 %2223
    %v2225 = vsel %vm1290, %v2219, -inf
    %2226 = vmax.xlane.f32.xlu0 %v2225
    %v2227 = vpop.xlane.xlu0 %2226
    %v2228 = vsel %vm1290, %v2220, -inf
    %2229 = vmax.xlane.f32.xlu0 %v2228
    %v2230 = vpop.xlane.xlu0 %2229
    %v2231 = vsel %vm1290, %v2221, -inf
    %2232 = vmax.xlane.f32.xlu0 %v2231
    %v2233 = vpop.xlane.xlu0 %2232
    %v2234 = vsub.f32 %v2218, %v2224
    %v2235 = vsub.f32 %v2219, %v2227
    %v2236 = vsub.f32 %v2220, %v2230
    %v2237 = vsub.f32 %v2221, %v2233
    %v2238 = vmul.f32 %v2234, 1.442695
    %v2239 = vpow.pop %v2238
    %v2240 = vmul.f32 %v2235, 1.442695
    %v2241 = vpow.pop %v2240
    %v2242 = vmul.f32 %v2236, 1.442695
    %v2243 = vpow.pop %v2242
    %v2244 = vmul.f32 %v2237, 1.442695
    %v2245 = vpow.pop %v2244
    %v2246 = vsel %vm1290, %v2239, 0.0
    %2247 = vadd.xlane.f32.xlu0 %v2246
    %v2248 = vpop.xlane.xlu0 %2247
    %v2249 = vsel %vm1290, %v2241, 0.0
    %2250 = vadd.xlane.f32.xlu0 %v2249
    %v2251 = vpop.xlane.xlu0 %2250
    %v2252 = vsel %vm1290, %v2243, 0.0
    %2253 = vadd.xlane.f32.xlu0 %v2252
    %v2254 = vpop.xlane.xlu0 %2253
    %v2255 = vsel %vm1290, %v2245, 0.0
    %2256 = vadd.xlane.f32.xlu0 %v2255
    %v2257 = vpop.xlane.xlu0 %2256
    %v2258 = vrcp.pop %v2248
    %v2259 = vrcp.pop %v2251
    %v2260 = vrcp.pop %v2254
    %v2261 = vrcp.pop %v2257
    %v2262 = vmul.f32 %v2239, %v2258
    %v2263 = vmul.f32 %v2241, %v2259
    %v2264 = vmul.f32 %v2243, %v2260
    %v2265 = vmul.f32 %v2245, %v2261
    %v2266 = vpack.c.bf16 %v2263, %v2262
    %v2267 = vpack.c.bf16 %v2265, %v2264
    %v2269 = vsel %vm1290, %v2266, 0
    %v2272 = vsel %vm1290, %v2267, 0
    %2274 = vmatprep.subr.bf16.mxu0 0
    %2275 = vmatpush1.bf16.msra.mxu0 0
    %2276 = vmatprep.subr.bf16.mxu0 0
    %2277 = vmatpush1.bf16.msra.mxu0 0
    %2278 = vmatprep.subr.bf16.mxu0 0
    %2279 = vmatpush1.bf16.msra.mxu0 0
    %2280 = vmatprep.subr.bf16.mxu0 0
    %2281 = vmatpush1.bf16.msra.mxu0 0
    %2282 = vmatprep.subr.bf16.mxu0 0
    %2283 = vmatpush1.bf16.msra.mxu0 0
    %2284 = vmatprep.subr.bf16.mxu0 0
    %2285 = vmatpush1.bf16.msra.mxu0 0
    %2286 = vmatprep.subr.bf16.mxu0 0
    %2287 = vmatpush1.bf16.msra.mxu0 %v1172
    %2288 = vmatprep.subr.bf16.mxu0 0
    %2289 = vmatpush1.bf16.msra.mxu0 %v1164
    %2290 = vmatprep.subr.bf16.mxu0 0
    %2291 = vmatpush2.bf16.msra.mxu0 0
    %2292 = vmatprep.subr.bf16.mxu0 0
    %2293 = vmatpush2.bf16.msra.mxu0 0
    %2294 = vmatprep.subr.bf16.mxu0 0
    %2295 = vmatpush2.bf16.msra.mxu0 0
    %2296 = vmatprep.subr.bf16.mxu0 0
    %2297 = vmatpush2.bf16.msra.mxu0 0
    %2298 = vmatprep.subr.bf16.mxu0 0
    %2299 = vmatpush2.bf16.msra.mxu0 0
    %2300 = vmatprep.subr.bf16.mxu0 0
    %2301 = vmatpush2.bf16.msra.mxu0 0
    %2302 = vmatprep.subr.bf16.mxu0 0
    %2303 = vmatpush2.bf16.msra.mxu0 0
    %2304 = vmatprep.subr.bf16.mxu0 0
    %2305 = vmatpush2.bf16.msra.mxu0 0
    %2306 = vmatprep.mubr.bf16.mxu0 0
    %2307 = vmatmul.mubr.bf16.gmra.mxu0 %v2269
    %v2308 = vpop.f32.mrf.mxu0
    %v2309 = vadd.f32 0.0, %v2308
    %v2310 = vpop.f32.mrf.mxu0
    %v2311 = vpop.f32.mrf.mxu0
    %v2312 = vadd.f32 0.0, %v2311
    %v2313 = vpop.f32.mrf.mxu0
    %2314 = vmatprep.mubr.bf16.mxu0 0
    %2315 = vmatmul.mubr.bf16.gmra.mxu0 %v2272
    %v2316 = vpop.f32.mrf.mxu0
    %v2317 = vadd.f32 0.0, %v2316
    %v2318 = vpop.f32.mrf.mxu0
    %v2319 = vpop.f32.mrf.mxu0
    %v2320 = vadd.f32 0.0, %v2319
    %v2321 = vpop.f32.mrf.mxu0
    %2322 = vdwg.mxu0
    %v2323 = vpack.c.bf16 %v2312, %v2309
    %v2324 = vpack.c.bf16 %v2320, %v2317
    %v2325 = vld [vmem:[#allocation8 + $0xc0] sm:$0xf]
    %v2326 = vld [vmem:[#allocation8 + $0xc4] sm:$0xf]
    %v2327 = vld [vmem:[#allocation8 + $0xc8] sm:$0xf]
    %v2328 = vld [vmem:[#allocation8 + $0xcc] sm:$0xf]
    %v2329 = vld [vmem:[#allocation8 + $0xd0] sm:$0xf]
    %v2330 = vld [vmem:[#allocation8 + $0xd4] sm:$0xf]
    %v2331 = vld [vmem:[#allocation8 + $0xd8] sm:$0xf]
    %v2332 = vld [vmem:[#allocation8 + $0xdc] sm:$0xf]
    %v2333 = vld [vmem:[#allocation8 + $0xe0] sm:$0xf]
    %v2334 = vld [vmem:[#allocation8 + $0xe4] sm:$0xf]
    %v2335 = vld [vmem:[#allocation8 + $0xe8] sm:$0xf]
    %v2336 = vld [vmem:[#allocation8 + $0xec] sm:$0xf]
    %v2337 = vld [vmem:[#allocation8 + $0xf0] sm:$0xf]
    %v2338 = vld [vmem:[#allocation8 + $0xf4] sm:$0xf]
    %v2339 = vld [vmem:[#allocation8 + $0xf8] sm:$0xf]
    %v2340 = vld [vmem:[#allocation8 + $0xfc] sm:$0xf]
    %v2357 = vunpack.c.l.b16 %v2325
    %v2358 = vunpack.c.l.b16 %v2326
    %v2359 = vunpack.c.l.b16 %v2327
    %v2360 = vunpack.c.l.b16 %v2328
    %v2361 = vunpack.c.l.b16 %v2329
    %v2362 = vunpack.c.l.b16 %v2330
    %v2363 = vunpack.c.l.b16 %v2331
    %v2364 = vunpack.c.l.b16 %v2332
    %v2365 = vunpack.c.l.b16 %v2333
    %v2366 = vunpack.c.l.b16 %v2334
    %v2367 = vunpack.c.l.b16 %v2335
    %v2368 = vunpack.c.l.b16 %v2336
    %v2369 = vunpack.c.l.b16 %v2337
    %v2370 = vunpack.c.l.b16 %v2338
    %v2371 = vunpack.c.l.b16 %v2339
    %v2372 = vunpack.c.l.b16 %v2340
    %v2373 = vpack.c.b16 %v2358, %v2357
    %v2374 = vpack.c.b16 %v2360, %v2359
    %v2375 = vpack.c.b16 %v2362, %v2361
    %v2376 = vpack.c.b16 %v2364, %v2363
    %v2377 = vpack.c.b16 %v2366, %v2365
    %v2378 = vpack.c.b16 %v2368, %v2367
    %v2379 = vpack.c.b16 %v2370, %v2369
    %v2380 = vpack.c.b16 %v2372, %v2371
    %2389 = vmatprep.subr.bf16.mxu0 0
    %2390 = vmatpush1.bf16.msra.mxu0 %v2380
    %2391 = vmatprep.subr.bf16.mxu0 0
    %2392 = vmatpush1.bf16.msra.mxu0 %v2379
    %2393 = vmatprep.subr.bf16.mxu0 0
    %2394 = vmatpush1.bf16.msra.mxu0 %v2378
    %2395 = vmatprep.subr.bf16.mxu0 0
    %2396 = vmatpush1.bf16.msra.mxu0 %v2377
    %2397 = vmatprep.subr.bf16.mxu0 0
    %2398 = vmatpush1.bf16.msra.mxu0 %v2376
    %2399 = vmatprep.subr.bf16.mxu0 0
    %2400 = vmatpush1.bf16.msra.mxu0 %v2375
    %2401 = vmatprep.subr.bf16.mxu0 0
    %2402 = vmatpush1.bf16.msra.mxu0 %v2374
    %2403 = vmatprep.subr.bf16.mxu0 0
    %2404 = vmatpush1.bf16.msra.mxu0 %v2373
    %2405 = vmatprep.subr.bf16.mxu0 0
    %2406 = vmatpush2.bf16.msra.mxu0 0
    %2407 = vmatprep.subr.bf16.mxu0 0
    %2408 = vmatpush2.bf16.msra.mxu0 0
    %2409 = vmatprep.subr.bf16.mxu0 0
    %2410 = vmatpush2.bf16.msra.mxu0 0
    %2411 = vmatprep.subr.bf16.mxu0 0
    %2412 = vmatpush2.bf16.msra.mxu0 0
    %2413 = vmatprep.subr.bf16.mxu0 0
    %2414 = vmatpush2.bf16.msra.mxu0 0
    %2415 = vmatprep.subr.bf16.mxu0 0
    %2416 = vmatpush2.bf16.msra.mxu0 0
    %2417 = vmatprep.subr.bf16.mxu0 0
    %2418 = vmatpush2.bf16.msra.mxu0 0
    %2419 = vmatprep.subr.bf16.mxu0 0
    %2420 = vmatpush2.bf16.msra.mxu0 0
    %2421 = vmatprep.mubr.bf16.mxu0 0
    %2422 = vmatmul.mubr.bf16.gmra.mxu0 %v2323
    %v2423 = vpop.f32.mrf.mxu0
    %v2424 = vadd.f32 0.0, %v2423
    %v2425 = vpop.f32.mrf.mxu0
    %v2426 = vpop.f32.mrf.mxu0
    %v2427 = vadd.f32 0.0, %v2426
    %v2428 = vpop.f32.mrf.mxu0
    %2429 = vmatprep.mubr.bf16.mxu0 0
    %2430 = vmatmul.mubr.bf16.gmra.mxu0 %v2324
    %v2431 = vpop.f32.mrf.mxu0
    %v2432 = vadd.f32 0.0, %v2431
    %v2433 = vpop.f32.mrf.mxu0
    %v2434 = vpop.f32.mrf.mxu0
    %v2435 = vadd.f32 0.0, %v2434
    %v2436 = vpop.f32.mrf.mxu0
    %2437 = vdwg.mxu0
    %v2438 = vadd.f32 %v2125, %v2424
    %v2439 = vadd.f32 %v2126, %v2427
    %v2440 = vadd.f32 %v2127, %v2432
    %v2441 = vadd.f32 %v2128, %v2435
    %v2442 = vadd.f32 %v146, %v2438
    %v2443 = vadd.f32 %v147, %v2439
    %v2444 = vadd.f32 %v148, %v2440
    %v2445 = vadd.f32 %v149, %v2441
    %v2446 = vmul.f32 %v2442, %v2442
    %v2447 = vmul.f32 %v2443, %v2443
    %v2448 = vmul.f32 %v2444, %v2444
    %v2449 = vmul.f32 %v2445, %v2445
    %2450 = vadd.xlane.f32.xlu0 %v2446
    %v2451 = vpop.xlane.xlu0 %2450
    %2452 = vadd.xlane.f32.xlu0 %v2447
    %v2453 = vpop.xlane.xlu0 %2452
    %2454 = vadd.xlane.f32.xlu0 %v2448
    %v2455 = vpop.xlane.xlu0 %2454
    %2456 = vadd.xlane.f32.xlu0 %v2449
    %v2457 = vpop.xlane.xlu0 %2456
    %v2458 = vmul.f32 %v2451, %v162
    %v2459 = vmul.f32 %v2453, %v162
    %v2460 = vmul.f32 %v2455, %v162
    %v2461 = vmul.f32 %v2457, %v162
    %v2462 = vadd.f32 %v2458, 1e-06
    %v2463 = vadd.f32 %v2459, 1e-06
    %v2464 = vadd.f32 %v2460, 1e-06
    %v2465 = vadd.f32 %v2461, 1e-06
    %v2466 = vrsqrt.pop %v2462
    %v2467 = vrsqrt.pop %v2463
    %v2468 = vrsqrt.pop %v2464
    %v2469 = vrsqrt.pop %v2465
    %v2470 = vmul.f32 %v2442, %v2466
    %v2471 = vmul.f32 %v2443, %v2467
    %v2472 = vmul.f32 %v2444, %v2468
    %v2473 = vmul.f32 %v2445, %v2469
    %v2474 = vlaneseq
    %v2475 = vshrl.u32 %v2474, 7
    %v2476 = vsub.s32 0, %v2475
    %v2477 = vrot.slane %v139, %v2476
    %v2478 = vmul.f32 %v2470, %v2477
    %v2479 = vmul.f32 %v2471, %v2477
    %v2480 = vmul.f32 %v2472, %v2477
    %v2481 = vmul.f32 %v2473, %v2477
    %v2482 = vpack.c.bf16 %v2479, %v2478
    %v2483 = vpack.c.bf16 %v2481, %v2480
    %v2484 = vld [vmem:[#allocation10] sm:$0xff]
    %v2485 = vld [vmem:[#allocation10 + $0x8] sm:$0xff]
    %v2486 = vld [vmem:[#allocation10 + $0x10] sm:$0xff]
    %v2487 = vld [vmem:[#allocation10 + $0x18] sm:$0xff]
    %v2488 = vld [vmem:[#allocation10 + $0x20] sm:$0xff]
    %v2489 = vld [vmem:[#allocation10 + $0x28] sm:$0xff]
    %v2490 = vld [vmem:[#allocation10 + $0x30] sm:$0xff]
    %v2491 = vld [vmem:[#allocation10 + $0x38] sm:$0xff]
    %v2492 = vld [vmem:[#allocation10 + $0x40] sm:$0xff]
    %v2493 = vld [vmem:[#allocation10 + $0x48] sm:$0xff]
    %v2494 = vld [vmem:[#allocation10 + $0x50] sm:$0xff]
    %v2495 = vld [vmem:[#allocation10 + $0x58] sm:$0xff]
    %v2496 = vld [vmem:[#allocation10 + $0x60] sm:$0xff]
    %v2497 = vld [vmem:[#allocation10 + $0x68] sm:$0xff]
    %v2498 = vld [vmem:[#allocation10 + $0x70] sm:$0xff]
    %v2499 = vld [vmem:[#allocation10 + $0x78] sm:$0xff]
    %v2500 = vld [vmem:[#allocation10 + $0x80] sm:$0xff]
    %v2501 = vld [vmem:[#allocation10 + $0x88] sm:$0xff]
    %v2502 = vld [vmem:[#allocation10 + $0x90] sm:$0xff]
    %v2503 = vld [vmem:[#allocation10 + $0x98] sm:$0xff]
    %v2504 = vld [vmem:[#allocation10 + $0xa0] sm:$0xff]
    %v2505 = vld [vmem:[#allocation10 + $0xa8] sm:$0xff]
    %v2506 = vld [vmem:[#allocation10 + $0xb0] sm:$0xff]
    %v2507 = vld [vmem:[#allocation10 + $0xb8] sm:$0xff]
    %v2508 = vld [vmem:[#allocation10 + $0xc0] sm:$0xff]
    %v2509 = vld [vmem:[#allocation10 + $0xc8] sm:$0xff]
    %v2510 = vld [vmem:[#allocation10 + $0xd0] sm:$0xff]
    %v2511 = vld [vmem:[#allocation10 + $0xd8] sm:$0xff]
    %v2512 = vld [vmem:[#allocation10 + $0xe0] sm:$0xff]
    %v2513 = vld [vmem:[#allocation10 + $0xe8] sm:$0xff]
    %v2514 = vld [vmem:[#allocation10 + $0xf0] sm:$0xff]
    %v2515 = vld [vmem:[#allocation10 + $0xf8] sm:$0xff]
    %v2548 = vunpack.c.l.b16 %v2484
    %v2549 = vunpack.c.h.b16 %v2484
    %v2550 = vunpack.c.l.b16 %v2485
    %v2551 = vunpack.c.h.b16 %v2485
    %v2552 = vunpack.c.l.b16 %v2486
    %v2553 = vunpack.c.h.b16 %v2486
    %v2554 = vunpack.c.l.b16 %v2487
    %v2555 = vunpack.c.h.b16 %v2487
    %v2556 = vunpack.c.l.b16 %v2488
    %v2557 = vunpack.c.h.b16 %v2488
    %v2558 = vunpack.c.l.b16 %v2489
    %v2559 = vunpack.c.h.b16 %v2489
    %v2560 = vunpack.c.l.b16 %v2490
    %v2561 = vunpack.c.h.b16 %v2490
    %v2562 = vunpack.c.l.b16 %v2491
    %v2563 = vunpack.c.h.b16 %v2491
    %v2564 = vunpack.c.l.b16 %v2492
    %v2565 = vunpack.c.h.b16 %v2492
    %v2566 = vunpack.c.l.b16 %v2493
    %v2567 = vunpack.c.h.b16 %v2493
    %v2568 = vunpack.c.l.b16 %v2494
    %v2569 = vunpack.c.h.b16 %v2494
    %v2570 = vunpack.c.l.b16 %v2495
    %v2571 = vunpack.c.h.b16 %v2495
    %v2572 = vunpack.c.l.b16 %v2496
    %v2573 = vunpack.c.h.b16 %v2496
    %v2574 = vunpack.c.l.b16 %v2497
    %v2575 = vunpack.c.h.b16 %v2497
    %v2576 = vunpack.c.l.b16 %v2498
    %v2577 = vunpack.c.h.b16 %v2498
    %v2578 = vunpack.c.l.b16 %v2499
    %v2579 = vunpack.c.h.b16 %v2499
    %v2580 = vunpack.c.l.b16 %v2500
    %v2581 = vunpack.c.h.b16 %v2500
    %v2582 = vunpack.c.l.b16 %v2501
    %v2583 = vunpack.c.h.b16 %v2501
    %v2584 = vunpack.c.l.b16 %v2502
    %v2585 = vunpack.c.h.b16 %v2502
    %v2586 = vunpack.c.l.b16 %v2503
    %v2587 = vunpack.c.h.b16 %v2503
    %v2588 = vunpack.c.l.b16 %v2504
    %v2589 = vunpack.c.h.b16 %v2504
    %v2590 = vunpack.c.l.b16 %v2505
    %v2591 = vunpack.c.h.b16 %v2505
    %v2592 = vunpack.c.l.b16 %v2506
    %v2593 = vunpack.c.h.b16 %v2506
    %v2594 = vunpack.c.l.b16 %v2507
    %v2595 = vunpack.c.h.b16 %v2507
    %v2596 = vunpack.c.l.b16 %v2508
    %v2597 = vunpack.c.h.b16 %v2508
    %v2598 = vunpack.c.l.b16 %v2509
    %v2599 = vunpack.c.h.b16 %v2509
    %v2600 = vunpack.c.l.b16 %v2510
    %v2601 = vunpack.c.h.b16 %v2510
    %v2602 = vunpack.c.l.b16 %v2511
    %v2603 = vunpack.c.h.b16 %v2511
    %v2604 = vunpack.c.l.b16 %v2512
    %v2605 = vunpack.c.h.b16 %v2512
    %v2606 = vunpack.c.l.b16 %v2513
    %v2607 = vunpack.c.h.b16 %v2513
    %v2608 = vunpack.c.l.b16 %v2514
    %v2609 = vunpack.c.h.b16 %v2514
    %v2610 = vunpack.c.l.b16 %v2515
    %v2611 = vunpack.c.h.b16 %v2515
    %v2612 = vpack.c.b16 %v2552, %v2548
    %v2613 = vpack.c.b16 %v2553, %v2549
    %v2614 = vpack.c.b16 %v2554, %v2550
    %v2615 = vpack.c.b16 %v2555, %v2551
    %v2616 = vpack.c.b16 %v2560, %v2556
    %v2617 = vpack.c.b16 %v2561, %v2557
    %v2618 = vpack.c.b16 %v2562, %v2558
    %v2619 = vpack.c.b16 %v2563, %v2559
    %v2620 = vpack.c.b16 %v2568, %v2564
    %v2621 = vpack.c.b16 %v2569, %v2565
    %v2622 = vpack.c.b16 %v2570, %v2566
    %v2623 = vpack.c.b16 %v2571, %v2567
    %v2624 = vpack.c.b16 %v2576, %v2572
    %v2625 = vpack.c.b16 %v2577, %v2573
    %v2626 = vpack.c.b16 %v2578, %v2574
    %v2627 = vpack.c.b16 %v2579, %v2575
    %v2628 = vpack.c.b16 %v2584, %v2580
    %v2629 = vpack.c.b16 %v2585, %v2581
    %v2630 = vpack.c.b16 %v2586, %v2582
    %v2631 = vpack.c.b16 %v2587, %v2583
    %v2632 = vpack.c.b16 %v2592, %v2588
    %v2633 = vpack.c.b16 %v2593, %v2589
    %v2634 = vpack.c.b16 %v2594, %v2590
    %v2635 = vpack.c.b16 %v2595, %v2591
    %v2636 = vpack.c.b16 %v2600, %v2596
    %v2637 = vpack.c.b16 %v2601, %v2597
    %v2638 = vpack.c.b16 %v2602, %v2598
    %v2639 = vpack.c.b16 %v2603, %v2599
    %v2640 = vpack.c.b16 %v2608, %v2604
    %v2641 = vpack.c.b16 %v2609, %v2605
    %v2642 = vpack.c.b16 %v2610, %v2606
    %v2643 = vpack.c.b16 %v2611, %v2607
    %2676 = vmatprep.subr.bf16.mxu0 %v2641
    %2677 = vmatpush1.bf16.msra.mxu0 %v2640
    %2678 = vmatprep.subr.bf16.mxu0 %v2637
    %2679 = vmatpush1.bf16.msra.mxu0 %v2636
    %2680 = vmatprep.subr.bf16.mxu0 %v2633
    %2681 = vmatpush1.bf16.msra.mxu0 %v2632
    %2682 = vmatprep.subr.bf16.mxu0 %v2629
    %2683 = vmatpush1.bf16.msra.mxu0 %v2628
    %2684 = vmatprep.subr.bf16.mxu0 %v2625
    %2685 = vmatpush1.bf16.msra.mxu0 %v2624
    %2686 = vmatprep.subr.bf16.mxu0 %v2621
    %2687 = vmatpush1.bf16.msra.mxu0 %v2620
    %2688 = vmatprep.subr.bf16.mxu0 %v2617
    %2689 = vmatpush1.bf16.msra.mxu0 %v2616
    %2690 = vmatprep.subr.bf16.mxu0 %v2613
    %2691 = vmatpush1.bf16.msra.mxu0 %v2612
    %2692 = vmatprep.subr.bf16.mxu0 0
    %2693 = vmatpush2.bf16.msra.mxu0 0
    %2694 = vmatprep.subr.bf16.mxu0 0
    %2695 = vmatpush2.bf16.msra.mxu0 0
    %2696 = vmatprep.subr.bf16.mxu0 0
    %2697 = vmatpush2.bf16.msra.mxu0 0
    %2698 = vmatprep.subr.bf16.mxu0 0
    %2699 = vmatpush2.bf16.msra.mxu0 0
    %2700 = vmatprep.subr.bf16.mxu0 0
    %2701 = vmatpush2.bf16.msra.mxu0 0
    %2702 = vmatprep.subr.bf16.mxu0 0
    %2703 = vmatpush2.bf16.msra.mxu0 0
    %2704 = vmatprep.subr.bf16.mxu0 0
    %2705 = vmatpush2.bf16.msra.mxu0 0
    %2706 = vmatprep.subr.bf16.mxu0 0
    %2707 = vmatpush2.bf16.msra.mxu0 0
    %2708 = vmatprep.mubr.bf16.mxu0 0
    %2709 = vmatmul.mubr.bf16.gmra.mxu0 %v2482
    %v2710 = vpop.f32.mrf.mxu0
    %v2711 = vadd.f32 0.0, %v2710
    %v2712 = vpop.f32.mrf.mxu0
    %v2713 = vadd.f32 0.0, %v2712
    %v2714 = vpop.f32.mrf.mxu0
    %v2715 = vadd.f32 0.0, %v2714
    %v2716 = vpop.f32.mrf.mxu0
    %v2717 = vadd.f32 0.0, %v2716
    %2718 = vmatprep.mubr.bf16.mxu0 0
    %2719 = vmatmul.mubr.bf16.gmra.mxu0 %v2483
    %v2720 = vpop.f32.mrf.mxu0
    %v2721 = vadd.f32 0.0, %v2720
    %v2722 = vpop.f32.mrf.mxu0
    %v2723 = vadd.f32 0.0, %v2722
    %v2724 = vpop.f32.mrf.mxu0
    %v2725 = vadd.f32 0.0, %v2724
    %v2726 = vpop.f32.mrf.mxu0
    %v2727 = vadd.f32 0.0, %v2726
    %2728 = vdwg.mxu0
    %2729 = vmatprep.subr.bf16.mxu0 %v2643
    %2730 = vmatpush1.bf16.msra.mxu0 %v2642
    %2731 = vmatprep.subr.bf16.mxu0 %v2639
    %2732 = vmatpush1.bf16.msra.mxu0 %v2638
    %2733 = vmatprep.subr.bf16.mxu0 %v2635
    %2734 = vmatpush1.bf16.msra.mxu0 %v2634
    %2735 = vmatprep.subr.bf16.mxu0 %v2631
    %2736 = vmatpush1.bf16.msra.mxu0 %v2630
    %2737 = vmatprep.subr.bf16.mxu0 %v2627
    %2738 = vmatpush1.bf16.msra.mxu0 %v2626
    %2739 = vmatprep.subr.bf16.mxu0 %v2623
    %2740 = vmatpush1.bf16.msra.mxu0 %v2622
    %2741 = vmatprep.subr.bf16.mxu0 %v2619
    %2742 = vmatpush1.bf16.msra.mxu0 %v2618
    %2743 = vmatprep.subr.bf16.mxu0 %v2615
    %2744 = vmatpush1.bf16.msra.mxu0 %v2614
    %2745 = vmatprep.subr.bf16.mxu0 0
    %2746 = vmatpush2.bf16.msra.mxu0 0
    %2747 = vmatprep.subr.bf16.mxu0 0
    %2748 = vmatpush2.bf16.msra.mxu0 0
    %2749 = vmatprep.subr.bf16.mxu0 0
    %2750 = vmatpush2.bf16.msra.mxu0 0
    %2751 = vmatprep.subr.bf16.mxu0 0
    %2752 = vmatpush2.bf16.msra.mxu0 0
    %2753 = vmatprep.subr.bf16.mxu0 0
    %2754 = vmatpush2.bf16.msra.mxu0 0
    %2755 = vmatprep.subr.bf16.mxu0 0
    %2756 = vmatpush2.bf16.msra.mxu0 0
    %2757 = vmatprep.subr.bf16.mxu0 0
    %2758 = vmatpush2.bf16.msra.mxu0 0
    %2759 = vmatprep.subr.bf16.mxu0 0
    %2760 = vmatpush2.bf16.msra.mxu0 0
    %2761 = vmatprep.mubr.bf16.mxu0 0
    %2762 = vmatmul.mubr.bf16.gmra.mxu0 %v2482
    %v2763 = vpop.f32.mrf.mxu0
    %v2764 = vadd.f32 0.0, %v2763
    %v2765 = vpop.f32.mrf.mxu0
    %v2766 = vadd.f32 0.0, %v2765
    %v2767 = vpop.f32.mrf.mxu0
    %v2768 = vadd.f32 0.0, %v2767
    %v2769 = vpop.f32.mrf.mxu0
    %v2770 = vadd.f32 0.0, %v2769
    %2771 = vmatprep.mubr.bf16.mxu0 0
    %2772 = vmatmul.mubr.bf16.gmra.mxu0 %v2483
    %v2773 = vpop.f32.mrf.mxu0
    %v2774 = vadd.f32 0.0, %v2773
    %v2775 = vpop.f32.mrf.mxu0
    %v2776 = vadd.f32 0.0, %v2775
    %v2777 = vpop.f32.mrf.mxu0
    %v2778 = vadd.f32 0.0, %v2777
    %v2779 = vpop.f32.mrf.mxu0
    %v2780 = vadd.f32 0.0, %v2779
    %2781 = vdwg.mxu0
    %v2782 = vxor.u32 %v2711, 2147483648
    %v2783 = vxor.u32 %v2713, 2147483648
    %v2784 = vxor.u32 %v2715, 2147483648
    %v2785 = vxor.u32 %v2717, 2147483648
    %v2786 = vxor.u32 %v2721, 2147483648
    %v2787 = vxor.u32 %v2723, 2147483648
    %v2788 = vxor.u32 %v2725, 2147483648
    %v2789 = vxor.u32 %v2727, 2147483648
    %v2790 = vmul.f32 %v2782, 1.442695
    %v2791 = vpow.pop %v2790
    %v2792 = vmul.f32 %v2783, 1.442695
    %v2793 = vpow.pop %v2792
    %v2794 = vmul.f32 %v2784, 1.442695
    %v2795 = vpow.pop %v2794
    %v2796 = vmul.f32 %v2785, 1.442695
    %v2797 = vpow.pop %v2796
    %v2798 = vmul.f32 %v2786, 1.442695
    %v2799 = vpow.pop %v2798
    %v2800 = vmul.f32 %v2787, 1.442695
    %v2801 = vpow.pop %v2800
    %v2802 = vmul.f32 %v2788, 1.442695
    %v2803 = vpow.pop %v2802
    %v2804 = vmul.f32 %v2789, 1.442695
    %v2805 = vpow.pop %v2804
    %v2806 = vadd.f32 %v2791, 1.0
    %v2807 = vadd.f32 %v2793, 1.0
    %v2808 = vadd.f32 %v2795, 1.0
    %v2809 = vadd.f32 %v2797, 1.0
    %v2810 = vadd.f32 %v2799, 1.0
    %v2811 = vadd.f32 %v2801, 1.0
    %v2812 = vadd.f32 %v2803, 1.0
    %v2813 = vadd.f32 %v2805, 1.0
    %v2814 = vrcp.pop %v2806
    %v2815 = vmul.f32 1.0, %v2814
    %v2816 = vrcp.pop %v2807
    %v2817 = vmul.f32 1.0, %v2816
    %v2818 = vrcp.pop %v2808
    %v2819 = vmul.f32 1.0, %v2818
    %v2820 = vrcp.pop %v2809
    %v2821 = vmul.f32 1.0, %v2820
    %v2822 = vrcp.pop %v2810
    %v2823 = vmul.f32 1.0, %v2822
    %v2824 = vrcp.pop %v2811
    %v2825 = vmul.f32 1.0, %v2824
    %v2826 = vrcp.pop %v2812
    %v2827 = vmul.f32 1.0, %v2826
    %v2828 = vrcp.pop %v2813
    %v2829 = vmul.f32 1.0, %v2828
    %v2830 = vmul.f32 %v2711, %v2815
    %v2831 = vmul.f32 %v2713, %v2817
    %v2832 = vmul.f32 %v2715, %v2819
    %v2833 = vmul.f32 %v2717, %v2821
    %v2834 = vmul.f32 %v2721, %v2823
    %v2835 = vmul.f32 %v2723, %v2825
    %v2836 = vmul.f32 %v2725, %v2827
    %v2837 = vmul.f32 %v2727, %v2829
    %v2838 = vmul.f32 %v2830, %v2764
    %v2839 = vmul.f32 %v2831, %v2766
    %v2840 = vmul.f32 %v2832, %v2768
    %v2841 = vmul.f32 %v2833, %v2770
    %v2842 = vmul.f32 %v2834, %v2774
    %v2843 = vmul.f32 %v2835, %v2776
    %v2844 = vmul.f32 %v2836, %v2778
    %v2845 = vmul.f32 %v2837, %v2780
    %v2846 = vpack.c.bf16 %v2840, %v2838
    %v2847 = vpack.c.bf16 %v2841, %v2839
    %v2848 = vpack.c.bf16 %v2844, %v2842
    %v2849 = vpack.c.bf16 %v2845, %v2843
    %v2850 = vld [vmem:[#allocation11] sm:$0xf]
    %v2851 = vld [vmem:[#allocation11 + $0x4] sm:$0xf]
    %v2852 = vld [vmem:[#allocation11 + $0x8] sm:$0xf]
    %v2853 = vld [vmem:[#allocation11 + $0xc] sm:$0xf]
    %v2854 = vld [vmem:[#allocation11 + $0x10] sm:$0xf]
    %v2855 = vld [vmem:[#allocation11 + $0x14] sm:$0xf]
    %v2856 = vld [vmem:[#allocation11 + $0x18] sm:$0xf]
    %v2857 = vld [vmem:[#allocation11 + $0x1c] sm:$0xf]
    %v2858 = vld [vmem:[#allocation11 + $0x20] sm:$0xf]
    %v2859 = vld [vmem:[#allocation11 + $0x24] sm:$0xf]
    %v2860 = vld [vmem:[#allocation11 + $0x28] sm:$0xf]
    %v2861 = vld [vmem:[#allocation11 + $0x2c] sm:$0xf]
    %v2862 = vld [vmem:[#allocation11 + $0x30] sm:$0xf]
    %v2863 = vld [vmem:[#allocation11 + $0x34] sm:$0xf]
    %v2864 = vld [vmem:[#allocation11 + $0x38] sm:$0xf]
    %v2865 = vld [vmem:[#allocation11 + $0x3c] sm:$0xf]
    %v2866 = vld [vmem:[#allocation11 + $0x40] sm:$0xf]
    %v2867 = vld [vmem:[#allocation11 + $0x44] sm:$0xf]
    %v2868 = vld [vmem:[#allocation11 + $0x48] sm:$0xf]
    %v2869 = vld [vmem:[#allocation11 + $0x4c] sm:$0xf]
    %v2870 = vld [vmem:[#allocation11 + $0x50] sm:$0xf]
    %v2871 = vld [vmem:[#allocation11 + $0x54] sm:$0xf]
    %v2872 = vld [vmem:[#allocation11 + $0x58] sm:$0xf]
    %v2873 = vld [vmem:[#allocation11 + $0x5c] sm:$0xf]
    %v2874 = vld [vmem:[#allocation11 + $0x60] sm:$0xf]
    %v2875 = vld [vmem:[#allocation11 + $0x64] sm:$0xf]
    %v2876 = vld [vmem:[#allocation11 + $0x68] sm:$0xf]
    %v2877 = vld [vmem:[#allocation11 + $0x6c] sm:$0xf]
    %v2878 = vld [vmem:[#allocation11 + $0x70] sm:$0xf]
    %v2879 = vld [vmem:[#allocation11 + $0x74] sm:$0xf]
    %v2880 = vld [vmem:[#allocation11 + $0x78] sm:$0xf]
    %v2881 = vld [vmem:[#allocation11 + $0x7c] sm:$0xf]
    %v2914 = vunpack.c.l.b16 %v2850
    %v2915 = vunpack.c.l.b16 %v2851
    %v2916 = vunpack.c.l.b16 %v2852
    %v2917 = vunpack.c.l.b16 %v2853
    %v2918 = vunpack.c.l.b16 %v2854
    %v2919 = vunpack.c.l.b16 %v2855
    %v2920 = vunpack.c.l.b16 %v2856
    %v2921 = vunpack.c.l.b16 %v2857
    %v2922 = vunpack.c.l.b16 %v2858
    %v2923 = vunpack.c.l.b16 %v2859
    %v2924 = vunpack.c.l.b16 %v2860
    %v2925 = vunpack.c.l.b16 %v2861
    %v2926 = vunpack.c.l.b16 %v2862
    %v2927 = vunpack.c.l.b16 %v2863
    %v2928 = vunpack.c.l.b16 %v2864
    %v2929 = vunpack.c.l.b16 %v2865
    %v2930 = vunpack.c.l.b16 %v2866
    %v2931 = vunpack.c.l.b16 %v2867
    %v2932 = vunpack.c.l.b16 %v2868
    %v2933 = vunpack.c.l.b16 %v2869
    %v2934 = vunpack.c.l.b16 %v2870
    %v2935 = vunpack.c.l.b16 %v2871
    %v2936 = vunpack.c.l.b16 %v2872
    %v2937 = vunpack.c.l.b16 %v2873
    %v2938 = vunpack.c.l.b16 %v2874
    %v2939 = vunpack.c.l.b16 %v2875
    %v2940 = vunpack.c.l.b16 %v2876
    %v2941 = vunpack.c.l.b16 %v2877
    %v2942 = vunpack.c.l.b16 %v2878
    %v2943 = vunpack.c.l.b16 %v2879
    %v2944 = vunpack.c.l.b16 %v2880
    %v2945 = vunpack.c.l.b16 %v2881
    %v2946 = vpack.c.b16 %v2915, %v2914
    %v2947 = vpack.c.b16 %v2917, %v2916
    %v2948 = vpack.c.b16 %v2919, %v2918
    %v2949 = vpack.c.b16 %v2921, %v2920
    %v2950 = vpack.c.b16 %v2923, %v2922
    %v2951 = vpack.c.b16 %v2925, %v2924
    %v2952 = vpack.c.b16 %v2927, %v2926
    %v2953 = vpack.c.b16 %v2929, %v2928
    %v2954 = vpack.c.b16 %v2931, %v2930
    %v2955 = vpack.c.b16 %v2933, %v2932
    %v2956 = vpack.c.b16 %v2935, %v2934
    %v2957 = vpack.c.b16 %v2937, %v2936
    %v2958 = vpack.c.b16 %v2939, %v2938
    %v2959 = vpack.c.b16 %v2941, %v2940
    %v2960 = vpack.c.b16 %v2943, %v2942
    %v2961 = vpack.c.b16 %v2945, %v2944
    %2978 = vmatprep.subr.bf16.mxu0 0
    %2979 = vmatpush1.bf16.msra.mxu0 %v2953
    %2980 = vmatprep.subr.bf16.mxu0 0
    %2981 = vmatpush1.bf16.msra.mxu0 %v2952
    %2982 = vmatprep.subr.bf16.mxu0 0
    %2983 = vmatpush1.bf16.msra.mxu0 %v2951
    %2984 = vmatprep.subr.bf16.mxu0 0
    %2985 = vmatpush1.bf16.msra.mxu0 %v2950
    %2986 = vmatprep.subr.bf16.mxu0 0
    %2987 = vmatpush1.bf16.msra.mxu0 %v2949
    %2988 = vmatprep.subr.bf16.mxu0 0
    %2989 = vmatpush1.bf16.msra.mxu0 %v2948
    %2990 = vmatprep.subr.bf16.mxu0 0
    %2991 = vmatpush1.bf16.msra.mxu0 %v2947
    %2992 = vmatprep.subr.bf16.mxu0 0
    %2993 = vmatpush1.bf16.msra.mxu0 %v2946
    %2994 = vmatprep.subr.bf16.mxu0 0
    %2995 = vmatpush2.bf16.msra.mxu0 %v2961
    %2996 = vmatprep.subr.bf16.mxu0 0
    %2997 = vmatpush2.bf16.msra.mxu0 %v2960
    %2998 = vmatprep.subr.bf16.mxu0 0
    %2999 = vmatpush2.bf16.msra.mxu0 %v2959
    %3000 = vmatprep.subr.bf16.mxu0 0
    %3001 = vmatpush2.bf16.msra.mxu0 %v2958
    %3002 = vmatprep.subr.bf16.mxu0 0
    %3003 = vmatpush2.bf16.msra.mxu0 %v2957
    %3004 = vmatprep.subr.bf16.mxu0 0
    %3005 = vmatpush2.bf16.msra.mxu0 %v2956
    %3006 = vmatprep.subr.bf16.mxu0 0
    %3007 = vmatpush2.bf16.msra.mxu0 %v2955
    %3008 = vmatprep.subr.bf16.mxu0 0
    %3009 = vmatpush2.bf16.msra.mxu0 %v2954
    %3010 = vmatprep.mubr.bf16.mxu0 %v2847
    %3011 = vmatmul.mubr.bf16.gmra.mxu0 %v2846
    %v3012 = vpop.f32.mrf.mxu0
    %v3013 = vadd.f32 0.0, %v3012
    %v3014 = vpop.f32.mrf.mxu0
    %v3015 = vpop.f32.mrf.mxu0
    %v3016 = vadd.f32 0.0, %v3015
    %v3017 = vpop.f32.mrf.mxu0
    %3018 = vmatprep.mubr.bf16.mxu0 %v2849
    %3019 = vmatmul.mubr.bf16.gmra.mxu0 %v2848
    %v3020 = vpop.f32.mrf.mxu0
    %v3021 = vadd.f32 0.0, %v3020
    %v3022 = vpop.f32.mrf.mxu0
    %v3023 = vpop.f32.mrf.mxu0
    %v3024 = vadd.f32 0.0, %v3023
    %v3025 = vpop.f32.mrf.mxu0
    %3026 = vdwg.mxu0
    %v3027 = vadd.f32 %v2442, %v3013
    %v3028 = vadd.f32 %v2443, %v3016
    %v3029 = vadd.f32 %v2444, %v3021
    %v3030 = vadd.f32 %v2445, %v3024
    %v3031 = vpack.c.bf16 %v3028, %v3027
    %v3032 = vpack.c.bf16 %v3030, %v3029
    %v3035 = vunpack.c.l.b16 %v3031
    %v3036 = vunpack.c.h.b16 %v3031
    %v3037 = vunpack.c.l.b16 %v3032
    %v3038 = vunpack.c.h.b16 %v3032
    %v3039 = vpack.c.b16 %v3035, %v3035
    %v3040 = vpack.c.b16 %v3036, %v3036
    %v3041 = vpack.c.b16 %v3037, %v3037
    %v3042 = vpack.c.b16 %v3038, %v3038
    %3047 = vst [vmem:[#allocation13] sm:$0xf] %v3039
    %3048 = vst [vmem:[#allocation13 + $0x4] sm:$0xf] %v3040
    %3049 = vst [vmem:[#allocation13 + $0x8] sm:$0xf] %v3041
    %3050 = vst [vmem:[#allocation13 + $0xc] sm:$0xf] %v3042
    // Predicated region
    $region66: #{decoder_layer_forward.1} parent=1 // pred_check
      _
    $region67: #{decoder_layer_forward.1} parent=1 // pred_check_branch
      %3052 = sbr.rel (0) target = $region69
    $region68: #{decoder_layer_forward.1} parent=1 // pred_region
      %s3054 = ssub.s32 256, 256
      %3055 = vsyncadd [#allocation4], %s3054
      %s3056 = sshll.u32 [#allocation13], 4
      %s3057 = int_to_ptr.vmem [resolvable:$true] %s3056
      %3062 = dma.vmem_to_hbm [thread:$0]  %s3057, 256, %s10, [#allocation4], 64, 64, 4
    $region69: #{decoder_layer_forward.1} parent=1 // pred_fallthru
      _
    // Predicated region
    $region70: #{decoder_layer_forward.1} parent=1 // pred_check
      _
    $region71: #{decoder_layer_forward.1} parent=1 // pred_check_branch
      %3064 = sbr.rel (0) target = $region73
    $region72: #{decoder_layer_forward.1} parent=1 // pred_region
      %3065 = dma.done [#allocation4], 256
    $region73: #{decoder_layer_forward.1} parent=1 // pred_fallthru
      _
    %3066 = vsyncpa [#allocation3], 1
    %3067 = vsyncpa [#allocation6], 1
    %3068 = vsyncpa [#allocation9], 1
    %3069 = vsyncpa [#allocation12], 1
    %3070 = vsyncpa [#allocation4], 1

</llo_original>
